<compile_context>
chip_gen: v7x
topology: tpu7x:2x2x1
jax: 0.10.0
libtpu: 0.0.40
codegen_flags: <defaults>
</compile_context>

<pallas_src>
import functools

import jax
import jax.numpy as jnp
from jax.experimental import pallas as pl
from jax.experimental.pallas import tpu as pltpu

# ---- problem sizes (small, consistent with the module's forward) ----
B, T, N, C = 2, 4, 32, 4          # batch, time, graph nodes, input channels
KS = 5                            # Chebyshev kernel size (Ks)
COUT = 8                          # output channels
BT = B * T


# -------------------- fused kernel: Chebyshev recursion + re-layout + Linear ----------
# Recursion state y_k has shape (C*BT, N): y_k[c*BT + bt, n] = (T_k(L) x)[n, c*BT + bt].
# One Chebyshev step is y @ (2*L)^T  -> (C*BT, N)@(N, N), operator stays (N, N) (no kron).
# Each y_k is parked in ybig (Ks*C*BT, N); a stride-BT sublane gather per bt builds the
# lane-dense z (Ks*C, BT*N); one (COUT, Ks*C)@(Ks*C, BT*N) matmul produces the output.
def _spectral_conv_kernel(l2t_ref, y0_ref, wf_ref, out_ref, ybig_ref, z_ref,
                          *, ks, c, bt, n, mxu_dtype, precision):
    cbt = c * bt
    l2t = l2t_ref[...]                       # (N, N) = (2*L)^T; tiny (1-4 vregs), safe to keep live
    y_prev = y0_ref[...]                     # (C*BT, N) f32 recurrence state: T_0 = x
    ybig_ref[pl.ds(0, cbt), :] = y_prev

    if ks > 1:
        # T_1 = L x  ==  0.5 * (x @ (2L)^T); one cast of the state per step.
        y_cur = 0.5 * jnp.dot(y_prev.astype(mxu_dtype), l2t,
                              preferred_element_type=jnp.float32, precision=precision)
        ybig_ref[pl.ds(cbt, cbt), :] = y_cur
        for k in range(2, ks):               # T_k = 2 L T_{k-1} - T_{k-2}  (2x folded into l2t)
            y_next = jnp.dot(y_cur.astype(mxu_dtype), l2t,
                             preferred_element_type=jnp.float32, precision=precision) - y_prev
            ybig_ref[pl.ds(k * cbt, cbt), :] = y_next
            y_prev, y_cur = y_cur, y_next

    # Re-layout (Ks*C*BT, N) -> (Ks*C, BT*N): for each bt gather rows {bt, bt+BT, bt+2BT, ...}
    # (stride-BT sublane read) into the bt-th N-wide lane window of z.
    for b in range(bt):
        z_ref[:, pl.ds(b * n, n)] = ybig_ref[pl.ds(b, ks * c, stride=bt), :]

    # Single fused projection: (COUT, Ks*C) @ (Ks*C, BT*N) = (8,20)@(20,256), f32 accumulation,
    # lane-dense (COUT, BT*N) store.
    out_ref[...] = jnp.dot(wf_ref[...], z_ref[...].astype(mxu_dtype),
                           preferred_element_type=jnp.float32, precision=precision)


# -------------------- parameter prep (done once, like the module's __init__) ----------
def prepare_spectral_conv_params(L, W, ks, mxu_dtype=jnp.bfloat16):
    """L: (N, N) rescaled Laplacian; W: (Cout, C*Ks) PyTorch Linear weight (bias=False)."""
    cout, cks = W.shape
    c = cks // ks
    # Chebyshev operator with the recurrence's 2x folded in, kept as (N, N) — no kron.
    l2t = (2.0 * jnp.asarray(L, jnp.float32).T).astype(mxu_dtype)
    # W[o, c*Ks + k] -> Wflat[o, k*C + c]  (matches the kernel's (k major, c minor) row order).
    wflat = W.reshape(cout, c, ks).transpose(0, 2, 1).reshape(cout, ks * c).astype(mxu_dtype)
    return l2t, wflat


# -------------------- forward pass --------------------
@jax.jit
def spectral_conv_forward(x, l2t, wflat):
    """x: (B, T, N, C) f32; l2t: (N, N) = (2L)^T; wflat: (Cout, Ks*C)."""
    b, t, n, c = x.shape
    bt = b * t
    cout, ksc = wflat.shape
    ks = ksc // c
    mxu_dtype = l2t.dtype
    precision = jax.lax.Precision.HIGHEST if mxu_dtype == jnp.float32 else None

    # (B,T,N,C) -> (C*BT, N): the only input-layout fix, done once in the wrapper.
    y0 = x.reshape(bt, n, c).transpose(2, 0, 1).reshape(c * bt, n).astype(jnp.float32)

    outT = pl.pallas_call(
        functools.partial(_spectral_conv_kernel, ks=ks, c=c, bt=bt, n=n,
                          mxu_dtype=mxu_dtype, precision=precision),
        out_shape=jax.ShapeDtypeStruct((cout, bt * n), jnp.float32),
        in_specs=[pl.BlockSpec(memory_space=pltpu.MemorySpace.VMEM)] * 3,
        out_specs=pl.BlockSpec(memory_space=pltpu.MemorySpace.VMEM),
        scratch_shapes=[
            pltpu.VMEM((ks * c * bt, n), jnp.float32),   # parked Chebyshev states (20 KB)
            pltpu.VMEM((ks * c, bt * n), jnp.float32),   # lane-dense projection operand (20 KB)
        ],
    )(l2t, y0, wflat)

    # (COUT, BT*N) -> (B, T, N, COUT): final layout fix in the wrapper (kernel stays lane-dense).
    return outT.reshape(cout, b, t, n).transpose(1, 2, 3, 0)


# -------------------- deterministic graph setup + pure-JAX reference --------------------
def make_rescaled_laplacian(n):
    # ring-graph adjacency (deterministic stand-in for the .mat sphere graph)
    idx = jnp.arange(n)
    A = jnp.zeros((n, n), jnp.float32)
    A = A.at[idx, (idx + 1) % n].set(1.0)
    A = A.at[idx, (idx - 1) % n].set(1.0)
    deg = A.sum(axis=1)
    d_inv_sqrt = 1.0 / jnp.sqrt(deg)
    L_norm = jnp.eye(n, dtype=jnp.float32) - d_inv_sqrt[:, None] * A * d_inv_sqrt[None, :]
    lmax = 2.0
    return L_norm / (lmax / 2.0) - jnp.eye(n, dtype=jnp.float32)


def reference_forward(x, L, W, ks):
    """Pure-JAX f32 (HIGHEST precision) reference mirroring the PyTorch forward exactly."""
    b, t, n, c = x.shape
    bt = b * t
    cout = W.shape[0]
    hp = jax.lax.Precision.HIGHEST
    x0 = x.reshape(bt, n, c).transpose(1, 2, 0).reshape(n, c * bt)
    xs = [x0]
    if ks > 1:
        x1 = jnp.dot(L, x0, precision=hp)
        xs.append(x1)
        for _ in range(2, ks):
            x2 = 2.0 * jnp.dot(L, x1, precision=hp) - x0
            xs.append(x2)
            x0, x1 = x1, x2
    xk = jnp.stack(xs, 0).reshape(ks, n, c, bt).transpose(3, 1, 2, 0)
    out = jnp.dot(xk.reshape(bt * n, c * ks), W.T, precision=hp)
    return out.reshape(b, t, n, cout)


if __name__ == "__main__":
    key = jax.random.PRNGKey(0)
    kx, kw = jax.random.split(key)
    x = jax.random.normal(kx, (B, T, N, C), jnp.float32)
    # PyTorch nn.Linear(C*Ks, Cout, bias=False) weight shape: (Cout, C*Ks)
    W = jax.random.normal(kw, (COUT, C * KS), jnp.float32) * 0.1
    L = make_rescaled_laplacian(N)

    ref = reference_forward(x, L, W, KS)

    # 1) Strict gate (test-only config): f32 MXU operands with precision=HIGHEST, tight tolerance.
    l2t32, wflat32 = prepare_spectral_conv_params(L, W, KS, mxu_dtype=jnp.float32)
    out_f32 = jax.block_until_ready(spectral_conv_forward(x, l2t32, wflat32))
    assert out_f32.shape == (B, T, N, COUT)
    assert jnp.allclose(out_f32, ref, atol=1e-4, rtol=1e-4)

    # 2) Perf path: bf16 MXU operands, f32 recurrence state + f32 accumulation.
    #    Looser tolerance: bf16 operand rounding compounds slightly across the Ks recursion.
    l2t16, wflat16 = prepare_spectral_conv_params(L, W, KS, mxu_dtype=jnp.bfloat16)
    out_bf16 = jax.block_until_ready(spectral_conv_forward(x, l2t16, wflat16))
    assert out_bf16.shape == (B, T, N, COUT)
    assert jnp.allclose(out_bf16, ref, atol=1e-1, rtol=1e-1)

    print("KERNEL_OK")
</pallas_src>

<mosaic_0001>
module attributes {stable_mosaic.version = 11 : i64} {
  func.func @_spectral_conv_kernel(%arg0: memref<32x32xf32, #tpu.memory_space<vmem>>, %arg1: memref<32x32xf32, #tpu.memory_space<vmem>>, %arg2: memref<8x20xf32, #tpu.memory_space<vmem>>, %arg3: memref<8x256xf32, #tpu.memory_space<vmem>>, %arg4: memref<160x32xf32, #tpu.memory_space<vmem>>, %arg5: memref<20x256xf32, #tpu.memory_space<vmem>>) attributes {dimension_semantics = [], scalar_prefetch = 0 : i64, scratch_operands = 2 : i64, tpu.core_type = #tpu.core_type<tc>} {
    %c0 = arith.constant 0 : index
    %c0_0 = arith.constant 0 : index
    %0 = vector.load %arg0[%c0, %c0_0] : memref<32x32xf32, #tpu.memory_space<vmem>>, vector<32x32xf32>
    %c0_1 = arith.constant 0 : index
    %c0_2 = arith.constant 0 : index
    %1 = vector.load %arg1[%c0_1, %c0_2] : memref<32x32xf32, #tpu.memory_space<vmem>>, vector<32x32xf32>
    %c0_3 = arith.constant 0 : index
    %c0_4 = arith.constant 0 : index
    %2 = vector.load %arg4[%c0_3, %c0_4] : memref<160x32xf32, #tpu.memory_space<vmem>>, vector<32x32xf32>
    tpu.vector_store %arg4[%c0_3, %c0_4], %1 {strides = array<i32>} : memref<160x32xf32, #tpu.memory_space<vmem>>, vector<32x32xf32>,
    %cst = arith.constant dense<0.000000e+00> : vector<32x32xf32>
    %3 = tpu.matmul %1, %0, %cst {dimension_numbers = #tpu.dot_dimension_numbers<[1], [0], [0], [1], [0, 0, 1, 1], [], []>, precision = #tpu.contract_precision<fp32>} : vector<32x32xf32>, vector<32x32xf32>, vector<32x32xf32> -> vector<32x32xf32>
    %cst_5 = arith.constant 5.000000e-01 : f32
    %4 = vector.broadcast %cst_5 : f32 to vector<32x32xf32>
    %5 = arith.mulf %4, %3 : vector<32x32xf32>
    %c32 = arith.constant 32 : index
    %c0_6 = arith.constant 0 : index
    %6 = vector.load %arg4[%c32, %c0_6] : memref<160x32xf32, #tpu.memory_space<vmem>>, vector<32x32xf32>
    tpu.vector_store %arg4[%c32, %c0_6], %5 {strides = array<i32>} : memref<160x32xf32, #tpu.memory_space<vmem>>, vector<32x32xf32>,
    %cst_7 = arith.constant dense<0.000000e+00> : vector<32x32xf32>
    %7 = tpu.matmul %5, %0, %cst_7 {dimension_numbers = #tpu.dot_dimension_numbers<[1], [0], [0], [1], [0, 0, 1, 1], [], []>, precision = #tpu.contract_precision<fp32>} : vector<32x32xf32>, vector<32x32xf32>, vector<32x32xf32> -> vector<32x32xf32>
    %8 = arith.subf %7, %1 : vector<32x32xf32>
    %c64 = arith.constant 64 : index
    %c0_8 = arith.constant 0 : index
    %9 = vector.load %arg4[%c64, %c0_8] : memref<160x32xf32, #tpu.memory_space<vmem>>, vector<32x32xf32>
    tpu.vector_store %arg4[%c64, %c0_8], %8 {strides = array<i32>} : memref<160x32xf32, #tpu.memory_space<vmem>>, vector<32x32xf32>,
    %cst_9 = arith.constant dense<0.000000e+00> : vector<32x32xf32>
    %10 = tpu.matmul %8, %0, %cst_9 {dimension_numbers = #tpu.dot_dimension_numbers<[1], [0], [0], [1], [0, 0, 1, 1], [], []>, precision = #tpu.contract_precision<fp32>} : vector<32x32xf32>, vector<32x32xf32>, vector<32x32xf32> -> vector<32x32xf32>
    %11 = arith.subf %10, %5 : vector<32x32xf32>
    %c96 = arith.constant 96 : index
    %c0_10 = arith.constant 0 : index
    %12 = vector.load %arg4[%c96, %c0_10] : memref<160x32xf32, #tpu.memory_space<vmem>>, vector<32x32xf32>
    tpu.vector_store %arg4[%c96, %c0_10], %11 {strides = array<i32>} : memref<160x32xf32, #tpu.memory_space<vmem>>, vector<32x32xf32>,
    %cst_11 = arith.constant dense<0.000000e+00> : vector<32x32xf32>
    %13 = tpu.matmul %11, %0, %cst_11 {dimension_numbers = #tpu.dot_dimension_numbers<[1], [0], [0], [1], [0, 0, 1, 1], [], []>, precision = #tpu.contract_precision<fp32>} : vector<32x32xf32>, vector<32x32xf32>, vector<32x32xf32> -> vector<32x32xf32>
    %14 = arith.subf %13, %8 : vector<32x32xf32>
    %c128 = arith.constant 128 : index
    %c0_12 = arith.constant 0 : index
    %15 = vector.load %arg4[%c128, %c0_12] : memref<160x32xf32, #tpu.memory_space<vmem>>, vector<32x32xf32>
    tpu.vector_store %arg4[%c128, %c0_12], %14 {strides = array<i32>} : memref<160x32xf32, #tpu.memory_space<vmem>>, vector<32x32xf32>,
    %c0_13 = arith.constant 0 : index
    %c0_14 = arith.constant 0 : index
    %16 = tpu.strided_load %arg4[%c0_13, %c0_14] {strides = array<i32: 8, 1>} : memref<160x32xf32, #tpu.memory_space<vmem>>, vector<20x32xf32>
    %c0_15 = arith.constant 0 : index
    %c0_16 = arith.constant 0 : index
    %17 = vector.load %arg5[%c0_15, %c0_16] : memref<20x256xf32, #tpu.memory_space<vmem>>, vector<20x32xf32>
    tpu.vector_store %arg5[%c0_15, %c0_16], %16 {strides = array<i32>} : memref<20x256xf32, #tpu.memory_space<vmem>>, vector<20x32xf32>,
    %c1 = arith.constant 1 : index
    %c0_17 = arith.constant 0 : index
    %18 = tpu.strided_load %arg4[%c1, %c0_17] {strides = array<i32: 8, 1>} : memref<160x32xf32, #tpu.memory_space<vmem>>, vector<20x32xf32>
    %c0_18 = arith.constant 0 : index
    %c32_19 = arith.constant 32 : index
    %19 = vector.load %arg5[%c0_18, %c32_19] : memref<20x256xf32, #tpu.memory_space<vmem>>, vector<20x32xf32>
    tpu.vector_store %arg5[%c0_18, %c32_19], %18 {strides = array<i32>} : memref<20x256xf32, #tpu.memory_space<vmem>>, vector<20x32xf32>,
    %c2 = arith.constant 2 : index
    %c0_20 = arith.constant 0 : index
    %20 = tpu.strided_load %arg4[%c2, %c0_20] {strides = array<i32: 8, 1>} : memref<160x32xf32, #tpu.memory_space<vmem>>, vector<20x32xf32>
    %c0_21 = arith.constant 0 : index
    %c64_22 = arith.constant 64 : index
    %21 = vector.load %arg5[%c0_21, %c64_22] : memref<20x256xf32, #tpu.memory_space<vmem>>, vector<20x32xf32>
    tpu.vector_store %arg5[%c0_21, %c64_22], %20 {strides = array<i32>} : memref<20x256xf32, #tpu.memory_space<vmem>>, vector<20x32xf32>,
    %c3 = arith.constant 3 : index
    %c0_23 = arith.constant 0 : index
    %22 = tpu.strided_load %arg4[%c3, %c0_23] {strides = array<i32: 8, 1>} : memref<160x32xf32, #tpu.memory_space<vmem>>, vector<20x32xf32>
    %c0_24 = arith.constant 0 : index
    %c96_25 = arith.constant 96 : index
    %23 = vector.load %arg5[%c0_24, %c96_25] : memref<20x256xf32, #tpu.memory_space<vmem>>, vector<20x32xf32>
    tpu.vector_store %arg5[%c0_24, %c96_25], %22 {strides = array<i32>} : memref<20x256xf32, #tpu.memory_space<vmem>>, vector<20x32xf32>,
    %c4 = arith.constant 4 : index
    %c0_26 = arith.constant 0 : index
    %24 = tpu.strided_load %arg4[%c4, %c0_26] {strides = array<i32: 8, 1>} : memref<160x32xf32, #tpu.memory_space<vmem>>, vector<20x32xf32>
    %c0_27 = arith.constant 0 : index
    %c128_28 = arith.constant 128 : index
    %25 = vector.load %arg5[%c0_27, %c128_28] : memref<20x256xf32, #tpu.memory_space<vmem>>, vector<20x32xf32>
    tpu.vector_store %arg5[%c0_27, %c128_28], %24 {strides = array<i32>} : memref<20x256xf32, #tpu.memory_space<vmem>>, vector<20x32xf32>,
    %c5 = arith.constant 5 : index
    %c0_29 = arith.constant 0 : index
    %26 = tpu.strided_load %arg4[%c5, %c0_29] {strides = array<i32: 8, 1>} : memref<160x32xf32, #tpu.memory_space<vmem>>, vector<20x32xf32>
    %c0_30 = arith.constant 0 : index
    %c160 = arith.constant 160 : index
    %27 = vector.load %arg5[%c0_30, %c160] : memref<20x256xf32, #tpu.memory_space<vmem>>, vector<20x32xf32>
    tpu.vector_store %arg5[%c0_30, %c160], %26 {strides = array<i32>} : memref<20x256xf32, #tpu.memory_space<vmem>>, vector<20x32xf32>,
    %c6 = arith.constant 6 : index
    %c0_31 = arith.constant 0 : index
    %28 = tpu.strided_load %arg4[%c6, %c0_31] {strides = array<i32: 8, 1>} : memref<160x32xf32, #tpu.memory_space<vmem>>, vector<20x32xf32>
    %c0_32 = arith.constant 0 : index
    %c192 = arith.constant 192 : index
    %29 = vector.load %arg5[%c0_32, %c192] : memref<20x256xf32, #tpu.memory_space<vmem>>, vector<20x32xf32>
    tpu.vector_store %arg5[%c0_32, %c192], %28 {strides = array<i32>} : memref<20x256xf32, #tpu.memory_space<vmem>>, vector<20x32xf32>,
    %c7 = arith.constant 7 : index
    %c0_33 = arith.constant 0 : index
    %30 = tpu.strided_load %arg4[%c7, %c0_33] {strides = array<i32: 8, 1>} : memref<160x32xf32, #tpu.memory_space<vmem>>, vector<20x32xf32>
    %c0_34 = arith.constant 0 : index
    %c224 = arith.constant 224 : index
    %31 = vector.load %arg5[%c0_34, %c224] : memref<20x256xf32, #tpu.memory_space<vmem>>, vector<20x32xf32>
    tpu.vector_store %arg5[%c0_34, %c224], %30 {strides = array<i32>} : memref<20x256xf32, #tpu.memory_space<vmem>>, vector<20x32xf32>,
    %c0_35 = arith.constant 0 : index
    %c0_36 = arith.constant 0 : index
    %32 = vector.load %arg2[%c0_35, %c0_36] : memref<8x20xf32, #tpu.memory_space<vmem>>, vector<8x20xf32>
    %c0_37 = arith.constant 0 : index
    %c0_38 = arith.constant 0 : index
    %33 = vector.load %arg5[%c0_37, %c0_38] : memref<20x256xf32, #tpu.memory_space<vmem>>, vector<20x256xf32>
    %cst_39 = arith.constant dense<0.000000e+00> : vector<8x256xf32>
    %34 = tpu.matmul %32, %33, %cst_39 {dimension_numbers = #tpu.dot_dimension_numbers<[1], [0], [0], [1], [0, 0, 1, 1], [], []>, precision = #tpu.contract_precision<fp32>} : vector<8x20xf32>, vector<20x256xf32>, vector<8x256xf32> -> vector<8x256xf32>
    %c0_40 = arith.constant 0 : index
    %c0_41 = arith.constant 0 : index
    %35 = vector.load %arg3[%c0_40, %c0_41] : memref<8x256xf32, #tpu.memory_space<vmem>>, vector<8x256xf32>
    tpu.vector_store %arg3[%c0_40, %c0_41], %34 {strides = array<i32>} : memref<8x256xf32, #tpu.memory_space<vmem>>, vector<8x256xf32>,
    return
  }
}

</mosaic_0001>

<llo_original>
// kernel: spectral_conv_forward.1
$region0: #{spectral_conv_forward.1}
  #allocation0 [shape = 'u32[]', space=smem, size = 0x4, offset = 0x4, fixed_abs, tag = 'smem constant byte address 0x4 - core index']
  #allocation1 [shape = 'u32[144,128]{1,0:T(1,128)}', space=vmem, size = 0x12000, scoped, tag = 'internal scratch']
  #allocation2 [shape = 'f32[160,32]{1,0:T(8,128)}', space=vmem, size = 0x14000, scoped, tag = 'scratch operand']
  #allocation3 [shape = 'f32[20,256]{1,0:T(8,128)}', space=vmem, size = 0x6000, scoped, tag = 'scratch operand']
  %s0 = inlined_call_operand.vmem [shape: f32[32,32], index: 0, kind: input, shape index: {}]
  %s1 = inlined_call_operand.vmem [shape: f32[32,32], index: 1, kind: input, shape index: {}]
  %s2 = inlined_call_operand.vmem [shape: f32[8,20], index: 2, kind: input, shape index: {}]
  %s3 = inlined_call_operand.vmem [shape: f32[8,256], index: 3, kind: output, shape index: {}]
  %s4 = sld [smem:[#allocation0]]
  $region22: #{spectral_conv_forward.1} parent=0
    _
  %s6 = ssub.s32 1, %s4
  %s7 = scalar_select 0, %s6, %s4
  // Predicated region
  $region2: #{spectral_conv_forward.1} parent=0 // pred_check
    _
  $region3: #{spectral_conv_forward.1} parent=0 // pred_check_branch
    %9 = sbr.rel (0) target = $region5
  $region4: #{spectral_conv_forward.1} parent=0 // pred_region
    _
  $region5: #{spectral_conv_forward.1} parent=0 // pred_fallthru
    _
  // Predicated region
  $region6: #{spectral_conv_forward.1} parent=0 // pred_check
    _
  $region7: #{spectral_conv_forward.1} parent=0 // pred_check_branch
    %11 = sbr.rel (0) target = $region9
  $region8: #{spectral_conv_forward.1} parent=0 // pred_region
    _
  $region9: #{spectral_conv_forward.1} parent=0 // pred_fallthru
    _
  // Predicated region
  $region10: #{spectral_conv_forward.1} parent=0 // pred_check
    _
  $region11: #{spectral_conv_forward.1} parent=0 // pred_check_branch
    %13 = sbr.rel (0) target = $region13
  $region12: #{spectral_conv_forward.1} parent=0 // pred_region
    _
  $region13: #{spectral_conv_forward.1} parent=0 // pred_fallthru
    _
  %v14 = vld [vmem:[%s0] sm:$0xff]
  %v15 = vld [vmem:[%s0 + $0x8] sm:$0xff]
  %v16 = vld [vmem:[%s0 + $0x10] sm:$0xff]
  %v17 = vld [vmem:[%s0 + $0x18] sm:$0xff]
  %v18 = vld [vmem:[%s1] sm:$0xff]
  %v19 = vld [vmem:[%s1 + $0x8] sm:$0xff]
  %v20 = vld [vmem:[%s1 + $0x10] sm:$0xff]
  %v21 = vld [vmem:[%s1 + $0x18] sm:$0xff]
  %vm22 = vcmask 261120
  %23 = vst.msk [vmem:[#allocation2] sm:$0xff] %vm22, %v18
  %24 = vst.msk [vmem:[#allocation2 + $0x8] sm:$0xff] %vm22, %v19
  %25 = vst.msk [vmem:[#allocation2 + $0x10] sm:$0xff] %vm22, %v20
  %26 = vst.msk [vmem:[#allocation2 + $0x18] sm:$0xff] %vm22, %v21
  %v28 = vsel %vm22, %v18, 0
  %v31 = vsel %vm22, %v19, 0
  %v34 = vsel %vm22, %v20, 0
  %v37 = vsel %vm22, %v21, 0
  %39 = vmatprep.subr.mxu0 0.0
  %v40 = vand.u32 %v14, 4294901760
  %41 = vmatpush1.msra.mxu0 %v40
  %42 = vmatprep.subr.mxu0 0.0
  %v43 = vand.u32 %v15, 4294901760
  %44 = vmatpush1.msra.mxu0 %v43
  %45 = vmatprep.subr.mxu0 0.0
  %v46 = vand.u32 %v16, 4294901760
  %47 = vmatpush1.msra.mxu0 %v46
  %48 = vmatprep.subr.mxu0 0.0
  %v49 = vand.u32 %v17, 4294901760
  %50 = vmatpush1.msra.mxu0 %v49
  %51 = vmatprep.subr.mxu0 0.0
  %52 = vmatpush1.msra.mxu0 0.0
  %53 = vmatprep.subr.mxu0 0.0
  %54 = vmatpush1.msra.mxu0 0.0
  %55 = vmatprep.subr.mxu0 0.0
  %56 = vmatpush1.msra.mxu0 0.0
  %57 = vmatprep.subr.mxu0 0.0
  %58 = vmatpush1.msra.mxu0 0.0
  %59 = vmatprep.subr.mxu0 0.0
  %60 = vmatpush1.msra.mxu0 0.0
  %61 = vmatprep.subr.mxu0 0.0
  %62 = vmatpush1.msra.mxu0 0.0
  %63 = vmatprep.subr.mxu0 0.0
  %64 = vmatpush1.msra.mxu0 0.0
  %65 = vmatprep.subr.mxu0 0.0
  %66 = vmatpush1.msra.mxu0 0.0
  %67 = vmatprep.subr.mxu0 0.0
  %68 = vmatpush1.msra.mxu0 0.0
  %69 = vmatprep.subr.mxu0 0.0
  %70 = vmatpush1.msra.mxu0 0.0
  %71 = vmatprep.subr.mxu0 0.0
  %72 = vmatpush1.msra.mxu0 0.0
  %73 = vmatprep.subr.mxu0 0.0
  %74 = vmatpush1.msra.mxu0 0.0
  %75 = vmatprep.subr.mxu0 0.0
  %76 = vmatpush1.msra.mxu0 0.0
  %77 = vmatprep.subr.mxu0 0.0
  %78 = vmatpush1.msra.mxu0 0.0
  %79 = vmatprep.subr.mxu0 0.0
  %80 = vmatpush1.msra.mxu0 0.0
  %81 = vmatprep.subr.mxu0 0.0
  %82 = vmatpush1.msra.mxu0 0.0
  %83 = vmatprep.subr.mxu0 0.0
  %84 = vmatpush1.msra.mxu0 0.0
  %85 = vmatprep.subr.mxu0 0.0
  %86 = vmatpush1.msra.mxu0 0.0
  %87 = vmatprep.subr.mxu0 0.0
  %88 = vmatpush1.msra.mxu0 0.0
  %89 = vmatprep.subr.mxu0 0.0
  %90 = vmatpush1.msra.mxu0 0.0
  %91 = vmatprep.subr.mxu0 0.0
  %92 = vmatpush1.msra.mxu0 0.0
  %93 = vmatprep.subr.mxu0 0.0
  %94 = vmatpush1.msra.mxu0 0.0
  %95 = vmatprep.subr.mxu0 0.0
  %96 = vmatpush1.msra.mxu0 0.0
  %97 = vmatprep.subr.mxu0 0.0
  %98 = vmatpush1.msra.mxu0 0.0
  %99 = vmatprep.subr.mxu0 0.0
  %100 = vmatpush1.msra.mxu0 0.0
  %101 = vmatprep.subr.mxu0 0.0
  %102 = vmatpush1.msra.mxu0 0.0
  %103 = vmatprep.subr.mxu0 0.0
  %104 = vmatpush1.msra.mxu0 0.0
  %105 = vmatprep.subr.mxu0 0.0
  %106 = vmatpush1.msra.mxu0 0.0
  %107 = vmatprep.mubr.f32.mxu0 0.0
  %v108 = vand.u32 %v28, 4294901760
  %v109 = vsub.f32 %v28, %v108
  %v110 = vand.u32 %v109, 4294901760
  %v111 = vsub.f32 %v109, %v110
  %v112 = vand.u32 %v111, 4294901760
  %113 = vmatmul.mubr.f32.gmra.mrb[0].mxu0 %v112
  %v114 = vpop.f32.mrb[0].mxu0
  %v115 = vadd.f32 0.0, %v114
  %v116 = vpop.f32.mrb[0].mxu0
  %117 = vmatprep.mubr.f32.mxu0 0.0
  %v118 = vand.u32 %v31, 4294901760
  %v119 = vsub.f32 %v31, %v118
  %v120 = vand.u32 %v119, 4294901760
  %v121 = vsub.f32 %v119, %v120
  %v122 = vand.u32 %v121, 4294901760
  %123 = vmatmul.mubr.f32.gmra.mrb[0].mxu0 %v122
  %v124 = vpop.f32.mrb[0].mxu0
  %v125 = vadd.f32 0.0, %v124
  %v126 = vpop.f32.mrb[0].mxu0
  %127 = vmatprep.mubr.f32.mxu0 0.0
  %v128 = vand.u32 %v34, 4294901760
  %v129 = vsub.f32 %v34, %v128
  %v130 = vand.u32 %v129, 4294901760
  %v131 = vsub.f32 %v129, %v130
  %v132 = vand.u32 %v131, 4294901760
  %133 = vmatmul.mubr.f32.gmra.mrb[0].mxu0 %v132
  %v134 = vpop.f32.mrb[0].mxu0
  %v135 = vadd.f32 0.0, %v134
  %v136 = vpop.f32.mrb[0].mxu0
  %137 = vmatprep.mubr.f32.mxu0 0.0
  %v138 = vand.u32 %v37, 4294901760
  %v139 = vsub.f32 %v37, %v138
  %v140 = vand.u32 %v139, 4294901760
  %v141 = vsub.f32 %v139, %v140
  %v142 = vand.u32 %v141, 4294901760
  %143 = vmatmul.mubr.f32.gmra.mrb[0].mxu0 %v142
  %v144 = vpop.f32.mrb[0].mxu0
  %v145 = vadd.f32 0.0, %v144
  %v146 = vpop.f32.mrb[0].mxu0
  %147 = vdwg.mxu0
  %148 = vmatprep.subr.mxu0 0.0
  %v149 = vand.u32 %v14, 4294901760
  %v150 = vsub.f32 %v14, %v149
  %v151 = vand.u32 %v150, 4294901760
  %v152 = vsub.f32 %v150, %v151
  %v153 = vand.u32 %v152, 4294901760
  %154 = vmatpush1.msra.mxu0 %v153
  %155 = vmatprep.subr.mxu0 0.0
  %v156 = vand.u32 %v15, 4294901760
  %v157 = vsub.f32 %v15, %v156
  %v158 = vand.u32 %v157, 4294901760
  %v159 = vsub.f32 %v157, %v158
  %v160 = vand.u32 %v159, 4294901760
  %161 = vmatpush1.msra.mxu0 %v160
  %162 = vmatprep.subr.mxu0 0.0
  %v163 = vand.u32 %v16, 4294901760
  %v164 = vsub.f32 %v16, %v163
  %v165 = vand.u32 %v164, 4294901760
  %v166 = vsub.f32 %v164, %v165
  %v167 = vand.u32 %v166, 4294901760
  %168 = vmatpush1.msra.mxu0 %v167
  %169 = vmatprep.subr.mxu0 0.0
  %v170 = vand.u32 %v17, 4294901760
  %v171 = vsub.f32 %v17, %v170
  %v172 = vand.u32 %v171, 4294901760
  %v173 = vsub.f32 %v171, %v172
  %v174 = vand.u32 %v173, 4294901760
  %175 = vmatpush1.msra.mxu0 %v174
  %176 = vmatprep.subr.mxu0 0.0
  %177 = vmatpush1.msra.mxu0 0.0
  %178 = vmatprep.subr.mxu0 0.0
  %179 = vmatpush1.msra.mxu0 0.0
  %180 = vmatprep.subr.mxu0 0.0
  %181 = vmatpush1.msra.mxu0 0.0
  %182 = vmatprep.subr.mxu0 0.0
  %183 = vmatpush1.msra.mxu0 0.0
  %184 = vmatprep.subr.mxu0 0.0
  %185 = vmatpush1.msra.mxu0 0.0
  %186 = vmatprep.subr.mxu0 0.0
  %187 = vmatpush1.msra.mxu0 0.0
  %188 = vmatprep.subr.mxu0 0.0
  %189 = vmatpush1.msra.mxu0 0.0
  %190 = vmatprep.subr.mxu0 0.0
  %191 = vmatpush1.msra.mxu0 0.0
  %192 = vmatprep.subr.mxu0 0.0
  %193 = vmatpush1.msra.mxu0 0.0
  %194 = vmatprep.subr.mxu0 0.0
  %195 = vmatpush1.msra.mxu0 0.0
  %196 = vmatprep.subr.mxu0 0.0
  %197 = vmatpush1.msra.mxu0 0.0
  %198 = vmatprep.subr.mxu0 0.0
  %199 = vmatpush1.msra.mxu0 0.0
  %200 = vmatprep.subr.mxu0 0.0
  %201 = vmatpush1.msra.mxu0 0.0
  %202 = vmatprep.subr.mxu0 0.0
  %203 = vmatpush1.msra.mxu0 0.0
  %204 = vmatprep.subr.mxu0 0.0
  %205 = vmatpush1.msra.mxu0 0.0
  %206 = vmatprep.subr.mxu0 0.0
  %207 = vmatpush1.msra.mxu0 0.0
  %208 = vmatprep.subr.mxu0 0.0
  %209 = vmatpush1.msra.mxu0 0.0
  %210 = vmatprep.subr.mxu0 0.0
  %211 = vmatpush1.msra.mxu0 0.0
  %212 = vmatprep.subr.mxu0 0.0
  %213 = vmatpush1.msra.mxu0 0.0
  %214 = vmatprep.subr.mxu0 0.0
  %215 = vmatpush1.msra.mxu0 0.0
  %216 = vmatprep.subr.mxu0 0.0
  %217 = vmatpush1.msra.mxu0 0.0
  %218 = vmatprep.subr.mxu0 0.0
  %219 = vmatpush1.msra.mxu0 0.0
  %220 = vmatprep.subr.mxu0 0.0
  %221 = vmatpush1.msra.mxu0 0.0
  %222 = vmatprep.subr.mxu0 0.0
  %223 = vmatpush1.msra.mxu0 0.0
  %224 = vmatprep.subr.mxu0 0.0
  %225 = vmatpush1.msra.mxu0 0.0
  %226 = vmatprep.subr.mxu0 0.0
  %227 = vmatpush1.msra.mxu0 0.0
  %228 = vmatprep.subr.mxu0 0.0
  %229 = vmatpush1.msra.mxu0 0.0
  %230 = vmatprep.subr.mxu0 0.0
  %231 = vmatpush1.msra.mxu0 0.0
  %232 = vmatprep.mubr.f32.mxu0 0.0
  %v233 = vand.u32 %v28, 4294901760
  %234 = vmatmul.mubr.f32.gmra.mrb[0].mxu0 %v233
  %v235 = vpop.f32.mrb[0].mxu0
  %v236 = vadd.f32 %v115, %v235
  %v237 = vpop.f32.mrb[0].mxu0
  %238 = vmatprep.mubr.f32.mxu0 0.0
  %v239 = vand.u32 %v31, 4294901760
  %240 = vmatmul.mubr.f32.gmra.mrb[0].mxu0 %v239
  %v241 = vpop.f32.mrb[0].mxu0
  %v242 = vadd.f32 %v125, %v241
  %v243 = vpop.f32.mrb[0].mxu0
  %244 = vmatprep.mubr.f32.mxu0 0.0
  %v245 = vand.u32 %v34, 4294901760
  %246 = vmatmul.mubr.f32.gmra.mrb[0].mxu0 %v245
  %v247 = vpop.f32.mrb[0].mxu0
  %v248 = vadd.f32 %v135, %v247
  %v249 = vpop.f32.mrb[0].mxu0
  %250 = vmatprep.mubr.f32.mxu0 0.0
  %v251 = vand.u32 %v37, 4294901760
  %252 = vmatmul.mubr.f32.gmra.mrb[0].mxu0 %v251
  %v253 = vpop.f32.mrb[0].mxu0
  %v254 = vadd.f32 %v145, %v253
  %v255 = vpop.f32.mrb[0].mxu0
  %256 = vdwg.mxu0
  %257 = vmatprep.subr.mxu0 0.0
  %v258 = vand.u32 %v14, 4294901760
  %v259 = vsub.f32 %v14, %v258
  %260 = vmatpush1.msra.mxu0 %v259
  %261 = vmatprep.subr.mxu0 0.0
  %v262 = vand.u32 %v15, 4294901760
  %v263 = vsub.f32 %v15, %v262
  %264 = vmatpush1.msra.mxu0 %v263
  %265 = vmatprep.subr.mxu0 0.0
  %v266 = vand.u32 %v16, 4294901760
  %v267 = vsub.f32 %v16, %v266
  %268 = vmatpush1.msra.mxu0 %v267
  %269 = vmatprep.subr.mxu0 0.0
  %v270 = vand.u32 %v17, 4294901760
  %v271 = vsub.f32 %v17, %v270
  %272 = vmatpush1.msra.mxu0 %v271
  %273 = vmatprep.subr.mxu0 0.0
  %274 = vmatpush1.msra.mxu0 0.0
  %275 = vmatprep.subr.mxu0 0.0
  %276 = vmatpush1.msra.mxu0 0.0
  %277 = vmatprep.subr.mxu0 0.0
  %278 = vmatpush1.msra.mxu0 0.0
  %279 = vmatprep.subr.mxu0 0.0
  %280 = vmatpush1.msra.mxu0 0.0
  %281 = vmatprep.subr.mxu0 0.0
  %282 = vmatpush1.msra.mxu0 0.0
  %283 = vmatprep.subr.mxu0 0.0
  %284 = vmatpush1.msra.mxu0 0.0
  %285 = vmatprep.subr.mxu0 0.0
  %286 = vmatpush1.msra.mxu0 0.0
  %287 = vmatprep.subr.mxu0 0.0
  %288 = vmatpush1.msra.mxu0 0.0
  %289 = vmatprep.subr.mxu0 0.0
  %290 = vmatpush1.msra.mxu0 0.0
  %291 = vmatprep.subr.mxu0 0.0
  %292 = vmatpush1.msra.mxu0 0.0
  %293 = vmatprep.subr.mxu0 0.0
  %294 = vmatpush1.msra.mxu0 0.0
  %295 = vmatprep.subr.mxu0 0.0
  %296 = vmatpush1.msra.mxu0 0.0
  %297 = vmatprep.subr.mxu0 0.0
  %298 = vmatpush1.msra.mxu0 0.0
  %299 = vmatprep.subr.mxu0 0.0
  %300 = vmatpush1.msra.mxu0 0.0
  %301 = vmatprep.subr.mxu0 0.0
  %302 = vmatpush1.msra.mxu0 0.0
  %303 = vmatprep.subr.mxu0 0.0
  %304 = vmatpush1.msra.mxu0 0.0
  %305 = vmatprep.subr.mxu0 0.0
  %306 = vmatpush1.msra.mxu0 0.0
  %307 = vmatprep.subr.mxu0 0.0
  %308 = vmatpush1.msra.mxu0 0.0
  %309 = vmatprep.subr.mxu0 0.0
  %310 = vmatpush1.msra.mxu0 0.0
  %311 = vmatprep.subr.mxu0 0.0
  %312 = vmatpush1.msra.mxu0 0.0
  %313 = vmatprep.subr.mxu0 0.0
  %314 = vmatpush1.msra.mxu0 0.0
  %315 = vmatprep.subr.mxu0 0.0
  %316 = vmatpush1.msra.mxu0 0.0
  %317 = vmatprep.subr.mxu0 0.0
  %318 = vmatpush1.msra.mxu0 0.0
  %319 = vmatprep.subr.mxu0 0.0
  %320 = vmatpush1.msra.mxu0 0.0
  %321 = vmatprep.subr.mxu0 0.0
  %322 = vmatpush1.msra.mxu0 0.0
  %323 = vmatprep.subr.mxu0 0.0
  %324 = vmatpush1.msra.mxu0 0.0
  %325 = vmatprep.subr.mxu0 0.0
  %326 = vmatpush1.msra.mxu0 0.0
  %327 = vmatprep.subr.mxu0 0.0
  %328 = vmatpush1.msra.mxu0 0.0
  %329 = vmatprep.mubr.f32.mxu0 0.0
  %v330 = vand.u32 %v28, 4294901760
  %v331 = vsub.f32 %v28, %v330
  %332 = vmatmul.mubr.f32.gmra.mrb[0].mxu0 %v331
  %v333 = vpop.f32.mrb[0].mxu0
  %v334 = vadd.f32 %v236, %v333
  %v335 = vpop.f32.mrb[0].mxu0
  %336 = vmatprep.mubr.f32.mxu0 0.0
  %v337 = vand.u32 %v31, 4294901760
  %v338 = vsub.f32 %v31, %v337
  %339 = vmatmul.mubr.f32.gmra.mrb[0].mxu0 %v338
  %v340 = vpop.f32.mrb[0].mxu0
  %v341 = vadd.f32 %v242, %v340
  %v342 = vpop.f32.mrb[0].mxu0
  %343 = vmatprep.mubr.f32.mxu0 0.0
  %v344 = vand.u32 %v34, 4294901760
  %v345 = vsub.f32 %v34, %v344
  %346 = vmatmul.mubr.f32.gmra.mrb[0].mxu0 %v345
  %v347 = vpop.f32.mrb[0].mxu0
  %v348 = vadd.f32 %v248, %v347
  %v349 = vpop.f32.mrb[0].mxu0
  %350 = vmatprep.mubr.f32.mxu0 0.0
  %v351 = vand.u32 %v37, 4294901760
  %v352 = vsub.f32 %v37, %v351
  %353 = vmatmul.mubr.f32.gmra.mrb[0].mxu0 %v352
  %v354 = vpop.f32.mrb[0].mxu0
  %v355 = vadd.f32 %v254, %v354
  %v356 = vpop.f32.mrb[0].mxu0
  %357 = vdwg.mxu0
  %358 = vmatprep.subr.mxu0 0.0
  %v359 = vand.u32 %v14, 4294901760
  %360 = vmatpush1.msra.mxu0 %v359
  %361 = vmatprep.subr.mxu0 0.0
  %v362 = vand.u32 %v15, 4294901760
  %363 = vmatpush1.msra.mxu0 %v362
  %364 = vmatprep.subr.mxu0 0.0
  %v365 = vand.u32 %v16, 4294901760
  %366 = vmatpush1.msra.mxu0 %v365
  %367 = vmatprep.subr.mxu0 0.0
  %v368 = vand.u32 %v17, 4294901760
  %369 = vmatpush1.msra.mxu0 %v368
  %370 = vmatprep.subr.mxu0 0.0
  %371 = vmatpush1.msra.mxu0 0.0
  %372 = vmatprep.subr.mxu0 0.0
  %373 = vmatpush1.msra.mxu0 0.0
  %374 = vmatprep.subr.mxu0 0.0
  %375 = vmatpush1.msra.mxu0 0.0
  %376 = vmatprep.subr.mxu0 0.0
  %377 = vmatpush1.msra.mxu0 0.0
  %378 = vmatprep.subr.mxu0 0.0
  %379 = vmatpush1.msra.mxu0 0.0
  %380 = vmatprep.subr.mxu0 0.0
  %381 = vmatpush1.msra.mxu0 0.0
  %382 = vmatprep.subr.mxu0 0.0
  %383 = vmatpush1.msra.mxu0 0.0
  %384 = vmatprep.subr.mxu0 0.0
  %385 = vmatpush1.msra.mxu0 0.0
  %386 = vmatprep.subr.mxu0 0.0
  %387 = vmatpush1.msra.mxu0 0.0
  %388 = vmatprep.subr.mxu0 0.0
  %389 = vmatpush1.msra.mxu0 0.0
  %390 = vmatprep.subr.mxu0 0.0
  %391 = vmatpush1.msra.mxu0 0.0
  %392 = vmatprep.subr.mxu0 0.0
  %393 = vmatpush1.msra.mxu0 0.0
  %394 = vmatprep.subr.mxu0 0.0
  %395 = vmatpush1.msra.mxu0 0.0
  %396 = vmatprep.subr.mxu0 0.0
  %397 = vmatpush1.msra.mxu0 0.0
  %398 = vmatprep.subr.mxu0 0.0
  %399 = vmatpush1.msra.mxu0 0.0
  %400 = vmatprep.subr.mxu0 0.0
  %401 = vmatpush1.msra.mxu0 0.0
  %402 = vmatprep.subr.mxu0 0.0
  %403 = vmatpush1.msra.mxu0 0.0
  %404 = vmatprep.subr.mxu0 0.0
  %405 = vmatpush1.msra.mxu0 0.0
  %406 = vmatprep.subr.mxu0 0.0
  %407 = vmatpush1.msra.mxu0 0.0
  %408 = vmatprep.subr.mxu0 0.0
  %409 = vmatpush1.msra.mxu0 0.0
  %410 = vmatprep.subr.mxu0 0.0
  %411 = vmatpush1.msra.mxu0 0.0
  %412 = vmatprep.subr.mxu0 0.0
  %413 = vmatpush1.msra.mxu0 0.0
  %414 = vmatprep.subr.mxu0 0.0
  %415 = vmatpush1.msra.mxu0 0.0
  %416 = vmatprep.subr.mxu0 0.0
  %417 = vmatpush1.msra.mxu0 0.0
  %418 = vmatprep.subr.mxu0 0.0
  %419 = vmatpush1.msra.mxu0 0.0
  %420 = vmatprep.subr.mxu0 0.0
  %421 = vmatpush1.msra.mxu0 0.0
  %422 = vmatprep.subr.mxu0 0.0
  %423 = vmatpush1.msra.mxu0 0.0
  %424 = vmatprep.subr.mxu0 0.0
  %425 = vmatpush1.msra.mxu0 0.0
  %426 = vmatprep.mubr.f32.mxu0 0.0
  %v427 = vand.u32 %v28, 4294901760
  %v428 = vsub.f32 %v28, %v427
  %v429 = vand.u32 %v428, 4294901760
  %430 = vmatmul.mubr.f32.gmra.mrb[0].mxu0 %v429
  %v431 = vpop.f32.mrb[0].mxu0
  %v432 = vadd.f32 %v334, %v431
  %v433 = vpop.f32.mrb[0].mxu0
  %434 = vmatprep.mubr.f32.mxu0 0.0
  %v435 = vand.u32 %v31, 4294901760
  %v436 = vsub.f32 %v31, %v435
  %v437 = vand.u32 %v436, 4294901760
  %438 = vmatmul.mubr.f32.gmra.mrb[0].mxu0 %v437
  %v439 = vpop.f32.mrb[0].mxu0
  %v440 = vadd.f32 %v341, %v439
  %v441 = vpop.f32.mrb[0].mxu0
  %442 = vmatprep.mubr.f32.mxu0 0.0
  %v443 = vand.u32 %v34, 4294901760
  %v444 = vsub.f32 %v34, %v443
  %v445 = vand.u32 %v444, 4294901760
  %446 = vmatmul.mubr.f32.gmra.mrb[0].mxu0 %v445
  %v447 = vpop.f32.mrb[0].mxu0
  %v448 = vadd.f32 %v348, %v447
  %v449 = vpop.f32.mrb[0].mxu0
  %450 = vmatprep.mubr.f32.mxu0 0.0
  %v451 = vand.u32 %v37, 4294901760
  %v452 = vsub.f32 %v37, %v451
  %v453 = vand.u32 %v452, 4294901760
  %454 = vmatmul.mubr.f32.gmra.mrb[0].mxu0 %v453
  %v455 = vpop.f32.mrb[0].mxu0
  %v456 = vadd.f32 %v355, %v455
  %v457 = vpop.f32.mrb[0].mxu0
  %458 = vdwg.mxu0
  %459 = vmatprep.subr.mxu0 0.0
  %v460 = vand.u32 %v14, 4294901760
  %v461 = vsub.f32 %v14, %v460
  %v462 = vand.u32 %v461, 4294901760
  %463 = vmatpush1.msra.mxu0 %v462
  %464 = vmatprep.subr.mxu0 0.0
  %v465 = vand.u32 %v15, 4294901760
  %v466 = vsub.f32 %v15, %v465
  %v467 = vand.u32 %v466, 4294901760
  %468 = vmatpush1.msra.mxu0 %v467
  %469 = vmatprep.subr.mxu0 0.0
  %v470 = vand.u32 %v16, 4294901760
  %v471 = vsub.f32 %v16, %v470
  %v472 = vand.u32 %v471, 4294901760
  %473 = vmatpush1.msra.mxu0 %v472
  %474 = vmatprep.subr.mxu0 0.0
  %v475 = vand.u32 %v17, 4294901760
  %v476 = vsub.f32 %v17, %v475
  %v477 = vand.u32 %v476, 4294901760
  %478 = vmatpush1.msra.mxu0 %v477
  %479 = vmatprep.subr.mxu0 0.0
  %480 = vmatpush1.msra.mxu0 0.0
  %481 = vmatprep.subr.mxu0 0.0
  %482 = vmatpush1.msra.mxu0 0.0
  %483 = vmatprep.subr.mxu0 0.0
  %484 = vmatpush1.msra.mxu0 0.0
  %485 = vmatprep.subr.mxu0 0.0
  %486 = vmatpush1.msra.mxu0 0.0
  %487 = vmatprep.subr.mxu0 0.0
  %488 = vmatpush1.msra.mxu0 0.0
  %489 = vmatprep.subr.mxu0 0.0
  %490 = vmatpush1.msra.mxu0 0.0
  %491 = vmatprep.subr.mxu0 0.0
  %492 = vmatpush1.msra.mxu0 0.0
  %493 = vmatprep.subr.mxu0 0.0
  %494 = vmatpush1.msra.mxu0 0.0
  %495 = vmatprep.subr.mxu0 0.0
  %496 = vmatpush1.msra.mxu0 0.0
  %497 = vmatprep.subr.mxu0 0.0
  %498 = vmatpush1.msra.mxu0 0.0
  %499 = vmatprep.subr.mxu0 0.0
  %500 = vmatpush1.msra.mxu0 0.0
  %501 = vmatprep.subr.mxu0 0.0
  %502 = vmatpush1.msra.mxu0 0.0
  %503 = vmatprep.subr.mxu0 0.0
  %504 = vmatpush1.msra.mxu0 0.0
  %505 = vmatprep.subr.mxu0 0.0
  %506 = vmatpush1.msra.mxu0 0.0
  %507 = vmatprep.subr.mxu0 0.0
  %508 = vmatpush1.msra.mxu0 0.0
  %509 = vmatprep.subr.mxu0 0.0
  %510 = vmatpush1.msra.mxu0 0.0
  %511 = vmatprep.subr.mxu0 0.0
  %512 = vmatpush1.msra.mxu0 0.0
  %513 = vmatprep.subr.mxu0 0.0
  %514 = vmatpush1.msra.mxu0 0.0
  %515 = vmatprep.subr.mxu0 0.0
  %516 = vmatpush1.msra.mxu0 0.0
  %517 = vmatprep.subr.mxu0 0.0
  %518 = vmatpush1.msra.mxu0 0.0
  %519 = vmatprep.subr.mxu0 0.0
  %520 = vmatpush1.msra.mxu0 0.0
  %521 = vmatprep.subr.mxu0 0.0
  %522 = vmatpush1.msra.mxu0 0.0
  %523 = vmatprep.subr.mxu0 0.0
  %524 = vmatpush1.msra.mxu0 0.0
  %525 = vmatprep.subr.mxu0 0.0
  %526 = vmatpush1.msra.mxu0 0.0
  %527 = vmatprep.subr.mxu0 0.0
  %528 = vmatpush1.msra.mxu0 0.0
  %529 = vmatprep.subr.mxu0 0.0
  %530 = vmatpush1.msra.mxu0 0.0
  %531 = vmatprep.subr.mxu0 0.0
  %532 = vmatpush1.msra.mxu0 0.0
  %533 = vmatprep.subr.mxu0 0.0
  %534 = vmatpush1.msra.mxu0 0.0
  %535 = vmatprep.mubr.f32.mxu0 0.0
  %v536 = vand.u32 %v28, 4294901760
  %537 = vmatmul.mubr.f32.gmra.mrb[0].mxu0 %v536
  %v538 = vpop.f32.mrb[0].mxu0
  %v539 = vadd.f32 %v432, %v538
  %v540 = vpop.f32.mrb[0].mxu0
  %541 = vmatprep.mubr.f32.mxu0 0.0
  %v542 = vand.u32 %v31, 4294901760
  %543 = vmatmul.mubr.f32.gmra.mrb[0].mxu0 %v542
  %v544 = vpop.f32.mrb[0].mxu0
  %v545 = vadd.f32 %v440, %v544
  %v546 = vpop.f32.mrb[0].mxu0
  %547 = vmatprep.mubr.f32.mxu0 0.0
  %v548 = vand.u32 %v34, 4294901760
  %549 = vmatmul.mubr.f32.gmra.mrb[0].mxu0 %v548
  %v550 = vpop.f32.mrb[0].mxu0
  %v551 = vadd.f32 %v448, %v550
  %v552 = vpop.f32.mrb[0].mxu0
  %553 = vmatprep.mubr.f32.mxu0 0.0
  %v554 = vand.u32 %v37, 4294901760
  %555 = vmatmul.mubr.f32.gmra.mrb[0].mxu0 %v554
  %v556 = vpop.f32.mrb[0].mxu0
  %v557 = vadd.f32 %v456, %v556
  %v558 = vpop.f32.mrb[0].mxu0
  %559 = vdwg.mxu0
  %560 = vmatprep.subr.mxu0 0.0
  %v561 = vand.u32 %v14, 4294901760
  %562 = vmatpush1.msra.mxu0 %v561
  %563 = vmatprep.subr.mxu0 0.0
  %v564 = vand.u32 %v15, 4294901760
  %565 = vmatpush1.msra.mxu0 %v564
  %566 = vmatprep.subr.mxu0 0.0
  %v567 = vand.u32 %v16, 4294901760
  %568 = vmatpush1.msra.mxu0 %v567
  %569 = vmatprep.subr.mxu0 0.0
  %v570 = vand.u32 %v17, 4294901760
  %571 = vmatpush1.msra.mxu0 %v570
  %572 = vmatprep.subr.mxu0 0.0
  %573 = vmatpush1.msra.mxu0 0.0
  %574 = vmatprep.subr.mxu0 0.0
  %575 = vmatpush1.msra.mxu0 0.0
  %576 = vmatprep.subr.mxu0 0.0
  %577 = vmatpush1.msra.mxu0 0.0
  %578 = vmatprep.subr.mxu0 0.0
  %579 = vmatpush1.msra.mxu0 0.0
  %580 = vmatprep.subr.mxu0 0.0
  %581 = vmatpush1.msra.mxu0 0.0
  %582 = vmatprep.subr.mxu0 0.0
  %583 = vmatpush1.msra.mxu0 0.0
  %584 = vmatprep.subr.mxu0 0.0
  %585 = vmatpush1.msra.mxu0 0.0
  %586 = vmatprep.subr.mxu0 0.0
  %587 = vmatpush1.msra.mxu0 0.0
  %588 = vmatprep.subr.mxu0 0.0
  %589 = vmatpush1.msra.mxu0 0.0
  %590 = vmatprep.subr.mxu0 0.0
  %591 = vmatpush1.msra.mxu0 0.0
  %592 = vmatprep.subr.mxu0 0.0
  %593 = vmatpush1.msra.mxu0 0.0
  %594 = vmatprep.subr.mxu0 0.0
  %595 = vmatpush1.msra.mxu0 0.0
  %596 = vmatprep.subr.mxu0 0.0
  %597 = vmatpush1.msra.mxu0 0.0
  %598 = vmatprep.subr.mxu0 0.0
  %599 = vmatpush1.msra.mxu0 0.0
  %600 = vmatprep.subr.mxu0 0.0
  %601 = vmatpush1.msra.mxu0 0.0
  %602 = vmatprep.subr.mxu0 0.0
  %603 = vmatpush1.msra.mxu0 0.0
  %604 = vmatprep.subr.mxu0 0.0
  %605 = vmatpush1.msra.mxu0 0.0
  %606 = vmatprep.subr.mxu0 0.0
  %607 = vmatpush1.msra.mxu0 0.0
  %608 = vmatprep.subr.mxu0 0.0
  %609 = vmatpush1.msra.mxu0 0.0
  %610 = vmatprep.subr.mxu0 0.0
  %611 = vmatpush1.msra.mxu0 0.0
  %612 = vmatprep.subr.mxu0 0.0
  %613 = vmatpush1.msra.mxu0 0.0
  %614 = vmatprep.subr.mxu0 0.0
  %615 = vmatpush1.msra.mxu0 0.0
  %616 = vmatprep.subr.mxu0 0.0
  %617 = vmatpush1.msra.mxu0 0.0
  %618 = vmatprep.subr.mxu0 0.0
  %619 = vmatpush1.msra.mxu0 0.0
  %620 = vmatprep.subr.mxu0 0.0
  %621 = vmatpush1.msra.mxu0 0.0
  %622 = vmatprep.subr.mxu0 0.0
  %623 = vmatpush1.msra.mxu0 0.0
  %624 = vmatprep.subr.mxu0 0.0
  %625 = vmatpush1.msra.mxu0 0.0
  %626 = vmatprep.subr.mxu0 0.0
  %627 = vmatpush1.msra.mxu0 0.0
  %628 = vmatprep.mubr.f32.mxu0 0.0
  %v629 = vand.u32 %v28, 4294901760
  %630 = vmatmul.mubr.f32.gmra.mrb[0].mxu0 %v629
  %v631 = vpop.f32.mrb[0].mxu0
  %v632 = vadd.f32 %v539, %v631
  %v633 = vpop.f32.mrb[0].mxu0
  %634 = vmatprep.mubr.f32.mxu0 0.0
  %v635 = vand.u32 %v31, 4294901760
  %636 = vmatmul.mubr.f32.gmra.mrb[0].mxu0 %v635
  %v637 = vpop.f32.mrb[0].mxu0
  %v638 = vadd.f32 %v545, %v637
  %v639 = vpop.f32.mrb[0].mxu0
  %640 = vmatprep.mubr.f32.mxu0 0.0
  %v641 = vand.u32 %v34, 4294901760
  %642 = vmatmul.mubr.f32.gmra.mrb[0].mxu0 %v641
  %v643 = vpop.f32.mrb[0].mxu0
  %v644 = vadd.f32 %v551, %v643
  %v645 = vpop.f32.mrb[0].mxu0
  %646 = vmatprep.mubr.f32.mxu0 0.0
  %v647 = vand.u32 %v37, 4294901760
  %648 = vmatmul.mubr.f32.gmra.mrb[0].mxu0 %v647
  %v649 = vpop.f32.mrb[0].mxu0
  %v650 = vadd.f32 %v557, %v649
  %v651 = vpop.f32.mrb[0].mxu0
  %652 = vdwg.mxu0
  %v653 = vmul.f32 %v632, 0.5
  %v654 = vmul.f32 %v638, 0.5
  %v655 = vmul.f32 %v644, 0.5
  %v656 = vmul.f32 %v650, 0.5
  %657 = vst.msk [vmem:[#allocation2 + $0x20] sm:$0xff] %vm22, %v653
  %658 = vst.msk [vmem:[#allocation2 + $0x28] sm:$0xff] %vm22, %v654
  %659 = vst.msk [vmem:[#allocation2 + $0x30] sm:$0xff] %vm22, %v655
  %660 = vst.msk [vmem:[#allocation2 + $0x38] sm:$0xff] %vm22, %v656
  %v662 = vsel %vm22, %v653, 0
  %v665 = vsel %vm22, %v654, 0
  %v668 = vsel %vm22, %v655, 0
  %v671 = vsel %vm22, %v656, 0
  %673 = vmatprep.subr.mxu0 0.0
  %v674 = vand.u32 %v14, 4294901760
  %675 = vmatpush1.msra.mxu0 %v674
  %676 = vmatprep.subr.mxu0 0.0
  %v677 = vand.u32 %v15, 4294901760
  %678 = vmatpush1.msra.mxu0 %v677
  %679 = vmatprep.subr.mxu0 0.0
  %v680 = vand.u32 %v16, 4294901760
  %681 = vmatpush1.msra.mxu0 %v680
  %682 = vmatprep.subr.mxu0 0.0
  %v683 = vand.u32 %v17, 4294901760
  %684 = vmatpush1.msra.mxu0 %v683
  %685 = vmatprep.subr.mxu0 0.0
  %686 = vmatpush1.msra.mxu0 0.0
  %687 = vmatprep.subr.mxu0 0.0
  %688 = vmatpush1.msra.mxu0 0.0
  %689 = vmatprep.subr.mxu0 0.0
  %690 = vmatpush1.msra.mxu0 0.0
  %691 = vmatprep.subr.mxu0 0.0
  %692 = vmatpush1.msra.mxu0 0.0
  %693 = vmatprep.subr.mxu0 0.0
  %694 = vmatpush1.msra.mxu0 0.0
  %695 = vmatprep.subr.mxu0 0.0
  %696 = vmatpush1.msra.mxu0 0.0
  %697 = vmatprep.subr.mxu0 0.0
  %698 = vmatpush1.msra.mxu0 0.0
  %699 = vmatprep.subr.mxu0 0.0
  %700 = vmatpush1.msra.mxu0 0.0
  %701 = vmatprep.subr.mxu0 0.0
  %702 = vmatpush1.msra.mxu0 0.0
  %703 = vmatprep.subr.mxu0 0.0
  %704 = vmatpush1.msra.mxu0 0.0
  %705 = vmatprep.subr.mxu0 0.0
  %706 = vmatpush1.msra.mxu0 0.0
  %707 = vmatprep.subr.mxu0 0.0
  %708 = vmatpush1.msra.mxu0 0.0
  %709 = vmatprep.subr.mxu0 0.0
  %710 = vmatpush1.msra.mxu0 0.0
  %711 = vmatprep.subr.mxu0 0.0
  %712 = vmatpush1.msra.mxu0 0.0
  %713 = vmatprep.subr.mxu0 0.0
  %714 = vmatpush1.msra.mxu0 0.0
  %715 = vmatprep.subr.mxu0 0.0
  %716 = vmatpush1.msra.mxu0 0.0
  %717 = vmatprep.subr.mxu0 0.0
  %718 = vmatpush1.msra.mxu0 0.0
  %719 = vmatprep.subr.mxu0 0.0
  %720 = vmatpush1.msra.mxu0 0.0
  %721 = vmatprep.subr.mxu0 0.0
  %722 = vmatpush1.msra.mxu0 0.0
  %723 = vmatprep.subr.mxu0 0.0
  %724 = vmatpush1.msra.mxu0 0.0
  %725 = vmatprep.subr.mxu0 0.0
  %726 = vmatpush1.msra.mxu0 0.0
  %727 = vmatprep.subr.mxu0 0.0
  %728 = vmatpush1.msra.mxu0 0.0
  %729 = vmatprep.subr.mxu0 0.0
  %730 = vmatpush1.msra.mxu0 0.0
  %731 = vmatprep.subr.mxu0 0.0
  %732 = vmatpush1.msra.mxu0 0.0
  %733 = vmatprep.subr.mxu0 0.0
  %734 = vmatpush1.msra.mxu0 0.0
  %735 = vmatprep.subr.mxu0 0.0
  %736 = vmatpush1.msra.mxu0 0.0
  %737 = vmatprep.subr.mxu0 0.0
  %738 = vmatpush1.msra.mxu0 0.0
  %739 = vmatprep.subr.mxu0 0.0
  %740 = vmatpush1.msra.mxu0 0.0
  %741 = vmatprep.mubr.f32.mxu0 0.0
  %v742 = vand.u32 %v662, 4294901760
  %v743 = vsub.f32 %v662, %v742
  %v744 = vand.u32 %v743, 4294901760
  %v745 = vsub.f32 %v743, %v744
  %v746 = vand.u32 %v745, 4294901760
  %747 = vmatmul.mubr.f32.gmra.mrb[0].mxu0 %v746
  %v748 = vpop.f32.mrb[0].mxu0
  %v749 = vadd.f32 0.0, %v748
  %v750 = vpop.f32.mrb[0].mxu0
  %751 = vmatprep.mubr.f32.mxu0 0.0
  %v752 = vand.u32 %v665, 4294901760
  %v753 = vsub.f32 %v665, %v752
  %v754 = vand.u32 %v753, 4294901760
  %v755 = vsub.f32 %v753, %v754
  %v756 = vand.u32 %v755, 4294901760
  %757 = vmatmul.mubr.f32.gmra.mrb[0].mxu0 %v756
  %v758 = vpop.f32.mrb[0].mxu0
  %v759 = vadd.f32 0.0, %v758
  %v760 = vpop.f32.mrb[0].mxu0
  %761 = vmatprep.mubr.f32.mxu0 0.0
  %v762 = vand.u32 %v668, 4294901760
  %v763 = vsub.f32 %v668, %v762
  %v764 = vand.u32 %v763, 4294901760
  %v765 = vsub.f32 %v763, %v764
  %v766 = vand.u32 %v765, 4294901760
  %767 = vmatmul.mubr.f32.gmra.mrb[0].mxu0 %v766
  %v768 = vpop.f32.mrb[0].mxu0
  %v769 = vadd.f32 0.0, %v768
  %v770 = vpop.f32.mrb[0].mxu0
  %771 = vmatprep.mubr.f32.mxu0 0.0
  %v772 = vand.u32 %v671, 4294901760
  %v773 = vsub.f32 %v671, %v772
  %v774 = vand.u32 %v773, 4294901760
  %v775 = vsub.f32 %v773, %v774
  %v776 = vand.u32 %v775, 4294901760
  %777 = vmatmul.mubr.f32.gmra.mrb[0].mxu0 %v776
  %v778 = vpop.f32.mrb[0].mxu0
  %v779 = vadd.f32 0.0, %v778
  %v780 = vpop.f32.mrb[0].mxu0
  %781 = vdwg.mxu0
  %782 = vmatprep.subr.mxu0 0.0
  %v783 = vand.u32 %v14, 4294901760
  %v784 = vsub.f32 %v14, %v783
  %v785 = vand.u32 %v784, 4294901760
  %v786 = vsub.f32 %v784, %v785
  %v787 = vand.u32 %v786, 4294901760
  %788 = vmatpush1.msra.mxu0 %v787
  %789 = vmatprep.subr.mxu0 0.0
  %v790 = vand.u32 %v15, 4294901760
  %v791 = vsub.f32 %v15, %v790
  %v792 = vand.u32 %v791, 4294901760
  %v793 = vsub.f32 %v791, %v792
  %v794 = vand.u32 %v793, 4294901760
  %795 = vmatpush1.msra.mxu0 %v794
  %796 = vmatprep.subr.mxu0 0.0
  %v797 = vand.u32 %v16, 4294901760
  %v798 = vsub.f32 %v16, %v797
  %v799 = vand.u32 %v798, 4294901760
  %v800 = vsub.f32 %v798, %v799
  %v801 = vand.u32 %v800, 4294901760
  %802 = vmatpush1.msra.mxu0 %v801
  %803 = vmatprep.subr.mxu0 0.0
  %v804 = vand.u32 %v17, 4294901760
  %v805 = vsub.f32 %v17, %v804
  %v806 = vand.u32 %v805, 4294901760
  %v807 = vsub.f32 %v805, %v806
  %v808 = vand.u32 %v807, 4294901760
  %809 = vmatpush1.msra.mxu0 %v808
  %810 = vmatprep.subr.mxu0 0.0
  %811 = vmatpush1.msra.mxu0 0.0
  %812 = vmatprep.subr.mxu0 0.0
  %813 = vmatpush1.msra.mxu0 0.0
  %814 = vmatprep.subr.mxu0 0.0
  %815 = vmatpush1.msra.mxu0 0.0
  %816 = vmatprep.subr.mxu0 0.0
  %817 = vmatpush1.msra.mxu0 0.0
  %818 = vmatprep.subr.mxu0 0.0
  %819 = vmatpush1.msra.mxu0 0.0
  %820 = vmatprep.subr.mxu0 0.0
  %821 = vmatpush1.msra.mxu0 0.0
  %822 = vmatprep.subr.mxu0 0.0
  %823 = vmatpush1.msra.mxu0 0.0
  %824 = vmatprep.subr.mxu0 0.0
  %825 = vmatpush1.msra.mxu0 0.0
  %826 = vmatprep.subr.mxu0 0.0
  %827 = vmatpush1.msra.mxu0 0.0
  %828 = vmatprep.subr.mxu0 0.0
  %829 = vmatpush1.msra.mxu0 0.0
  %830 = vmatprep.subr.mxu0 0.0
  %831 = vmatpush1.msra.mxu0 0.0
  %832 = vmatprep.subr.mxu0 0.0
  %833 = vmatpush1.msra.mxu0 0.0
  %834 = vmatprep.subr.mxu0 0.0
  %835 = vmatpush1.msra.mxu0 0.0
  %836 = vmatprep.subr.mxu0 0.0
  %837 = vmatpush1.msra.mxu0 0.0
  %838 = vmatprep.subr.mxu0 0.0
  %839 = vmatpush1.msra.mxu0 0.0
  %840 = vmatprep.subr.mxu0 0.0
  %841 = vmatpush1.msra.mxu0 0.0
  %842 = vmatprep.subr.mxu0 0.0
  %843 = vmatpush1.msra.mxu0 0.0
  %844 = vmatprep.subr.mxu0 0.0
  %845 = vmatpush1.msra.mxu0 0.0
  %846 = vmatprep.subr.mxu0 0.0
  %847 = vmatpush1.msra.mxu0 0.0
  %848 = vmatprep.subr.mxu0 0.0
  %849 = vmatpush1.msra.mxu0 0.0
  %850 = vmatprep.subr.mxu0 0.0
  %851 = vmatpush1.msra.mxu0 0.0
  %852 = vmatprep.subr.mxu0 0.0
  %853 = vmatpush1.msra.mxu0 0.0
  %854 = vmatprep.subr.mxu0 0.0
  %855 = vmatpush1.msra.mxu0 0.0
  %856 = vmatprep.subr.mxu0 0.0
  %857 = vmatpush1.msra.mxu0 0.0
  %858 = vmatprep.subr.mxu0 0.0
  %859 = vmatpush1.msra.mxu0 0.0
  %860 = vmatprep.subr.mxu0 0.0
  %861 = vmatpush1.msra.mxu0 0.0
  %862 = vmatprep.subr.mxu0 0.0
  %863 = vmatpush1.msra.mxu0 0.0
  %864 = vmatprep.subr.mxu0 0.0
  %865 = vmatpush1.msra.mxu0 0.0
  %866 = vmatprep.mubr.f32.mxu0 0.0
  %v867 = vand.u32 %v662, 4294901760
  %868 = vmatmul.mubr.f32.gmra.mrb[0].mxu0 %v867
  %v869 = vpop.f32.mrb[0].mxu0
  %v870 = vadd.f32 %v749, %v869
  %v871 = vpop.f32.mrb[0].mxu0
  %872 = vmatprep.mubr.f32.mxu0 0.0
  %v873 = vand.u32 %v665, 4294901760
  %874 = vmatmul.mubr.f32.gmra.mrb[0].mxu0 %v873
  %v875 = vpop.f32.mrb[0].mxu0
  %v876 = vadd.f32 %v759, %v875
  %v877 = vpop.f32.mrb[0].mxu0
  %878 = vmatprep.mubr.f32.mxu0 0.0
  %v879 = vand.u32 %v668, 4294901760
  %880 = vmatmul.mubr.f32.gmra.mrb[0].mxu0 %v879
  %v881 = vpop.f32.mrb[0].mxu0
  %v882 = vadd.f32 %v769, %v881
  %v883 = vpop.f32.mrb[0].mxu0
  %884 = vmatprep.mubr.f32.mxu0 0.0
  %v885 = vand.u32 %v671, 4294901760
  %886 = vmatmul.mubr.f32.gmra.mrb[0].mxu0 %v885
  %v887 = vpop.f32.mrb[0].mxu0
  %v888 = vadd.f32 %v779, %v887
  %v889 = vpop.f32.mrb[0].mxu0
  %890 = vdwg.mxu0
  %891 = vmatprep.subr.mxu0 0.0
  %v892 = vand.u32 %v14, 4294901760
  %v893 = vsub.f32 %v14, %v892
  %894 = vmatpush1.msra.mxu0 %v893
  %895 = vmatprep.subr.mxu0 0.0
  %v896 = vand.u32 %v15, 4294901760
  %v897 = vsub.f32 %v15, %v896
  %898 = vmatpush1.msra.mxu0 %v897
  %899 = vmatprep.subr.mxu0 0.0
  %v900 = vand.u32 %v16, 4294901760
  %v901 = vsub.f32 %v16, %v900
  %902 = vmatpush1.msra.mxu0 %v901
  %903 = vmatprep.subr.mxu0 0.0
  %v904 = vand.u32 %v17, 4294901760
  %v905 = vsub.f32 %v17, %v904
  %906 = vmatpush1.msra.mxu0 %v905
  %907 = vmatprep.subr.mxu0 0.0
  %908 = vmatpush1.msra.mxu0 0.0
  %909 = vmatprep.subr.mxu0 0.0
  %910 = vmatpush1.msra.mxu0 0.0
  %911 = vmatprep.subr.mxu0 0.0
  %912 = vmatpush1.msra.mxu0 0.0
  %913 = vmatprep.subr.mxu0 0.0
  %914 = vmatpush1.msra.mxu0 0.0
  %915 = vmatprep.subr.mxu0 0.0
  %916 = vmatpush1.msra.mxu0 0.0
  %917 = vmatprep.subr.mxu0 0.0
  %918 = vmatpush1.msra.mxu0 0.0
  %919 = vmatprep.subr.mxu0 0.0
  %920 = vmatpush1.msra.mxu0 0.0
  %921 = vmatprep.subr.mxu0 0.0
  %922 = vmatpush1.msra.mxu0 0.0
  %923 = vmatprep.subr.mxu0 0.0
  %924 = vmatpush1.msra.mxu0 0.0
  %925 = vmatprep.subr.mxu0 0.0
  %926 = vmatpush1.msra.mxu0 0.0
  %927 = vmatprep.subr.mxu0 0.0
  %928 = vmatpush1.msra.mxu0 0.0
  %929 = vmatprep.subr.mxu0 0.0
  %930 = vmatpush1.msra.mxu0 0.0
  %931 = vmatprep.subr.mxu0 0.0
  %932 = vmatpush1.msra.mxu0 0.0
  %933 = vmatprep.subr.mxu0 0.0
  %934 = vmatpush1.msra.mxu0 0.0
  %935 = vmatprep.subr.mxu0 0.0
  %936 = vmatpush1.msra.mxu0 0.0
  %937 = vmatprep.subr.mxu0 0.0
  %938 = vmatpush1.msra.mxu0 0.0
  %939 = vmatprep.subr.mxu0 0.0
  %940 = vmatpush1.msra.mxu0 0.0
  %941 = vmatprep.subr.mxu0 0.0
  %942 = vmatpush1.msra.mxu0 0.0
  %943 = vmatprep.subr.mxu0 0.0
  %944 = vmatpush1.msra.mxu0 0.0
  %945 = vmatprep.subr.mxu0 0.0
  %946 = vmatpush1.msra.mxu0 0.0
  %947 = vmatprep.subr.mxu0 0.0
  %948 = vmatpush1.msra.mxu0 0.0
  %949 = vmatprep.subr.mxu0 0.0
  %950 = vmatpush1.msra.mxu0 0.0
  %951 = vmatprep.subr.mxu0 0.0
  %952 = vmatpush1.msra.mxu0 0.0
  %953 = vmatprep.subr.mxu0 0.0
  %954 = vmatpush1.msra.mxu0 0.0
  %955 = vmatprep.subr.mxu0 0.0
  %956 = vmatpush1.msra.mxu0 0.0
  %957 = vmatprep.subr.mxu0 0.0
  %958 = vmatpush1.msra.mxu0 0.0
  %959 = vmatprep.subr.mxu0 0.0
  %960 = vmatpush1.msra.mxu0 0.0
  %961 = vmatprep.subr.mxu0 0.0
  %962 = vmatpush1.msra.mxu0 0.0
  %963 = vmatprep.mubr.f32.mxu0 0.0
  %v964 = vand.u32 %v662, 4294901760
  %v965 = vsub.f32 %v662, %v964
  %966 = vmatmul.mubr.f32.gmra.mrb[0].mxu0 %v965
  %v967 = vpop.f32.mrb[0].mxu0
  %v968 = vadd.f32 %v870, %v967
  %v969 = vpop.f32.mrb[0].mxu0
  %970 = vmatprep.mubr.f32.mxu0 0.0
  %v971 = vand.u32 %v665, 4294901760
  %v972 = vsub.f32 %v665, %v971
  %973 = vmatmul.mubr.f32.gmra.mrb[0].mxu0 %v972
  %v974 = vpop.f32.mrb[0].mxu0
  %v975 = vadd.f32 %v876, %v974
  %v976 = vpop.f32.mrb[0].mxu0
  %977 = vmatprep.mubr.f32.mxu0 0.0
  %v978 = vand.u32 %v668, 4294901760
  %v979 = vsub.f32 %v668, %v978
  %980 = vmatmul.mubr.f32.gmra.mrb[0].mxu0 %v979
  %v981 = vpop.f32.mrb[0].mxu0
  %v982 = vadd.f32 %v882, %v981
  %v983 = vpop.f32.mrb[0].mxu0
  %984 = vmatprep.mubr.f32.mxu0 0.0
  %v985 = vand.u32 %v671, 4294901760
  %v986 = vsub.f32 %v671, %v985
  %987 = vmatmul.mubr.f32.gmra.mrb[0].mxu0 %v986
  %v988 = vpop.f32.mrb[0].mxu0
  %v989 = vadd.f32 %v888, %v988
  %v990 = vpop.f32.mrb[0].mxu0
  %991 = vdwg.mxu0
  %992 = vmatprep.subr.mxu0 0.0
  %v993 = vand.u32 %v14, 4294901760
  %994 = vmatpush1.msra.mxu0 %v993
  %995 = vmatprep.subr.mxu0 0.0
  %v996 = vand.u32 %v15, 4294901760
  %997 = vmatpush1.msra.mxu0 %v996
  %998 = vmatprep.subr.mxu0 0.0
  %v999 = vand.u32 %v16, 4294901760
  %1000 = vmatpush1.msra.mxu0 %v999
  %1001 = vmatprep.subr.mxu0 0.0
  %v1002 = vand.u32 %v17, 4294901760
  %1003 = vmatpush1.msra.mxu0 %v1002
  %1004 = vmatprep.subr.mxu0 0.0
  %1005 = vmatpush1.msra.mxu0 0.0
  %1006 = vmatprep.subr.mxu0 0.0
  %1007 = vmatpush1.msra.mxu0 0.0
  %1008 = vmatprep.subr.mxu0 0.0
  %1009 = vmatpush1.msra.mxu0 0.0
  %1010 = vmatprep.subr.mxu0 0.0
  %1011 = vmatpush1.msra.mxu0 0.0
  %1012 = vmatprep.subr.mxu0 0.0
  %1013 = vmatpush1.msra.mxu0 0.0
  %1014 = vmatprep.subr.mxu0 0.0
  %1015 = vmatpush1.msra.mxu0 0.0
  %1016 = vmatprep.subr.mxu0 0.0
  %1017 = vmatpush1.msra.mxu0 0.0
  %1018 = vmatprep.subr.mxu0 0.0
  %1019 = vmatpush1.msra.mxu0 0.0
  %1020 = vmatprep.subr.mxu0 0.0
  %1021 = vmatpush1.msra.mxu0 0.0
  %1022 = vmatprep.subr.mxu0 0.0
  %1023 = vmatpush1.msra.mxu0 0.0
  %1024 = vmatprep.subr.mxu0 0.0
  %1025 = vmatpush1.msra.mxu0 0.0
  %1026 = vmatprep.subr.mxu0 0.0
  %1027 = vmatpush1.msra.mxu0 0.0
  %1028 = vmatprep.subr.mxu0 0.0
  %1029 = vmatpush1.msra.mxu0 0.0
  %1030 = vmatprep.subr.mxu0 0.0
  %1031 = vmatpush1.msra.mxu0 0.0
  %1032 = vmatprep.subr.mxu0 0.0
  %1033 = vmatpush1.msra.mxu0 0.0
  %1034 = vmatprep.subr.mxu0 0.0
  %1035 = vmatpush1.msra.mxu0 0.0
  %1036 = vmatprep.subr.mxu0 0.0
  %1037 = vmatpush1.msra.mxu0 0.0
  %1038 = vmatprep.subr.mxu0 0.0
  %1039 = vmatpush1.msra.mxu0 0.0
  %1040 = vmatprep.subr.mxu0 0.0
  %1041 = vmatpush1.msra.mxu0 0.0
  %1042 = vmatprep.subr.mxu0 0.0
  %1043 = vmatpush1.msra.mxu0 0.0
  %1044 = vmatprep.subr.mxu0 0.0
  %1045 = vmatpush1.msra.mxu0 0.0
  %1046 = vmatprep.subr.mxu0 0.0
  %1047 = vmatpush1.msra.mxu0 0.0
  %1048 = vmatprep.subr.mxu0 0.0
  %1049 = vmatpush1.msra.mxu0 0.0
  %1050 = vmatprep.subr.mxu0 0.0
  %1051 = vmatpush1.msra.mxu0 0.0
  %1052 = vmatprep.subr.mxu0 0.0
  %1053 = vmatpush1.msra.mxu0 0.0
  %1054 = vmatprep.subr.mxu0 0.0
  %1055 = vmatpush1.msra.mxu0 0.0
  %1056 = vmatprep.subr.mxu0 0.0
  %1057 = vmatpush1.msra.mxu0 0.0
  %1058 = vmatprep.subr.mxu0 0.0
  %1059 = vmatpush1.msra.mxu0 0.0
  %1060 = vmatprep.mubr.f32.mxu0 0.0
  %v1061 = vand.u32 %v662, 4294901760
  %v1062 = vsub.f32 %v662, %v1061
  %v1063 = vand.u32 %v1062, 4294901760
  %1064 = vmatmul.mubr.f32.gmra.mrb[0].mxu0 %v1063
  %v1065 = vpop.f32.mrb[0].mxu0
  %v1066 = vadd.f32 %v968, %v1065
  %v1067 = vpop.f32.mrb[0].mxu0
  %1068 = vmatprep.mubr.f32.mxu0 0.0
  %v1069 = vand.u32 %v665, 4294901760
  %v1070 = vsub.f32 %v665, %v1069
  %v1071 = vand.u32 %v1070, 4294901760
  %1072 = vmatmul.mubr.f32.gmra.mrb[0].mxu0 %v1071
  %v1073 = vpop.f32.mrb[0].mxu0
  %v1074 = vadd.f32 %v975, %v1073
  %v1075 = vpop.f32.mrb[0].mxu0
  %1076 = vmatprep.mubr.f32.mxu0 0.0
  %v1077 = vand.u32 %v668, 4294901760
  %v1078 = vsub.f32 %v668, %v1077
  %v1079 = vand.u32 %v1078, 4294901760
  %1080 = vmatmul.mubr.f32.gmra.mrb[0].mxu0 %v1079
  %v1081 = vpop.f32.mrb[0].mxu0
  %v1082 = vadd.f32 %v982, %v1081
  %v1083 = vpop.f32.mrb[0].mxu0
  %1084 = vmatprep.mubr.f32.mxu0 0.0
  %v1085 = vand.u32 %v671, 4294901760
  %v1086 = vsub.f32 %v671, %v1085
  %v1087 = vand.u32 %v1086, 4294901760
  %1088 = vmatmul.mubr.f32.gmra.mrb[0].mxu0 %v1087
  %v1089 = vpop.f32.mrb[0].mxu0
  %v1090 = vadd.f32 %v989, %v1089
  %v1091 = vpop.f32.mrb[0].mxu0
  %1092 = vdwg.mxu0
  %1093 = vmatprep.subr.mxu0 0.0
  %v1094 = vand.u32 %v14, 4294901760
  %v1095 = vsub.f32 %v14, %v1094
  %v1096 = vand.u32 %v1095, 4294901760
  %1097 = vmatpush1.msra.mxu0 %v1096
  %1098 = vmatprep.subr.mxu0 0.0
  %v1099 = vand.u32 %v15, 4294901760
  %v1100 = vsub.f32 %v15, %v1099
  %v1101 = vand.u32 %v1100, 4294901760
  %1102 = vmatpush1.msra.mxu0 %v1101
  %1103 = vmatprep.subr.mxu0 0.0
  %v1104 = vand.u32 %v16, 4294901760
  %v1105 = vsub.f32 %v16, %v1104
  %v1106 = vand.u32 %v1105, 4294901760
  %1107 = vmatpush1.msra.mxu0 %v1106
  %1108 = vmatprep.subr.mxu0 0.0
  %v1109 = vand.u32 %v17, 4294901760
  %v1110 = vsub.f32 %v17, %v1109
  %v1111 = vand.u32 %v1110, 4294901760
  %1112 = vmatpush1.msra.mxu0 %v1111
  %1113 = vmatprep.subr.mxu0 0.0
  %1114 = vmatpush1.msra.mxu0 0.0
  %1115 = vmatprep.subr.mxu0 0.0
  %1116 = vmatpush1.msra.mxu0 0.0
  %1117 = vmatprep.subr.mxu0 0.0
  %1118 = vmatpush1.msra.mxu0 0.0
  %1119 = vmatprep.subr.mxu0 0.0
  %1120 = vmatpush1.msra.mxu0 0.0
  %1121 = vmatprep.subr.mxu0 0.0
  %1122 = vmatpush1.msra.mxu0 0.0
  %1123 = vmatprep.subr.mxu0 0.0
  %1124 = vmatpush1.msra.mxu0 0.0
  %1125 = vmatprep.subr.mxu0 0.0
  %1126 = vmatpush1.msra.mxu0 0.0
  %1127 = vmatprep.subr.mxu0 0.0
  %1128 = vmatpush1.msra.mxu0 0.0
  %1129 = vmatprep.subr.mxu0 0.0
  %1130 = vmatpush1.msra.mxu0 0.0
  %1131 = vmatprep.subr.mxu0 0.0
  %1132 = vmatpush1.msra.mxu0 0.0
  %1133 = vmatprep.subr.mxu0 0.0
  %1134 = vmatpush1.msra.mxu0 0.0
  %1135 = vmatprep.subr.mxu0 0.0
  %1136 = vmatpush1.msra.mxu0 0.0
  %1137 = vmatprep.subr.mxu0 0.0
  %1138 = vmatpush1.msra.mxu0 0.0
  %1139 = vmatprep.subr.mxu0 0.0
  %1140 = vmatpush1.msra.mxu0 0.0
  %1141 = vmatprep.subr.mxu0 0.0
  %1142 = vmatpush1.msra.mxu0 0.0
  %1143 = vmatprep.subr.mxu0 0.0
  %1144 = vmatpush1.msra.mxu0 0.0
  %1145 = vmatprep.subr.mxu0 0.0
  %1146 = vmatpush1.msra.mxu0 0.0
  %1147 = vmatprep.subr.mxu0 0.0
  %1148 = vmatpush1.msra.mxu0 0.0
  %1149 = vmatprep.subr.mxu0 0.0
  %1150 = vmatpush1.msra.mxu0 0.0
  %1151 = vmatprep.subr.mxu0 0.0
  %1152 = vmatpush1.msra.mxu0 0.0
  %1153 = vmatprep.subr.mxu0 0.0
  %1154 = vmatpush1.msra.mxu0 0.0
  %1155 = vmatprep.subr.mxu0 0.0
  %1156 = vmatpush1.msra.mxu0 0.0
  %1157 = vmatprep.subr.mxu0 0.0
  %1158 = vmatpush1.msra.mxu0 0.0
  %1159 = vmatprep.subr.mxu0 0.0
  %1160 = vmatpush1.msra.mxu0 0.0
  %1161 = vmatprep.subr.mxu0 0.0
  %1162 = vmatpush1.msra.mxu0 0.0
  %1163 = vmatprep.subr.mxu0 0.0
  %1164 = vmatpush1.msra.mxu0 0.0
  %1165 = vmatprep.subr.mxu0 0.0
  %1166 = vmatpush1.msra.mxu0 0.0
  %1167 = vmatprep.subr.mxu0 0.0
  %1168 = vmatpush1.msra.mxu0 0.0
  %1169 = vmatprep.mubr.f32.mxu0 0.0
  %v1170 = vand.u32 %v662, 4294901760
  %1171 = vmatmul.mubr.f32.gmra.mrb[0].mxu0 %v1170
  %v1172 = vpop.f32.mrb[0].mxu0
  %v1173 = vadd.f32 %v1066, %v1172
  %v1174 = vpop.f32.mrb[0].mxu0
  %1175 = vmatprep.mubr.f32.mxu0 0.0
  %v1176 = vand.u32 %v665, 4294901760
  %1177 = vmatmul.mubr.f32.gmra.mrb[0].mxu0 %v1176
  %v1178 = vpop.f32.mrb[0].mxu0
  %v1179 = vadd.f32 %v1074, %v1178
  %v1180 = vpop.f32.mrb[0].mxu0
  %1181 = vmatprep.mubr.f32.mxu0 0.0
  %v1182 = vand.u32 %v668, 4294901760
  %1183 = vmatmul.mubr.f32.gmra.mrb[0].mxu0 %v1182
  %v1184 = vpop.f32.mrb[0].mxu0
  %v1185 = vadd.f32 %v1082, %v1184
  %v1186 = vpop.f32.mrb[0].mxu0
  %1187 = vmatprep.mubr.f32.mxu0 0.0
  %v1188 = vand.u32 %v671, 4294901760
  %1189 = vmatmul.mubr.f32.gmra.mrb[0].mxu0 %v1188
  %v1190 = vpop.f32.mrb[0].mxu0
  %v1191 = vadd.f32 %v1090, %v1190
  %v1192 = vpop.f32.mrb[0].mxu0
  %1193 = vdwg.mxu0
  %1194 = vmatprep.subr.mxu0 0.0
  %v1195 = vand.u32 %v14, 4294901760
  %1196 = vmatpush1.msra.mxu0 %v1195
  %1197 = vmatprep.subr.mxu0 0.0
  %v1198 = vand.u32 %v15, 4294901760
  %1199 = vmatpush1.msra.mxu0 %v1198
  %1200 = vmatprep.subr.mxu0 0.0
  %v1201 = vand.u32 %v16, 4294901760
  %1202 = vmatpush1.msra.mxu0 %v1201
  %1203 = vmatprep.subr.mxu0 0.0
  %v1204 = vand.u32 %v17, 4294901760
  %1205 = vmatpush1.msra.mxu0 %v1204
  %1206 = vmatprep.subr.mxu0 0.0
  %1207 = vmatpush1.msra.mxu0 0.0
  %1208 = vmatprep.subr.mxu0 0.0
  %1209 = vmatpush1.msra.mxu0 0.0
  %1210 = vmatprep.subr.mxu0 0.0
  %1211 = vmatpush1.msra.mxu0 0.0
  %1212 = vmatprep.subr.mxu0 0.0
  %1213 = vmatpush1.msra.mxu0 0.0
  %1214 = vmatprep.subr.mxu0 0.0
  %1215 = vmatpush1.msra.mxu0 0.0
  %1216 = vmatprep.subr.mxu0 0.0
  %1217 = vmatpush1.msra.mxu0 0.0
  %1218 = vmatprep.subr.mxu0 0.0
  %1219 = vmatpush1.msra.mxu0 0.0
  %1220 = vmatprep.subr.mxu0 0.0
  %1221 = vmatpush1.msra.mxu0 0.0
  %1222 = vmatprep.subr.mxu0 0.0
  %1223 = vmatpush1.msra.mxu0 0.0
  %1224 = vmatprep.subr.mxu0 0.0
  %1225 = vmatpush1.msra.mxu0 0.0
  %1226 = vmatprep.subr.mxu0 0.0
  %1227 = vmatpush1.msra.mxu0 0.0
  %1228 = vmatprep.subr.mxu0 0.0
  %1229 = vmatpush1.msra.mxu0 0.0
  %1230 = vmatprep.subr.mxu0 0.0
  %1231 = vmatpush1.msra.mxu0 0.0
  %1232 = vmatprep.subr.mxu0 0.0
  %1233 = vmatpush1.msra.mxu0 0.0
  %1234 = vmatprep.subr.mxu0 0.0
  %1235 = vmatpush1.msra.mxu0 0.0
  %1236 = vmatprep.subr.mxu0 0.0
  %1237 = vmatpush1.msra.mxu0 0.0
  %1238 = vmatprep.subr.mxu0 0.0
  %1239 = vmatpush1.msra.mxu0 0.0
  %1240 = vmatprep.subr.mxu0 0.0
  %1241 = vmatpush1.msra.mxu0 0.0
  %1242 = vmatprep.subr.mxu0 0.0
  %1243 = vmatpush1.msra.mxu0 0.0
  %1244 = vmatprep.subr.mxu0 0.0
  %1245 = vmatpush1.msra.mxu0 0.0
  %1246 = vmatprep.subr.mxu0 0.0
  %1247 = vmatpush1.msra.mxu0 0.0
  %1248 = vmatprep.subr.mxu0 0.0
  %1249 = vmatpush1.msra.mxu0 0.0
  %1250 = vmatprep.subr.mxu0 0.0
  %1251 = vmatpush1.msra.mxu0 0.0
  %1252 = vmatprep.subr.mxu0 0.0
  %1253 = vmatpush1.msra.mxu0 0.0
  %1254 = vmatprep.subr.mxu0 0.0
  %1255 = vmatpush1.msra.mxu0 0.0
  %1256 = vmatprep.subr.mxu0 0.0
  %1257 = vmatpush1.msra.mxu0 0.0
  %1258 = vmatprep.subr.mxu0 0.0
  %1259 = vmatpush1.msra.mxu0 0.0
  %1260 = vmatprep.subr.mxu0 0.0
  %1261 = vmatpush1.msra.mxu0 0.0
  %1262 = vmatprep.mubr.f32.mxu0 0.0
  %v1263 = vand.u32 %v662, 4294901760
  %1264 = vmatmul.mubr.f32.gmra.mrb[0].mxu0 %v1263
  %v1265 = vpop.f32.mrb[0].mxu0
  %v1266 = vadd.f32 %v1173, %v1265
  %v1267 = vpop.f32.mrb[0].mxu0
  %1268 = vmatprep.mubr.f32.mxu0 0.0
  %v1269 = vand.u32 %v665, 4294901760
  %1270 = vmatmul.mubr.f32.gmra.mrb[0].mxu0 %v1269
  %v1271 = vpop.f32.mrb[0].mxu0
  %v1272 = vadd.f32 %v1179, %v1271
  %v1273 = vpop.f32.mrb[0].mxu0
  %1274 = vmatprep.mubr.f32.mxu0 0.0
  %v1275 = vand.u32 %v668, 4294901760
  %1276 = vmatmul.mubr.f32.gmra.mrb[0].mxu0 %v1275
  %v1277 = vpop.f32.mrb[0].mxu0
  %v1278 = vadd.f32 %v1185, %v1277
  %v1279 = vpop.f32.mrb[0].mxu0
  %1280 = vmatprep.mubr.f32.mxu0 0.0
  %v1281 = vand.u32 %v671, 4294901760
  %1282 = vmatmul.mubr.f32.gmra.mrb[0].mxu0 %v1281
  %v1283 = vpop.f32.mrb[0].mxu0
  %v1284 = vadd.f32 %v1191, %v1283
  %v1285 = vpop.f32.mrb[0].mxu0
  %1286 = vdwg.mxu0
  %v1287 = vsub.f32 %v1266, %v18
  %v1288 = vsub.f32 %v1272, %v19
  %v1289 = vsub.f32 %v1278, %v20
  %v1290 = vsub.f32 %v1284, %v21
  %1291 = vst.msk [vmem:[#allocation2 + $0x40] sm:$0xff] %vm22, %v1287
  %1292 = vst.msk [vmem:[#allocation2 + $0x48] sm:$0xff] %vm22, %v1288
  %1293 = vst.msk [vmem:[#allocation2 + $0x50] sm:$0xff] %vm22, %v1289
  %1294 = vst.msk [vmem:[#allocation2 + $0x58] sm:$0xff] %vm22, %v1290
  %v1296 = vsel %vm22, %v1287, 0
  %v1299 = vsel %vm22, %v1288, 0
  %v1302 = vsel %vm22, %v1289, 0
  %v1305 = vsel %vm22, %v1290, 0
  %1307 = vmatprep.subr.mxu0 0.0
  %v1308 = vand.u32 %v14, 4294901760
  %1309 = vmatpush1.msra.mxu0 %v1308
  %1310 = vmatprep.subr.mxu0 0.0
  %v1311 = vand.u32 %v15, 4294901760
  %1312 = vmatpush1.msra.mxu0 %v1311
  %1313 = vmatprep.subr.mxu0 0.0
  %v1314 = vand.u32 %v16, 4294901760
  %1315 = vmatpush1.msra.mxu0 %v1314
  %1316 = vmatprep.subr.mxu0 0.0
  %v1317 = vand.u32 %v17, 4294901760
  %1318 = vmatpush1.msra.mxu0 %v1317
  %1319 = vmatprep.subr.mxu0 0.0
  %1320 = vmatpush1.msra.mxu0 0.0
  %1321 = vmatprep.subr.mxu0 0.0
  %1322 = vmatpush1.msra.mxu0 0.0
  %1323 = vmatprep.subr.mxu0 0.0
  %1324 = vmatpush1.msra.mxu0 0.0
  %1325 = vmatprep.subr.mxu0 0.0
  %1326 = vmatpush1.msra.mxu0 0.0
  %1327 = vmatprep.subr.mxu0 0.0
  %1328 = vmatpush1.msra.mxu0 0.0
  %1329 = vmatprep.subr.mxu0 0.0
  %1330 = vmatpush1.msra.mxu0 0.0
  %1331 = vmatprep.subr.mxu0 0.0
  %1332 = vmatpush1.msra.mxu0 0.0
  %1333 = vmatprep.subr.mxu0 0.0
  %1334 = vmatpush1.msra.mxu0 0.0
  %1335 = vmatprep.subr.mxu0 0.0
  %1336 = vmatpush1.msra.mxu0 0.0
  %1337 = vmatprep.subr.mxu0 0.0
  %1338 = vmatpush1.msra.mxu0 0.0
  %1339 = vmatprep.subr.mxu0 0.0
  %1340 = vmatpush1.msra.mxu0 0.0
  %1341 = vmatprep.subr.mxu0 0.0
  %1342 = vmatpush1.msra.mxu0 0.0
  %1343 = vmatprep.subr.mxu0 0.0
  %1344 = vmatpush1.msra.mxu0 0.0
  %1345 = vmatprep.subr.mxu0 0.0
  %1346 = vmatpush1.msra.mxu0 0.0
  %1347 = vmatprep.subr.mxu0 0.0
  %1348 = vmatpush1.msra.mxu0 0.0
  %1349 = vmatprep.subr.mxu0 0.0
  %1350 = vmatpush1.msra.mxu0 0.0
  %1351 = vmatprep.subr.mxu0 0.0
  %1352 = vmatpush1.msra.mxu0 0.0
  %1353 = vmatprep.subr.mxu0 0.0
  %1354 = vmatpush1.msra.mxu0 0.0
  %1355 = vmatprep.subr.mxu0 0.0
  %1356 = vmatpush1.msra.mxu0 0.0
  %1357 = vmatprep.subr.mxu0 0.0
  %1358 = vmatpush1.msra.mxu0 0.0
  %1359 = vmatprep.subr.mxu0 0.0
  %1360 = vmatpush1.msra.mxu0 0.0
  %1361 = vmatprep.subr.mxu0 0.0
  %1362 = vmatpush1.msra.mxu0 0.0
  %1363 = vmatprep.subr.mxu0 0.0
  %1364 = vmatpush1.msra.mxu0 0.0
  %1365 = vmatprep.subr.mxu0 0.0
  %1366 = vmatpush1.msra.mxu0 0.0
  %1367 = vmatprep.subr.mxu0 0.0
  %1368 = vmatpush1.msra.mxu0 0.0
  %1369 = vmatprep.subr.mxu0 0.0
  %1370 = vmatpush1.msra.mxu0 0.0
  %1371 = vmatprep.subr.mxu0 0.0
  %1372 = vmatpush1.msra.mxu0 0.0
  %1373 = vmatprep.subr.mxu0 0.0
  %1374 = vmatpush1.msra.mxu0 0.0
  %1375 = vmatprep.mubr.f32.mxu0 0.0
  %v1376 = vand.u32 %v1296, 4294901760
  %v1377 = vsub.f32 %v1296, %v1376
  %v1378 = vand.u32 %v1377, 4294901760
  %v1379 = vsub.f32 %v1377, %v1378
  %v1380 = vand.u32 %v1379, 4294901760
  %1381 = vmatmul.mubr.f32.gmra.mrb[0].mxu0 %v1380
  %v1382 = vpop.f32.mrb[0].mxu0
  %v1383 = vadd.f32 0.0, %v1382
  %v1384 = vpop.f32.mrb[0].mxu0
  %1385 = vmatprep.mubr.f32.mxu0 0.0
  %v1386 = vand.u32 %v1299, 4294901760
  %v1387 = vsub.f32 %v1299, %v1386
  %v1388 = vand.u32 %v1387, 4294901760
  %v1389 = vsub.f32 %v1387, %v1388
  %v1390 = vand.u32 %v1389, 4294901760
  %1391 = vmatmul.mubr.f32.gmra.mrb[0].mxu0 %v1390
  %v1392 = vpop.f32.mrb[0].mxu0
  %v1393 = vadd.f32 0.0, %v1392
  %v1394 = vpop.f32.mrb[0].mxu0
  %1395 = vmatprep.mubr.f32.mxu0 0.0
  %v1396 = vand.u32 %v1302, 4294901760
  %v1397 = vsub.f32 %v1302, %v1396
  %v1398 = vand.u32 %v1397, 4294901760
  %v1399 = vsub.f32 %v1397, %v1398
  %v1400 = vand.u32 %v1399, 4294901760
  %1401 = vmatmul.mubr.f32.gmra.mrb[0].mxu0 %v1400
  %v1402 = vpop.f32.mrb[0].mxu0
  %v1403 = vadd.f32 0.0, %v1402
  %v1404 = vpop.f32.mrb[0].mxu0
  %1405 = vmatprep.mubr.f32.mxu0 0.0
  %v1406 = vand.u32 %v1305, 4294901760
  %v1407 = vsub.f32 %v1305, %v1406
  %v1408 = vand.u32 %v1407, 4294901760
  %v1409 = vsub.f32 %v1407, %v1408
  %v1410 = vand.u32 %v1409, 4294901760
  %1411 = vmatmul.mubr.f32.gmra.mrb[0].mxu0 %v1410
  %v1412 = vpop.f32.mrb[0].mxu0
  %v1413 = vadd.f32 0.0, %v1412
  %v1414 = vpop.f32.mrb[0].mxu0
  %1415 = vdwg.mxu0
  %1416 = vmatprep.subr.mxu0 0.0
  %v1417 = vand.u32 %v14, 4294901760
  %v1418 = vsub.f32 %v14, %v1417
  %v1419 = vand.u32 %v1418, 4294901760
  %v1420 = vsub.f32 %v1418, %v1419
  %v1421 = vand.u32 %v1420, 4294901760
  %1422 = vmatpush1.msra.mxu0 %v1421
  %1423 = vmatprep.subr.mxu0 0.0
  %v1424 = vand.u32 %v15, 4294901760
  %v1425 = vsub.f32 %v15, %v1424
  %v1426 = vand.u32 %v1425, 4294901760
  %v1427 = vsub.f32 %v1425, %v1426
  %v1428 = vand.u32 %v1427, 4294901760
  %1429 = vmatpush1.msra.mxu0 %v1428
  %1430 = vmatprep.subr.mxu0 0.0
  %v1431 = vand.u32 %v16, 4294901760
  %v1432 = vsub.f32 %v16, %v1431
  %v1433 = vand.u32 %v1432, 4294901760
  %v1434 = vsub.f32 %v1432, %v1433
  %v1435 = vand.u32 %v1434, 4294901760
  %1436 = vmatpush1.msra.mxu0 %v1435
  %1437 = vmatprep.subr.mxu0 0.0
  %v1438 = vand.u32 %v17, 4294901760
  %v1439 = vsub.f32 %v17, %v1438
  %v1440 = vand.u32 %v1439, 4294901760
  %v1441 = vsub.f32 %v1439, %v1440
  %v1442 = vand.u32 %v1441, 4294901760
  %1443 = vmatpush1.msra.mxu0 %v1442
  %1444 = vmatprep.subr.mxu0 0.0
  %1445 = vmatpush1.msra.mxu0 0.0
  %1446 = vmatprep.subr.mxu0 0.0
  %1447 = vmatpush1.msra.mxu0 0.0
  %1448 = vmatprep.subr.mxu0 0.0
  %1449 = vmatpush1.msra.mxu0 0.0
  %1450 = vmatprep.subr.mxu0 0.0
  %1451 = vmatpush1.msra.mxu0 0.0
  %1452 = vmatprep.subr.mxu0 0.0
  %1453 = vmatpush1.msra.mxu0 0.0
  %1454 = vmatprep.subr.mxu0 0.0
  %1455 = vmatpush1.msra.mxu0 0.0
  %1456 = vmatprep.subr.mxu0 0.0
  %1457 = vmatpush1.msra.mxu0 0.0
  %1458 = vmatprep.subr.mxu0 0.0
  %1459 = vmatpush1.msra.mxu0 0.0
  %1460 = vmatprep.subr.mxu0 0.0
  %1461 = vmatpush1.msra.mxu0 0.0
  %1462 = vmatprep.subr.mxu0 0.0
  %1463 = vmatpush1.msra.mxu0 0.0
  %1464 = vmatprep.subr.mxu0 0.0
  %1465 = vmatpush1.msra.mxu0 0.0
  %1466 = vmatprep.subr.mxu0 0.0
  %1467 = vmatpush1.msra.mxu0 0.0
  %1468 = vmatprep.subr.mxu0 0.0
  %1469 = vmatpush1.msra.mxu0 0.0
  %1470 = vmatprep.subr.mxu0 0.0
  %1471 = vmatpush1.msra.mxu0 0.0
  %1472 = vmatprep.subr.mxu0 0.0
  %1473 = vmatpush1.msra.mxu0 0.0
  %1474 = vmatprep.subr.mxu0 0.0
  %1475 = vmatpush1.msra.mxu0 0.0
  %1476 = vmatprep.subr.mxu0 0.0
  %1477 = vmatpush1.msra.mxu0 0.0
  %1478 = vmatprep.subr.mxu0 0.0
  %1479 = vmatpush1.msra.mxu0 0.0
  %1480 = vmatprep.subr.mxu0 0.0
  %1481 = vmatpush1.msra.mxu0 0.0
  %1482 = vmatprep.subr.mxu0 0.0
  %1483 = vmatpush1.msra.mxu0 0.0
  %1484 = vmatprep.subr.mxu0 0.0
  %1485 = vmatpush1.msra.mxu0 0.0
  %1486 = vmatprep.subr.mxu0 0.0
  %1487 = vmatpush1.msra.mxu0 0.0
  %1488 = vmatprep.subr.mxu0 0.0
  %1489 = vmatpush1.msra.mxu0 0.0
  %1490 = vmatprep.subr.mxu0 0.0
  %1491 = vmatpush1.msra.mxu0 0.0
  %1492 = vmatprep.subr.mxu0 0.0
  %1493 = vmatpush1.msra.mxu0 0.0
  %1494 = vmatprep.subr.mxu0 0.0
  %1495 = vmatpush1.msra.mxu0 0.0
  %1496 = vmatprep.subr.mxu0 0.0
  %1497 = vmatpush1.msra.mxu0 0.0
  %1498 = vmatprep.subr.mxu0 0.0
  %1499 = vmatpush1.msra.mxu0 0.0
  %1500 = vmatprep.mubr.f32.mxu0 0.0
  %v1501 = vand.u32 %v1296, 4294901760
  %1502 = vmatmul.mubr.f32.gmra.mrb[0].mxu0 %v1501
  %v1503 = vpop.f32.mrb[0].mxu0
  %v1504 = vadd.f32 %v1383, %v1503
  %v1505 = vpop.f32.mrb[0].mxu0
  %1506 = vmatprep.mubr.f32.mxu0 0.0
  %v1507 = vand.u32 %v1299, 4294901760
  %1508 = vmatmul.mubr.f32.gmra.mrb[0].mxu0 %v1507
  %v1509 = vpop.f32.mrb[0].mxu0
  %v1510 = vadd.f32 %v1393, %v1509
  %v1511 = vpop.f32.mrb[0].mxu0
  %1512 = vmatprep.mubr.f32.mxu0 0.0
  %v1513 = vand.u32 %v1302, 4294901760
  %1514 = vmatmul.mubr.f32.gmra.mrb[0].mxu0 %v1513
  %v1515 = vpop.f32.mrb[0].mxu0
  %v1516 = vadd.f32 %v1403, %v1515
  %v1517 = vpop.f32.mrb[0].mxu0
  %1518 = vmatprep.mubr.f32.mxu0 0.0
  %v1519 = vand.u32 %v1305, 4294901760
  %1520 = vmatmul.mubr.f32.gmra.mrb[0].mxu0 %v1519
  %v1521 = vpop.f32.mrb[0].mxu0
  %v1522 = vadd.f32 %v1413, %v1521
  %v1523 = vpop.f32.mrb[0].mxu0
  %1524 = vdwg.mxu0
  %1525 = vmatprep.subr.mxu0 0.0
  %v1526 = vand.u32 %v14, 4294901760
  %v1527 = vsub.f32 %v14, %v1526
  %1528 = vmatpush1.msra.mxu0 %v1527
  %1529 = vmatprep.subr.mxu0 0.0
  %v1530 = vand.u32 %v15, 4294901760
  %v1531 = vsub.f32 %v15, %v1530
  %1532 = vmatpush1.msra.mxu0 %v1531
  %1533 = vmatprep.subr.mxu0 0.0
  %v1534 = vand.u32 %v16, 4294901760
  %v1535 = vsub.f32 %v16, %v1534
  %1536 = vmatpush1.msra.mxu0 %v1535
  %1537 = vmatprep.subr.mxu0 0.0
  %v1538 = vand.u32 %v17, 4294901760
  %v1539 = vsub.f32 %v17, %v1538
  %1540 = vmatpush1.msra.mxu0 %v1539
  %1541 = vmatprep.subr.mxu0 0.0
  %1542 = vmatpush1.msra.mxu0 0.0
  %1543 = vmatprep.subr.mxu0 0.0
  %1544 = vmatpush1.msra.mxu0 0.0
  %1545 = vmatprep.subr.mxu0 0.0
  %1546 = vmatpush1.msra.mxu0 0.0
  %1547 = vmatprep.subr.mxu0 0.0
  %1548 = vmatpush1.msra.mxu0 0.0
  %1549 = vmatprep.subr.mxu0 0.0
  %1550 = vmatpush1.msra.mxu0 0.0
  %1551 = vmatprep.subr.mxu0 0.0
  %1552 = vmatpush1.msra.mxu0 0.0
  %1553 = vmatprep.subr.mxu0 0.0
  %1554 = vmatpush1.msra.mxu0 0.0
  %1555 = vmatprep.subr.mxu0 0.0
  %1556 = vmatpush1.msra.mxu0 0.0
  %1557 = vmatprep.subr.mxu0 0.0
  %1558 = vmatpush1.msra.mxu0 0.0
  %1559 = vmatprep.subr.mxu0 0.0
  %1560 = vmatpush1.msra.mxu0 0.0
  %1561 = vmatprep.subr.mxu0 0.0
  %1562 = vmatpush1.msra.mxu0 0.0
  %1563 = vmatprep.subr.mxu0 0.0
  %1564 = vmatpush1.msra.mxu0 0.0
  %1565 = vmatprep.subr.mxu0 0.0
  %1566 = vmatpush1.msra.mxu0 0.0
  %1567 = vmatprep.subr.mxu0 0.0
  %1568 = vmatpush1.msra.mxu0 0.0
  %1569 = vmatprep.subr.mxu0 0.0
  %1570 = vmatpush1.msra.mxu0 0.0
  %1571 = vmatprep.subr.mxu0 0.0
  %1572 = vmatpush1.msra.mxu0 0.0
  %1573 = vmatprep.subr.mxu0 0.0
  %1574 = vmatpush1.msra.mxu0 0.0
  %1575 = vmatprep.subr.mxu0 0.0
  %1576 = vmatpush1.msra.mxu0 0.0
  %1577 = vmatprep.subr.mxu0 0.0
  %1578 = vmatpush1.msra.mxu0 0.0
  %1579 = vmatprep.subr.mxu0 0.0
  %1580 = vmatpush1.msra.mxu0 0.0
  %1581 = vmatprep.subr.mxu0 0.0
  %1582 = vmatpush1.msra.mxu0 0.0
  %1583 = vmatprep.subr.mxu0 0.0
  %1584 = vmatpush1.msra.mxu0 0.0
  %1585 = vmatprep.subr.mxu0 0.0
  %1586 = vmatpush1.msra.mxu0 0.0
  %1587 = vmatprep.subr.mxu0 0.0
  %1588 = vmatpush1.msra.mxu0 0.0
  %1589 = vmatprep.subr.mxu0 0.0
  %1590 = vmatpush1.msra.mxu0 0.0
  %1591 = vmatprep.subr.mxu0 0.0
  %1592 = vmatpush1.msra.mxu0 0.0
  %1593 = vmatprep.subr.mxu0 0.0
  %1594 = vmatpush1.msra.mxu0 0.0
  %1595 = vmatprep.subr.mxu0 0.0
  %1596 = vmatpush1.msra.mxu0 0.0
  %1597 = vmatprep.mubr.f32.mxu0 0.0
  %v1598 = vand.u32 %v1296, 4294901760
  %v1599 = vsub.f32 %v1296, %v1598
  %1600 = vmatmul.mubr.f32.gmra.mrb[0].mxu0 %v1599
  %v1601 = vpop.f32.mrb[0].mxu0
  %v1602 = vadd.f32 %v1504, %v1601
  %v1603 = vpop.f32.mrb[0].mxu0
  %1604 = vmatprep.mubr.f32.mxu0 0.0
  %v1605 = vand.u32 %v1299, 4294901760
  %v1606 = vsub.f32 %v1299, %v1605
  %1607 = vmatmul.mubr.f32.gmra.mrb[0].mxu0 %v1606
  %v1608 = vpop.f32.mrb[0].mxu0
  %v1609 = vadd.f32 %v1510, %v1608
  %v1610 = vpop.f32.mrb[0].mxu0
  %1611 = vmatprep.mubr.f32.mxu0 0.0
  %v1612 = vand.u32 %v1302, 4294901760
  %v1613 = vsub.f32 %v1302, %v1612
  %1614 = vmatmul.mubr.f32.gmra.mrb[0].mxu0 %v1613
  %v1615 = vpop.f32.mrb[0].mxu0
  %v1616 = vadd.f32 %v1516, %v1615
  %v1617 = vpop.f32.mrb[0].mxu0
  %1618 = vmatprep.mubr.f32.mxu0 0.0
  %v1619 = vand.u32 %v1305, 4294901760
  %v1620 = vsub.f32 %v1305, %v1619
  %1621 = vmatmul.mubr.f32.gmra.mrb[0].mxu0 %v1620
  %v1622 = vpop.f32.mrb[0].mxu0
  %v1623 = vadd.f32 %v1522, %v1622
  %v1624 = vpop.f32.mrb[0].mxu0
  %1625 = vdwg.mxu0
  %1626 = vmatprep.subr.mxu0 0.0
  %v1627 = vand.u32 %v14, 4294901760
  %1628 = vmatpush1.msra.mxu0 %v1627
  %1629 = vmatprep.subr.mxu0 0.0
  %v1630 = vand.u32 %v15, 4294901760
  %1631 = vmatpush1.msra.mxu0 %v1630
  %1632 = vmatprep.subr.mxu0 0.0
  %v1633 = vand.u32 %v16, 4294901760
  %1634 = vmatpush1.msra.mxu0 %v1633
  %1635 = vmatprep.subr.mxu0 0.0
  %v1636 = vand.u32 %v17, 4294901760
  %1637 = vmatpush1.msra.mxu0 %v1636
  %1638 = vmatprep.subr.mxu0 0.0
  %1639 = vmatpush1.msra.mxu0 0.0
  %1640 = vmatprep.subr.mxu0 0.0
  %1641 = vmatpush1.msra.mxu0 0.0
  %1642 = vmatprep.subr.mxu0 0.0
  %1643 = vmatpush1.msra.mxu0 0.0
  %1644 = vmatprep.subr.mxu0 0.0
  %1645 = vmatpush1.msra.mxu0 0.0
  %1646 = vmatprep.subr.mxu0 0.0
  %1647 = vmatpush1.msra.mxu0 0.0
  %1648 = vmatprep.subr.mxu0 0.0
  %1649 = vmatpush1.msra.mxu0 0.0
  %1650 = vmatprep.subr.mxu0 0.0
  %1651 = vmatpush1.msra.mxu0 0.0
  %1652 = vmatprep.subr.mxu0 0.0
  %1653 = vmatpush1.msra.mxu0 0.0
  %1654 = vmatprep.subr.mxu0 0.0
  %1655 = vmatpush1.msra.mxu0 0.0
  %1656 = vmatprep.subr.mxu0 0.0
  %1657 = vmatpush1.msra.mxu0 0.0
  %1658 = vmatprep.subr.mxu0 0.0
  %1659 = vmatpush1.msra.mxu0 0.0
  %1660 = vmatprep.subr.mxu0 0.0
  %1661 = vmatpush1.msra.mxu0 0.0
  %1662 = vmatprep.subr.mxu0 0.0
  %1663 = vmatpush1.msra.mxu0 0.0
  %1664 = vmatprep.subr.mxu0 0.0
  %1665 = vmatpush1.msra.mxu0 0.0
  %1666 = vmatprep.subr.mxu0 0.0
  %1667 = vmatpush1.msra.mxu0 0.0
  %1668 = vmatprep.subr.mxu0 0.0
  %1669 = vmatpush1.msra.mxu0 0.0
  %1670 = vmatprep.subr.mxu0 0.0
  %1671 = vmatpush1.msra.mxu0 0.0
  %1672 = vmatprep.subr.mxu0 0.0
  %1673 = vmatpush1.msra.mxu0 0.0
  %1674 = vmatprep.subr.mxu0 0.0
  %1675 = vmatpush1.msra.mxu0 0.0
  %1676 = vmatprep.subr.mxu0 0.0
  %1677 = vmatpush1.msra.mxu0 0.0
  %1678 = vmatprep.subr.mxu0 0.0
  %1679 = vmatpush1.msra.mxu0 0.0
  %1680 = vmatprep.subr.mxu0 0.0
  %1681 = vmatpush1.msra.mxu0 0.0
  %1682 = vmatprep.subr.mxu0 0.0
  %1683 = vmatpush1.msra.mxu0 0.0
  %1684 = vmatprep.subr.mxu0 0.0
  %1685 = vmatpush1.msra.mxu0 0.0
  %1686 = vmatprep.subr.mxu0 0.0
  %1687 = vmatpush1.msra.mxu0 0.0
  %1688 = vmatprep.subr.mxu0 0.0
  %1689 = vmatpush1.msra.mxu0 0.0
  %1690 = vmatprep.subr.mxu0 0.0
  %1691 = vmatpush1.msra.mxu0 0.0
  %1692 = vmatprep.subr.mxu0 0.0
  %1693 = vmatpush1.msra.mxu0 0.0
  %1694 = vmatprep.mubr.f32.mxu0 0.0
  %v1695 = vand.u32 %v1296, 4294901760
  %v1696 = vsub.f32 %v1296, %v1695
  %v1697 = vand.u32 %v1696, 4294901760
  %1698 = vmatmul.mubr.f32.gmra.mrb[0].mxu0 %v1697
  %v1699 = vpop.f32.mrb[0].mxu0
  %v1700 = vadd.f32 %v1602, %v1699
  %v1701 = vpop.f32.mrb[0].mxu0
  %1702 = vmatprep.mubr.f32.mxu0 0.0
  %v1703 = vand.u32 %v1299, 4294901760
  %v1704 = vsub.f32 %v1299, %v1703
  %v1705 = vand.u32 %v1704, 4294901760
  %1706 = vmatmul.mubr.f32.gmra.mrb[0].mxu0 %v1705
  %v1707 = vpop.f32.mrb[0].mxu0
  %v1708 = vadd.f32 %v1609, %v1707
  %v1709 = vpop.f32.mrb[0].mxu0
  %1710 = vmatprep.mubr.f32.mxu0 0.0
  %v1711 = vand.u32 %v1302, 4294901760
  %v1712 = vsub.f32 %v1302, %v1711
  %v1713 = vand.u32 %v1712, 4294901760
  %1714 = vmatmul.mubr.f32.gmra.mrb[0].mxu0 %v1713
  %v1715 = vpop.f32.mrb[0].mxu0
  %v1716 = vadd.f32 %v1616, %v1715
  %v1717 = vpop.f32.mrb[0].mxu0
  %1718 = vmatprep.mubr.f32.mxu0 0.0
  %v1719 = vand.u32 %v1305, 4294901760
  %v1720 = vsub.f32 %v1305, %v1719
  %v1721 = vand.u32 %v1720, 4294901760
  %1722 = vmatmul.mubr.f32.gmra.mrb[0].mxu0 %v1721
  %v1723 = vpop.f32.mrb[0].mxu0
  %v1724 = vadd.f32 %v1623, %v1723
  %v1725 = vpop.f32.mrb[0].mxu0
  %1726 = vdwg.mxu0
  %1727 = vmatprep.subr.mxu0 0.0
  %v1728 = vand.u32 %v14, 4294901760
  %v1729 = vsub.f32 %v14, %v1728
  %v1730 = vand.u32 %v1729, 4294901760
  %1731 = vmatpush1.msra.mxu0 %v1730
  %1732 = vmatprep.subr.mxu0 0.0
  %v1733 = vand.u32 %v15, 4294901760
  %v1734 = vsub.f32 %v15, %v1733
  %v1735 = vand.u32 %v1734, 4294901760
  %1736 = vmatpush1.msra.mxu0 %v1735
  %1737 = vmatprep.subr.mxu0 0.0
  %v1738 = vand.u32 %v16, 4294901760
  %v1739 = vsub.f32 %v16, %v1738
  %v1740 = vand.u32 %v1739, 4294901760
  %1741 = vmatpush1.msra.mxu0 %v1740
  %1742 = vmatprep.subr.mxu0 0.0
  %v1743 = vand.u32 %v17, 4294901760
  %v1744 = vsub.f32 %v17, %v1743
  %v1745 = vand.u32 %v1744, 4294901760
  %1746 = vmatpush1.msra.mxu0 %v1745
  %1747 = vmatprep.subr.mxu0 0.0
  %1748 = vmatpush1.msra.mxu0 0.0
  %1749 = vmatprep.subr.mxu0 0.0
  %1750 = vmatpush1.msra.mxu0 0.0
  %1751 = vmatprep.subr.mxu0 0.0
  %1752 = vmatpush1.msra.mxu0 0.0
  %1753 = vmatprep.subr.mxu0 0.0
  %1754 = vmatpush1.msra.mxu0 0.0
  %1755 = vmatprep.subr.mxu0 0.0
  %1756 = vmatpush1.msra.mxu0 0.0
  %1757 = vmatprep.subr.mxu0 0.0
  %1758 = vmatpush1.msra.mxu0 0.0
  %1759 = vmatprep.subr.mxu0 0.0
  %1760 = vmatpush1.msra.mxu0 0.0
  %1761 = vmatprep.subr.mxu0 0.0
  %1762 = vmatpush1.msra.mxu0 0.0
  %1763 = vmatprep.subr.mxu0 0.0
  %1764 = vmatpush1.msra.mxu0 0.0
  %1765 = vmatprep.subr.mxu0 0.0
  %1766 = vmatpush1.msra.mxu0 0.0
  %1767 = vmatprep.subr.mxu0 0.0
  %1768 = vmatpush1.msra.mxu0 0.0
  %1769 = vmatprep.subr.mxu0 0.0
  %1770 = vmatpush1.msra.mxu0 0.0
  %1771 = vmatprep.subr.mxu0 0.0
  %1772 = vmatpush1.msra.mxu0 0.0
  %1773 = vmatprep.subr.mxu0 0.0
  %1774 = vmatpush1.msra.mxu0 0.0
  %1775 = vmatprep.subr.mxu0 0.0
  %1776 = vmatpush1.msra.mxu0 0.0
  %1777 = vmatprep.subr.mxu0 0.0
  %1778 = vmatpush1.msra.mxu0 0.0
  %1779 = vmatprep.subr.mxu0 0.0
  %1780 = vmatpush1.msra.mxu0 0.0
  %1781 = vmatprep.subr.mxu0 0.0
  %1782 = vmatpush1.msra.mxu0 0.0
  %1783 = vmatprep.subr.mxu0 0.0
  %1784 = vmatpush1.msra.mxu0 0.0
  %1785 = vmatprep.subr.mxu0 0.0
  %1786 = vmatpush1.msra.mxu0 0.0
  %1787 = vmatprep.subr.mxu0 0.0
  %1788 = vmatpush1.msra.mxu0 0.0
  %1789 = vmatprep.subr.mxu0 0.0
  %1790 = vmatpush1.msra.mxu0 0.0
  %1791 = vmatprep.subr.mxu0 0.0
  %1792 = vmatpush1.msra.mxu0 0.0
  %1793 = vmatprep.subr.mxu0 0.0
  %1794 = vmatpush1.msra.mxu0 0.0
  %1795 = vmatprep.subr.mxu0 0.0
  %1796 = vmatpush1.msra.mxu0 0.0
  %1797 = vmatprep.subr.mxu0 0.0
  %1798 = vmatpush1.msra.mxu0 0.0
  %1799 = vmatprep.subr.mxu0 0.0
  %1800 = vmatpush1.msra.mxu0 0.0
  %1801 = vmatprep.subr.mxu0 0.0
  %1802 = vmatpush1.msra.mxu0 0.0
  %1803 = vmatprep.mubr.f32.mxu0 0.0
  %v1804 = vand.u32 %v1296, 4294901760
  %1805 = vmatmul.mubr.f32.gmra.mrb[0].mxu0 %v1804
  %v1806 = vpop.f32.mrb[0].mxu0
  %v1807 = vadd.f32 %v1700, %v1806
  %v1808 = vpop.f32.mrb[0].mxu0
  %1809 = vmatprep.mubr.f32.mxu0 0.0
  %v1810 = vand.u32 %v1299, 4294901760
  %1811 = vmatmul.mubr.f32.gmra.mrb[0].mxu0 %v1810
  %v1812 = vpop.f32.mrb[0].mxu0
  %v1813 = vadd.f32 %v1708, %v1812
  %v1814 = vpop.f32.mrb[0].mxu0
  %1815 = vmatprep.mubr.f32.mxu0 0.0
  %v1816 = vand.u32 %v1302, 4294901760
  %1817 = vmatmul.mubr.f32.gmra.mrb[0].mxu0 %v1816
  %v1818 = vpop.f32.mrb[0].mxu0
  %v1819 = vadd.f32 %v1716, %v1818
  %v1820 = vpop.f32.mrb[0].mxu0
  %1821 = vmatprep.mubr.f32.mxu0 0.0
  %v1822 = vand.u32 %v1305, 4294901760
  %1823 = vmatmul.mubr.f32.gmra.mrb[0].mxu0 %v1822
  %v1824 = vpop.f32.mrb[0].mxu0
  %v1825 = vadd.f32 %v1724, %v1824
  %v1826 = vpop.f32.mrb[0].mxu0
  %1827 = vdwg.mxu0
  %1828 = vmatprep.subr.mxu0 0.0
  %v1829 = vand.u32 %v14, 4294901760
  %1830 = vmatpush1.msra.mxu0 %v1829
  %1831 = vmatprep.subr.mxu0 0.0
  %v1832 = vand.u32 %v15, 4294901760
  %1833 = vmatpush1.msra.mxu0 %v1832
  %1834 = vmatprep.subr.mxu0 0.0
  %v1835 = vand.u32 %v16, 4294901760
  %1836 = vmatpush1.msra.mxu0 %v1835
  %1837 = vmatprep.subr.mxu0 0.0
  %v1838 = vand.u32 %v17, 4294901760
  %1839 = vmatpush1.msra.mxu0 %v1838
  %1840 = vmatprep.subr.mxu0 0.0
  %1841 = vmatpush1.msra.mxu0 0.0
  %1842 = vmatprep.subr.mxu0 0.0
  %1843 = vmatpush1.msra.mxu0 0.0
  %1844 = vmatprep.subr.mxu0 0.0
  %1845 = vmatpush1.msra.mxu0 0.0
  %1846 = vmatprep.subr.mxu0 0.0
  %1847 = vmatpush1.msra.mxu0 0.0
  %1848 = vmatprep.subr.mxu0 0.0
  %1849 = vmatpush1.msra.mxu0 0.0
  %1850 = vmatprep.subr.mxu0 0.0
  %1851 = vmatpush1.msra.mxu0 0.0
  %1852 = vmatprep.subr.mxu0 0.0
  %1853 = vmatpush1.msra.mxu0 0.0
  %1854 = vmatprep.subr.mxu0 0.0
  %1855 = vmatpush1.msra.mxu0 0.0
  %1856 = vmatprep.subr.mxu0 0.0
  %1857 = vmatpush1.msra.mxu0 0.0
  %1858 = vmatprep.subr.mxu0 0.0
  %1859 = vmatpush1.msra.mxu0 0.0
  %1860 = vmatprep.subr.mxu0 0.0
  %1861 = vmatpush1.msra.mxu0 0.0
  %1862 = vmatprep.subr.mxu0 0.0
  %1863 = vmatpush1.msra.mxu0 0.0
  %1864 = vmatprep.subr.mxu0 0.0
  %1865 = vmatpush1.msra.mxu0 0.0
  %1866 = vmatprep.subr.mxu0 0.0
  %1867 = vmatpush1.msra.mxu0 0.0
  %1868 = vmatprep.subr.mxu0 0.0
  %1869 = vmatpush1.msra.mxu0 0.0
  %1870 = vmatprep.subr.mxu0 0.0
  %1871 = vmatpush1.msra.mxu0 0.0
  %1872 = vmatprep.subr.mxu0 0.0
  %1873 = vmatpush1.msra.mxu0 0.0
  %1874 = vmatprep.subr.mxu0 0.0
  %1875 = vmatpush1.msra.mxu0 0.0
  %1876 = vmatprep.subr.mxu0 0.0
  %1877 = vmatpush1.msra.mxu0 0.0
  %1878 = vmatprep.subr.mxu0 0.0
  %1879 = vmatpush1.msra.mxu0 0.0
  %1880 = vmatprep.subr.mxu0 0.0
  %1881 = vmatpush1.msra.mxu0 0.0
  %1882 = vmatprep.subr.mxu0 0.0
  %1883 = vmatpush1.msra.mxu0 0.0
  %1884 = vmatprep.subr.mxu0 0.0
  %1885 = vmatpush1.msra.mxu0 0.0
  %1886 = vmatprep.subr.mxu0 0.0
  %1887 = vmatpush1.msra.mxu0 0.0
  %1888 = vmatprep.subr.mxu0 0.0
  %1889 = vmatpush1.msra.mxu0 0.0
  %1890 = vmatprep.subr.mxu0 0.0
  %1891 = vmatpush1.msra.mxu0 0.0
  %1892 = vmatprep.subr.mxu0 0.0
  %1893 = vmatpush1.msra.mxu0 0.0
  %1894 = vmatprep.subr.mxu0 0.0
  %1895 = vmatpush1.msra.mxu0 0.0
  %1896 = vmatprep.mubr.f32.mxu0 0.0
  %v1897 = vand.u32 %v1296, 4294901760
  %1898 = vmatmul.mubr.f32.gmra.mrb[0].mxu0 %v1897
  %v1899 = vpop.f32.mrb[0].mxu0
  %v1900 = vadd.f32 %v1807, %v1899
  %v1901 = vpop.f32.mrb[0].mxu0
  %1902 = vmatprep.mubr.f32.mxu0 0.0
  %v1903 = vand.u32 %v1299, 4294901760
  %1904 = vmatmul.mubr.f32.gmra.mrb[0].mxu0 %v1903
  %v1905 = vpop.f32.mrb[0].mxu0
  %v1906 = vadd.f32 %v1813, %v1905
  %v1907 = vpop.f32.mrb[0].mxu0
  %1908 = vmatprep.mubr.f32.mxu0 0.0
  %v1909 = vand.u32 %v1302, 4294901760
  %1910 = vmatmul.mubr.f32.gmra.mrb[0].mxu0 %v1909
  %v1911 = vpop.f32.mrb[0].mxu0
  %v1912 = vadd.f32 %v1819, %v1911
  %v1913 = vpop.f32.mrb[0].mxu0
  %1914 = vmatprep.mubr.f32.mxu0 0.0
  %v1915 = vand.u32 %v1305, 4294901760
  %1916 = vmatmul.mubr.f32.gmra.mrb[0].mxu0 %v1915
  %v1917 = vpop.f32.mrb[0].mxu0
  %v1918 = vadd.f32 %v1825, %v1917
  %v1919 = vpop.f32.mrb[0].mxu0
  %1920 = vdwg.mxu0
  %v1921 = vsub.f32 %v1900, %v653
  %v1922 = vsub.f32 %v1906, %v654
  %v1923 = vsub.f32 %v1912, %v655
  %v1924 = vsub.f32 %v1918, %v656
  %1925 = vst.msk [vmem:[#allocation2 + $0x60] sm:$0xff] %vm22, %v1921
  %1926 = vst.msk [vmem:[#allocation2 + $0x68] sm:$0xff] %vm22, %v1922
  %1927 = vst.msk [vmem:[#allocation2 + $0x70] sm:$0xff] %vm22, %v1923
  %1928 = vst.msk [vmem:[#allocation2 + $0x78] sm:$0xff] %vm22, %v1924
  %v1930 = vsel %vm22, %v1921, 0
  %v1933 = vsel %vm22, %v1922, 0
  %v1936 = vsel %vm22, %v1923, 0
  %v1939 = vsel %vm22, %v1924, 0
  %1941 = vmatprep.subr.mxu0 0.0
  %v1942 = vand.u32 %v14, 4294901760
  %1943 = vmatpush1.msra.mxu0 %v1942
  %1944 = vmatprep.subr.mxu0 0.0
  %v1945 = vand.u32 %v15, 4294901760
  %1946 = vmatpush1.msra.mxu0 %v1945
  %1947 = vmatprep.subr.mxu0 0.0
  %v1948 = vand.u32 %v16, 4294901760
  %1949 = vmatpush1.msra.mxu0 %v1948
  %1950 = vmatprep.subr.mxu0 0.0
  %v1951 = vand.u32 %v17, 4294901760
  %1952 = vmatpush1.msra.mxu0 %v1951
  %1953 = vmatprep.subr.mxu0 0.0
  %1954 = vmatpush1.msra.mxu0 0.0
  %1955 = vmatprep.subr.mxu0 0.0
  %1956 = vmatpush1.msra.mxu0 0.0
  %1957 = vmatprep.subr.mxu0 0.0
  %1958 = vmatpush1.msra.mxu0 0.0
  %1959 = vmatprep.subr.mxu0 0.0
  %1960 = vmatpush1.msra.mxu0 0.0
  %1961 = vmatprep.subr.mxu0 0.0
  %1962 = vmatpush1.msra.mxu0 0.0
  %1963 = vmatprep.subr.mxu0 0.0
  %1964 = vmatpush1.msra.mxu0 0.0
  %1965 = vmatprep.subr.mxu0 0.0
  %1966 = vmatpush1.msra.mxu0 0.0
  %1967 = vmatprep.subr.mxu0 0.0
  %1968 = vmatpush1.msra.mxu0 0.0
  %1969 = vmatprep.subr.mxu0 0.0
  %1970 = vmatpush1.msra.mxu0 0.0
  %1971 = vmatprep.subr.mxu0 0.0
  %1972 = vmatpush1.msra.mxu0 0.0
  %1973 = vmatprep.subr.mxu0 0.0
  %1974 = vmatpush1.msra.mxu0 0.0
  %1975 = vmatprep.subr.mxu0 0.0
  %1976 = vmatpush1.msra.mxu0 0.0
  %1977 = vmatprep.subr.mxu0 0.0
  %1978 = vmatpush1.msra.mxu0 0.0
  %1979 = vmatprep.subr.mxu0 0.0
  %1980 = vmatpush1.msra.mxu0 0.0
  %1981 = vmatprep.subr.mxu0 0.0
  %1982 = vmatpush1.msra.mxu0 0.0
  %1983 = vmatprep.subr.mxu0 0.0
  %1984 = vmatpush1.msra.mxu0 0.0
  %1985 = vmatprep.subr.mxu0 0.0
  %1986 = vmatpush1.msra.mxu0 0.0
  %1987 = vmatprep.subr.mxu0 0.0
  %1988 = vmatpush1.msra.mxu0 0.0
  %1989 = vmatprep.subr.mxu0 0.0
  %1990 = vmatpush1.msra.mxu0 0.0
  %1991 = vmatprep.subr.mxu0 0.0
  %1992 = vmatpush1.msra.mxu0 0.0
  %1993 = vmatprep.subr.mxu0 0.0
  %1994 = vmatpush1.msra.mxu0 0.0
  %1995 = vmatprep.subr.mxu0 0.0
  %1996 = vmatpush1.msra.mxu0 0.0
  %1997 = vmatprep.subr.mxu0 0.0
  %1998 = vmatpush1.msra.mxu0 0.0
  %1999 = vmatprep.subr.mxu0 0.0
  %2000 = vmatpush1.msra.mxu0 0.0
  %2001 = vmatprep.subr.mxu0 0.0
  %2002 = vmatpush1.msra.mxu0 0.0
  %2003 = vmatprep.subr.mxu0 0.0
  %2004 = vmatpush1.msra.mxu0 0.0
  %2005 = vmatprep.subr.mxu0 0.0
  %2006 = vmatpush1.msra.mxu0 0.0
  %2007 = vmatprep.subr.mxu0 0.0
  %2008 = vmatpush1.msra.mxu0 0.0
  %2009 = vmatprep.mubr.f32.mxu0 0.0
  %v2010 = vand.u32 %v1930, 4294901760
  %v2011 = vsub.f32 %v1930, %v2010
  %v2012 = vand.u32 %v2011, 4294901760
  %v2013 = vsub.f32 %v2011, %v2012
  %v2014 = vand.u32 %v2013, 4294901760
  %2015 = vmatmul.mubr.f32.gmra.mrb[0].mxu0 %v2014
  %v2016 = vpop.f32.mrb[0].mxu0
  %v2017 = vadd.f32 0.0, %v2016
  %v2018 = vpop.f32.mrb[0].mxu0
  %2019 = vmatprep.mubr.f32.mxu0 0.0
  %v2020 = vand.u32 %v1933, 4294901760
  %v2021 = vsub.f32 %v1933, %v2020
  %v2022 = vand.u32 %v2021, 4294901760
  %v2023 = vsub.f32 %v2021, %v2022
  %v2024 = vand.u32 %v2023, 4294901760
  %2025 = vmatmul.mubr.f32.gmra.mrb[0].mxu0 %v2024
  %v2026 = vpop.f32.mrb[0].mxu0
  %v2027 = vadd.f32 0.0, %v2026
  %v2028 = vpop.f32.mrb[0].mxu0
  %2029 = vmatprep.mubr.f32.mxu0 0.0
  %v2030 = vand.u32 %v1936, 4294901760
  %v2031 = vsub.f32 %v1936, %v2030
  %v2032 = vand.u32 %v2031, 4294901760
  %v2033 = vsub.f32 %v2031, %v2032
  %v2034 = vand.u32 %v2033, 4294901760
  %2035 = vmatmul.mubr.f32.gmra.mrb[0].mxu0 %v2034
  %v2036 = vpop.f32.mrb[0].mxu0
  %v2037 = vadd.f32 0.0, %v2036
  %v2038 = vpop.f32.mrb[0].mxu0
  %2039 = vmatprep.mubr.f32.mxu0 0.0
  %v2040 = vand.u32 %v1939, 4294901760
  %v2041 = vsub.f32 %v1939, %v2040
  %v2042 = vand.u32 %v2041, 4294901760
  %v2043 = vsub.f32 %v2041, %v2042
  %v2044 = vand.u32 %v2043, 4294901760
  %2045 = vmatmul.mubr.f32.gmra.mrb[0].mxu0 %v2044
  %v2046 = vpop.f32.mrb[0].mxu0
  %v2047 = vadd.f32 0.0, %v2046
  %v2048 = vpop.f32.mrb[0].mxu0
  %2049 = vdwg.mxu0
  %2050 = vmatprep.subr.mxu0 0.0
  %v2051 = vand.u32 %v14, 4294901760
  %v2052 = vsub.f32 %v14, %v2051
  %v2053 = vand.u32 %v2052, 4294901760
  %v2054 = vsub.f32 %v2052, %v2053
  %v2055 = vand.u32 %v2054, 4294901760
  %2056 = vmatpush1.msra.mxu0 %v2055
  %2057 = vmatprep.subr.mxu0 0.0
  %v2058 = vand.u32 %v15, 4294901760
  %v2059 = vsub.f32 %v15, %v2058
  %v2060 = vand.u32 %v2059, 4294901760
  %v2061 = vsub.f32 %v2059, %v2060
  %v2062 = vand.u32 %v2061, 4294901760
  %2063 = vmatpush1.msra.mxu0 %v2062
  %2064 = vmatprep.subr.mxu0 0.0
  %v2065 = vand.u32 %v16, 4294901760
  %v2066 = vsub.f32 %v16, %v2065
  %v2067 = vand.u32 %v2066, 4294901760
  %v2068 = vsub.f32 %v2066, %v2067
  %v2069 = vand.u32 %v2068, 4294901760
  %2070 = vmatpush1.msra.mxu0 %v2069
  %2071 = vmatprep.subr.mxu0 0.0
  %v2072 = vand.u32 %v17, 4294901760
  %v2073 = vsub.f32 %v17, %v2072
  %v2074 = vand.u32 %v2073, 4294901760
  %v2075 = vsub.f32 %v2073, %v2074
  %v2076 = vand.u32 %v2075, 4294901760
  %2077 = vmatpush1.msra.mxu0 %v2076
  %2078 = vmatprep.subr.mxu0 0.0
  %2079 = vmatpush1.msra.mxu0 0.0
  %2080 = vmatprep.subr.mxu0 0.0
  %2081 = vmatpush1.msra.mxu0 0.0
  %2082 = vmatprep.subr.mxu0 0.0
  %2083 = vmatpush1.msra.mxu0 0.0
  %2084 = vmatprep.subr.mxu0 0.0
  %2085 = vmatpush1.msra.mxu0 0.0
  %2086 = vmatprep.subr.mxu0 0.0
  %2087 = vmatpush1.msra.mxu0 0.0
  %2088 = vmatprep.subr.mxu0 0.0
  %2089 = vmatpush1.msra.mxu0 0.0
  %2090 = vmatprep.subr.mxu0 0.0
  %2091 = vmatpush1.msra.mxu0 0.0
  %2092 = vmatprep.subr.mxu0 0.0
  %2093 = vmatpush1.msra.mxu0 0.0
  %2094 = vmatprep.subr.mxu0 0.0
  %2095 = vmatpush1.msra.mxu0 0.0
  %2096 = vmatprep.subr.mxu0 0.0
  %2097 = vmatpush1.msra.mxu0 0.0
  %2098 = vmatprep.subr.mxu0 0.0
  %2099 = vmatpush1.msra.mxu0 0.0
  %2100 = vmatprep.subr.mxu0 0.0
  %2101 = vmatpush1.msra.mxu0 0.0
  %2102 = vmatprep.subr.mxu0 0.0
  %2103 = vmatpush1.msra.mxu0 0.0
  %2104 = vmatprep.subr.mxu0 0.0
  %2105 = vmatpush1.msra.mxu0 0.0
  %2106 = vmatprep.subr.mxu0 0.0
  %2107 = vmatpush1.msra.mxu0 0.0
  %2108 = vmatprep.subr.mxu0 0.0
  %2109 = vmatpush1.msra.mxu0 0.0
  %2110 = vmatprep.subr.mxu0 0.0
  %2111 = vmatpush1.msra.mxu0 0.0
  %2112 = vmatprep.subr.mxu0 0.0
  %2113 = vmatpush1.msra.mxu0 0.0
  %2114 = vmatprep.subr.mxu0 0.0
  %2115 = vmatpush1.msra.mxu0 0.0
  %2116 = vmatprep.subr.mxu0 0.0
  %2117 = vmatpush1.msra.mxu0 0.0
  %2118 = vmatprep.subr.mxu0 0.0
  %2119 = vmatpush1.msra.mxu0 0.0
  %2120 = vmatprep.subr.mxu0 0.0
  %2121 = vmatpush1.msra.mxu0 0.0
  %2122 = vmatprep.subr.mxu0 0.0
  %2123 = vmatpush1.msra.mxu0 0.0
  %2124 = vmatprep.subr.mxu0 0.0
  %2125 = vmatpush1.msra.mxu0 0.0
  %2126 = vmatprep.subr.mxu0 0.0
  %2127 = vmatpush1.msra.mxu0 0.0
  %2128 = vmatprep.subr.mxu0 0.0
  %2129 = vmatpush1.msra.mxu0 0.0
  %2130 = vmatprep.subr.mxu0 0.0
  %2131 = vmatpush1.msra.mxu0 0.0
  %2132 = vmatprep.subr.mxu0 0.0
  %2133 = vmatpush1.msra.mxu0 0.0
  %2134 = vmatprep.mubr.f32.mxu0 0.0
  %v2135 = vand.u32 %v1930, 4294901760
  %2136 = vmatmul.mubr.f32.gmra.mrb[0].mxu0 %v2135
  %v2137 = vpop.f32.mrb[0].mxu0
  %v2138 = vadd.f32 %v2017, %v2137
  %v2139 = vpop.f32.mrb[0].mxu0
  %2140 = vmatprep.mubr.f32.mxu0 0.0
  %v2141 = vand.u32 %v1933, 4294901760
  %2142 = vmatmul.mubr.f32.gmra.mrb[0].mxu0 %v2141
  %v2143 = vpop.f32.mrb[0].mxu0
  %v2144 = vadd.f32 %v2027, %v2143
  %v2145 = vpop.f32.mrb[0].mxu0
  %2146 = vmatprep.mubr.f32.mxu0 0.0
  %v2147 = vand.u32 %v1936, 4294901760
  %2148 = vmatmul.mubr.f32.gmra.mrb[0].mxu0 %v2147
  %v2149 = vpop.f32.mrb[0].mxu0
  %v2150 = vadd.f32 %v2037, %v2149
  %v2151 = vpop.f32.mrb[0].mxu0
  %2152 = vmatprep.mubr.f32.mxu0 0.0
  %v2153 = vand.u32 %v1939, 4294901760
  %2154 = vmatmul.mubr.f32.gmra.mrb[0].mxu0 %v2153
  %v2155 = vpop.f32.mrb[0].mxu0
  %v2156 = vadd.f32 %v2047, %v2155
  %v2157 = vpop.f32.mrb[0].mxu0
  %2158 = vdwg.mxu0
  %2159 = vmatprep.subr.mxu0 0.0
  %v2160 = vand.u32 %v14, 4294901760
  %v2161 = vsub.f32 %v14, %v2160
  %2162 = vmatpush1.msra.mxu0 %v2161
  %2163 = vmatprep.subr.mxu0 0.0
  %v2164 = vand.u32 %v15, 4294901760
  %v2165 = vsub.f32 %v15, %v2164
  %2166 = vmatpush1.msra.mxu0 %v2165
  %2167 = vmatprep.subr.mxu0 0.0
  %v2168 = vand.u32 %v16, 4294901760
  %v2169 = vsub.f32 %v16, %v2168
  %2170 = vmatpush1.msra.mxu0 %v2169
  %2171 = vmatprep.subr.mxu0 0.0
  %v2172 = vand.u32 %v17, 4294901760
  %v2173 = vsub.f32 %v17, %v2172
  %2174 = vmatpush1.msra.mxu0 %v2173
  %2175 = vmatprep.subr.mxu0 0.0
  %2176 = vmatpush1.msra.mxu0 0.0
  %2177 = vmatprep.subr.mxu0 0.0
  %2178 = vmatpush1.msra.mxu0 0.0
  %2179 = vmatprep.subr.mxu0 0.0
  %2180 = vmatpush1.msra.mxu0 0.0
  %2181 = vmatprep.subr.mxu0 0.0
  %2182 = vmatpush1.msra.mxu0 0.0
  %2183 = vmatprep.subr.mxu0 0.0
  %2184 = vmatpush1.msra.mxu0 0.0
  %2185 = vmatprep.subr.mxu0 0.0
  %2186 = vmatpush1.msra.mxu0 0.0
  %2187 = vmatprep.subr.mxu0 0.0
  %2188 = vmatpush1.msra.mxu0 0.0
  %2189 = vmatprep.subr.mxu0 0.0
  %2190 = vmatpush1.msra.mxu0 0.0
  %2191 = vmatprep.subr.mxu0 0.0
  %2192 = vmatpush1.msra.mxu0 0.0
  %2193 = vmatprep.subr.mxu0 0.0
  %2194 = vmatpush1.msra.mxu0 0.0
  %2195 = vmatprep.subr.mxu0 0.0
  %2196 = vmatpush1.msra.mxu0 0.0
  %2197 = vmatprep.subr.mxu0 0.0
  %2198 = vmatpush1.msra.mxu0 0.0
  %2199 = vmatprep.subr.mxu0 0.0
  %2200 = vmatpush1.msra.mxu0 0.0
  %2201 = vmatprep.subr.mxu0 0.0
  %2202 = vmatpush1.msra.mxu0 0.0
  %2203 = vmatprep.subr.mxu0 0.0
  %2204 = vmatpush1.msra.mxu0 0.0
  %2205 = vmatprep.subr.mxu0 0.0
  %2206 = vmatpush1.msra.mxu0 0.0
  %2207 = vmatprep.subr.mxu0 0.0
  %2208 = vmatpush1.msra.mxu0 0.0
  %2209 = vmatprep.subr.mxu0 0.0
  %2210 = vmatpush1.msra.mxu0 0.0
  %2211 = vmatprep.subr.mxu0 0.0
  %2212 = vmatpush1.msra.mxu0 0.0
  %2213 = vmatprep.subr.mxu0 0.0
  %2214 = vmatpush1.msra.mxu0 0.0
  %2215 = vmatprep.subr.mxu0 0.0
  %2216 = vmatpush1.msra.mxu0 0.0
  %2217 = vmatprep.subr.mxu0 0.0
  %2218 = vmatpush1.msra.mxu0 0.0
  %2219 = vmatprep.subr.mxu0 0.0
  %2220 = vmatpush1.msra.mxu0 0.0
  %2221 = vmatprep.subr.mxu0 0.0
  %2222 = vmatpush1.msra.mxu0 0.0
  %2223 = vmatprep.subr.mxu0 0.0
  %2224 = vmatpush1.msra.mxu0 0.0
  %2225 = vmatprep.subr.mxu0 0.0
  %2226 = vmatpush1.msra.mxu0 0.0
  %2227 = vmatprep.subr.mxu0 0.0
  %2228 = vmatpush1.msra.mxu0 0.0
  %2229 = vmatprep.subr.mxu0 0.0
  %2230 = vmatpush1.msra.mxu0 0.0
  %2231 = vmatprep.mubr.f32.mxu0 0.0
  %v2232 = vand.u32 %v1930, 4294901760
  %v2233 = vsub.f32 %v1930, %v2232
  %2234 = vmatmul.mubr.f32.gmra.mrb[0].mxu0 %v2233
  %v2235 = vpop.f32.mrb[0].mxu0
  %v2236 = vadd.f32 %v2138, %v2235
  %v2237 = vpop.f32.mrb[0].mxu0
  %2238 = vmatprep.mubr.f32.mxu0 0.0
  %v2239 = vand.u32 %v1933, 4294901760
  %v2240 = vsub.f32 %v1933, %v2239
  %2241 = vmatmul.mubr.f32.gmra.mrb[0].mxu0 %v2240
  %v2242 = vpop.f32.mrb[0].mxu0
  %v2243 = vadd.f32 %v2144, %v2242
  %v2244 = vpop.f32.mrb[0].mxu0
  %2245 = vmatprep.mubr.f32.mxu0 0.0
  %v2246 = vand.u32 %v1936, 4294901760
  %v2247 = vsub.f32 %v1936, %v2246
  %2248 = vmatmul.mubr.f32.gmra.mrb[0].mxu0 %v2247
  %v2249 = vpop.f32.mrb[0].mxu0
  %v2250 = vadd.f32 %v2150, %v2249
  %v2251 = vpop.f32.mrb[0].mxu0
  %2252 = vmatprep.mubr.f32.mxu0 0.0
  %v2253 = vand.u32 %v1939, 4294901760
  %v2254 = vsub.f32 %v1939, %v2253
  %2255 = vmatmul.mubr.f32.gmra.mrb[0].mxu0 %v2254
  %v2256 = vpop.f32.mrb[0].mxu0
  %v2257 = vadd.f32 %v2156, %v2256
  %v2258 = vpop.f32.mrb[0].mxu0
  %2259 = vdwg.mxu0
  %2260 = vmatprep.subr.mxu0 0.0
  %v2261 = vand.u32 %v14, 4294901760
  %2262 = vmatpush1.msra.mxu0 %v2261
  %2263 = vmatprep.subr.mxu0 0.0
  %v2264 = vand.u32 %v15, 4294901760
  %2265 = vmatpush1.msra.mxu0 %v2264
  %2266 = vmatprep.subr.mxu0 0.0
  %v2267 = vand.u32 %v16, 4294901760
  %2268 = vmatpush1.msra.mxu0 %v2267
  %2269 = vmatprep.subr.mxu0 0.0
  %v2270 = vand.u32 %v17, 4294901760
  %2271 = vmatpush1.msra.mxu0 %v2270
  %2272 = vmatprep.subr.mxu0 0.0
  %2273 = vmatpush1.msra.mxu0 0.0
  %2274 = vmatprep.subr.mxu0 0.0
  %2275 = vmatpush1.msra.mxu0 0.0
  %2276 = vmatprep.subr.mxu0 0.0
  %2277 = vmatpush1.msra.mxu0 0.0
  %2278 = vmatprep.subr.mxu0 0.0
  %2279 = vmatpush1.msra.mxu0 0.0
  %2280 = vmatprep.subr.mxu0 0.0
  %2281 = vmatpush1.msra.mxu0 0.0
  %2282 = vmatprep.subr.mxu0 0.0
  %2283 = vmatpush1.msra.mxu0 0.0
  %2284 = vmatprep.subr.mxu0 0.0
  %2285 = vmatpush1.msra.mxu0 0.0
  %2286 = vmatprep.subr.mxu0 0.0
  %2287 = vmatpush1.msra.mxu0 0.0
  %2288 = vmatprep.subr.mxu0 0.0
  %2289 = vmatpush1.msra.mxu0 0.0
  %2290 = vmatprep.subr.mxu0 0.0
  %2291 = vmatpush1.msra.mxu0 0.0
  %2292 = vmatprep.subr.mxu0 0.0
  %2293 = vmatpush1.msra.mxu0 0.0
  %2294 = vmatprep.subr.mxu0 0.0
  %2295 = vmatpush1.msra.mxu0 0.0
  %2296 = vmatprep.subr.mxu0 0.0
  %2297 = vmatpush1.msra.mxu0 0.0
  %2298 = vmatprep.subr.mxu0 0.0
  %2299 = vmatpush1.msra.mxu0 0.0
  %2300 = vmatprep.subr.mxu0 0.0
  %2301 = vmatpush1.msra.mxu0 0.0
  %2302 = vmatprep.subr.mxu0 0.0
  %2303 = vmatpush1.msra.mxu0 0.0
  %2304 = vmatprep.subr.mxu0 0.0
  %2305 = vmatpush1.msra.mxu0 0.0
  %2306 = vmatprep.subr.mxu0 0.0
  %2307 = vmatpush1.msra.mxu0 0.0
  %2308 = vmatprep.subr.mxu0 0.0
  %2309 = vmatpush1.msra.mxu0 0.0
  %2310 = vmatprep.subr.mxu0 0.0
  %2311 = vmatpush1.msra.mxu0 0.0
  %2312 = vmatprep.subr.mxu0 0.0
  %2313 = vmatpush1.msra.mxu0 0.0
  %2314 = vmatprep.subr.mxu0 0.0
  %2315 = vmatpush1.msra.mxu0 0.0
  %2316 = vmatprep.subr.mxu0 0.0
  %2317 = vmatpush1.msra.mxu0 0.0
  %2318 = vmatprep.subr.mxu0 0.0
  %2319 = vmatpush1.msra.mxu0 0.0
  %2320 = vmatprep.subr.mxu0 0.0
  %2321 = vmatpush1.msra.mxu0 0.0
  %2322 = vmatprep.subr.mxu0 0.0
  %2323 = vmatpush1.msra.mxu0 0.0
  %2324 = vmatprep.subr.mxu0 0.0
  %2325 = vmatpush1.msra.mxu0 0.0
  %2326 = vmatprep.subr.mxu0 0.0
  %2327 = vmatpush1.msra.mxu0 0.0
  %2328 = vmatprep.mubr.f32.mxu0 0.0
  %v2329 = vand.u32 %v1930, 4294901760
  %v2330 = vsub.f32 %v1930, %v2329
  %v2331 = vand.u32 %v2330, 4294901760
  %2332 = vmatmul.mubr.f32.gmra.mrb[0].mxu0 %v2331
  %v2333 = vpop.f32.mrb[0].mxu0
  %v2334 = vadd.f32 %v2236, %v2333
  %v2335 = vpop.f32.mrb[0].mxu0
  %2336 = vmatprep.mubr.f32.mxu0 0.0
  %v2337 = vand.u32 %v1933, 4294901760
  %v2338 = vsub.f32 %v1933, %v2337
  %v2339 = vand.u32 %v2338, 4294901760
  %2340 = vmatmul.mubr.f32.gmra.mrb[0].mxu0 %v2339
  %v2341 = vpop.f32.mrb[0].mxu0
  %v2342 = vadd.f32 %v2243, %v2341
  %v2343 = vpop.f32.mrb[0].mxu0
  %2344 = vmatprep.mubr.f32.mxu0 0.0
  %v2345 = vand.u32 %v1936, 4294901760
  %v2346 = vsub.f32 %v1936, %v2345
  %v2347 = vand.u32 %v2346, 4294901760
  %2348 = vmatmul.mubr.f32.gmra.mrb[0].mxu0 %v2347
  %v2349 = vpop.f32.mrb[0].mxu0
  %v2350 = vadd.f32 %v2250, %v2349
  %v2351 = vpop.f32.mrb[0].mxu0
  %2352 = vmatprep.mubr.f32.mxu0 0.0
  %v2353 = vand.u32 %v1939, 4294901760
  %v2354 = vsub.f32 %v1939, %v2353
  %v2355 = vand.u32 %v2354, 4294901760
  %2356 = vmatmul.mubr.f32.gmra.mrb[0].mxu0 %v2355
  %v2357 = vpop.f32.mrb[0].mxu0
  %v2358 = vadd.f32 %v2257, %v2357
  %v2359 = vpop.f32.mrb[0].mxu0
  %2360 = vdwg.mxu0
  %2361 = vmatprep.subr.mxu0 0.0
  %v2362 = vand.u32 %v14, 4294901760
  %v2363 = vsub.f32 %v14, %v2362
  %v2364 = vand.u32 %v2363, 4294901760
  %2365 = vmatpush1.msra.mxu0 %v2364
  %2366 = vmatprep.subr.mxu0 0.0
  %v2367 = vand.u32 %v15, 4294901760
  %v2368 = vsub.f32 %v15, %v2367
  %v2369 = vand.u32 %v2368, 4294901760
  %2370 = vmatpush1.msra.mxu0 %v2369
  %2371 = vmatprep.subr.mxu0 0.0
  %v2372 = vand.u32 %v16, 4294901760
  %v2373 = vsub.f32 %v16, %v2372
  %v2374 = vand.u32 %v2373, 4294901760
  %2375 = vmatpush1.msra.mxu0 %v2374
  %2376 = vmatprep.subr.mxu0 0.0
  %v2377 = vand.u32 %v17, 4294901760
  %v2378 = vsub.f32 %v17, %v2377
  %v2379 = vand.u32 %v2378, 4294901760
  %2380 = vmatpush1.msra.mxu0 %v2379
  %2381 = vmatprep.subr.mxu0 0.0
  %2382 = vmatpush1.msra.mxu0 0.0
  %2383 = vmatprep.subr.mxu0 0.0
  %2384 = vmatpush1.msra.mxu0 0.0
  %2385 = vmatprep.subr.mxu0 0.0
  %2386 = vmatpush1.msra.mxu0 0.0
  %2387 = vmatprep.subr.mxu0 0.0
  %2388 = vmatpush1.msra.mxu0 0.0
  %2389 = vmatprep.subr.mxu0 0.0
  %2390 = vmatpush1.msra.mxu0 0.0
  %2391 = vmatprep.subr.mxu0 0.0
  %2392 = vmatpush1.msra.mxu0 0.0
  %2393 = vmatprep.subr.mxu0 0.0
  %2394 = vmatpush1.msra.mxu0 0.0
  %2395 = vmatprep.subr.mxu0 0.0
  %2396 = vmatpush1.msra.mxu0 0.0
  %2397 = vmatprep.subr.mxu0 0.0
  %2398 = vmatpush1.msra.mxu0 0.0
  %2399 = vmatprep.subr.mxu0 0.0
  %2400 = vmatpush1.msra.mxu0 0.0
  %2401 = vmatprep.subr.mxu0 0.0
  %2402 = vmatpush1.msra.mxu0 0.0
  %2403 = vmatprep.subr.mxu0 0.0
  %2404 = vmatpush1.msra.mxu0 0.0
  %2405 = vmatprep.subr.mxu0 0.0
  %2406 = vmatpush1.msra.mxu0 0.0
  %2407 = vmatprep.subr.mxu0 0.0
  %2408 = vmatpush1.msra.mxu0 0.0
  %2409 = vmatprep.subr.mxu0 0.0
  %2410 = vmatpush1.msra.mxu0 0.0
  %2411 = vmatprep.subr.mxu0 0.0
  %2412 = vmatpush1.msra.mxu0 0.0
  %2413 = vmatprep.subr.mxu0 0.0
  %2414 = vmatpush1.msra.mxu0 0.0
  %2415 = vmatprep.subr.mxu0 0.0
  %2416 = vmatpush1.msra.mxu0 0.0
  %2417 = vmatprep.subr.mxu0 0.0
  %2418 = vmatpush1.msra.mxu0 0.0
  %2419 = vmatprep.subr.mxu0 0.0
  %2420 = vmatpush1.msra.mxu0 0.0
  %2421 = vmatprep.subr.mxu0 0.0
  %2422 = vmatpush1.msra.mxu0 0.0
  %2423 = vmatprep.subr.mxu0 0.0
  %2424 = vmatpush1.msra.mxu0 0.0
  %2425 = vmatprep.subr.mxu0 0.0
  %2426 = vmatpush1.msra.mxu0 0.0
  %2427 = vmatprep.subr.mxu0 0.0
  %2428 = vmatpush1.msra.mxu0 0.0
  %2429 = vmatprep.subr.mxu0 0.0
  %2430 = vmatpush1.msra.mxu0 0.0
  %2431 = vmatprep.subr.mxu0 0.0
  %2432 = vmatpush1.msra.mxu0 0.0
  %2433 = vmatprep.subr.mxu0 0.0
  %2434 = vmatpush1.msra.mxu0 0.0
  %2435 = vmatprep.subr.mxu0 0.0
  %2436 = vmatpush1.msra.mxu0 0.0
  %2437 = vmatprep.mubr.f32.mxu0 0.0
  %v2438 = vand.u32 %v1930, 4294901760
  %2439 = vmatmul.mubr.f32.gmra.mrb[0].mxu0 %v2438
  %v2440 = vpop.f32.mrb[0].mxu0
  %v2441 = vadd.f32 %v2334, %v2440
  %v2442 = vpop.f32.mrb[0].mxu0
  %2443 = vmatprep.mubr.f32.mxu0 0.0
  %v2444 = vand.u32 %v1933, 4294901760
  %2445 = vmatmul.mubr.f32.gmra.mrb[0].mxu0 %v2444
  %v2446 = vpop.f32.mrb[0].mxu0
  %v2447 = vadd.f32 %v2342, %v2446
  %v2448 = vpop.f32.mrb[0].mxu0
  %2449 = vmatprep.mubr.f32.mxu0 0.0
  %v2450 = vand.u32 %v1936, 4294901760
  %2451 = vmatmul.mubr.f32.gmra.mrb[0].mxu0 %v2450
  %v2452 = vpop.f32.mrb[0].mxu0
  %v2453 = vadd.f32 %v2350, %v2452
  %v2454 = vpop.f32.mrb[0].mxu0
  %2455 = vmatprep.mubr.f32.mxu0 0.0
  %v2456 = vand.u32 %v1939, 4294901760
  %2457 = vmatmul.mubr.f32.gmra.mrb[0].mxu0 %v2456
  %v2458 = vpop.f32.mrb[0].mxu0
  %v2459 = vadd.f32 %v2358, %v2458
  %v2460 = vpop.f32.mrb[0].mxu0
  %2461 = vdwg.mxu0
  %2462 = vmatprep.subr.mxu0 0.0
  %v2463 = vand.u32 %v14, 4294901760
  %2464 = vmatpush1.msra.mxu0 %v2463
  %2465 = vmatprep.subr.mxu0 0.0
  %v2466 = vand.u32 %v15, 4294901760
  %2467 = vmatpush1.msra.mxu0 %v2466
  %2468 = vmatprep.subr.mxu0 0.0
  %v2469 = vand.u32 %v16, 4294901760
  %2470 = vmatpush1.msra.mxu0 %v2469
  %2471 = vmatprep.subr.mxu0 0.0
  %v2472 = vand.u32 %v17, 4294901760
  %2473 = vmatpush1.msra.mxu0 %v2472
  %2474 = vmatprep.subr.mxu0 0.0
  %2475 = vmatpush1.msra.mxu0 0.0
  %2476 = vmatprep.subr.mxu0 0.0
  %2477 = vmatpush1.msra.mxu0 0.0
  %2478 = vmatprep.subr.mxu0 0.0
  %2479 = vmatpush1.msra.mxu0 0.0
  %2480 = vmatprep.subr.mxu0 0.0
  %2481 = vmatpush1.msra.mxu0 0.0
  %2482 = vmatprep.subr.mxu0 0.0
  %2483 = vmatpush1.msra.mxu0 0.0
  %2484 = vmatprep.subr.mxu0 0.0
  %2485 = vmatpush1.msra.mxu0 0.0
  %2486 = vmatprep.subr.mxu0 0.0
  %2487 = vmatpush1.msra.mxu0 0.0
  %2488 = vmatprep.subr.mxu0 0.0
  %2489 = vmatpush1.msra.mxu0 0.0
  %2490 = vmatprep.subr.mxu0 0.0
  %2491 = vmatpush1.msra.mxu0 0.0
  %2492 = vmatprep.subr.mxu0 0.0
  %2493 = vmatpush1.msra.mxu0 0.0
  %2494 = vmatprep.subr.mxu0 0.0
  %2495 = vmatpush1.msra.mxu0 0.0
  %2496 = vmatprep.subr.mxu0 0.0
  %2497 = vmatpush1.msra.mxu0 0.0
  %2498 = vmatprep.subr.mxu0 0.0
  %2499 = vmatpush1.msra.mxu0 0.0
  %2500 = vmatprep.subr.mxu0 0.0
  %2501 = vmatpush1.msra.mxu0 0.0
  %2502 = vmatprep.subr.mxu0 0.0
  %2503 = vmatpush1.msra.mxu0 0.0
  %2504 = vmatprep.subr.mxu0 0.0
  %2505 = vmatpush1.msra.mxu0 0.0
  %2506 = vmatprep.subr.mxu0 0.0
  %2507 = vmatpush1.msra.mxu0 0.0
  %2508 = vmatprep.subr.mxu0 0.0
  %2509 = vmatpush1.msra.mxu0 0.0
  %2510 = vmatprep.subr.mxu0 0.0
  %2511 = vmatpush1.msra.mxu0 0.0
  %2512 = vmatprep.subr.mxu0 0.0
  %2513 = vmatpush1.msra.mxu0 0.0
  %2514 = vmatprep.subr.mxu0 0.0
  %2515 = vmatpush1.msra.mxu0 0.0
  %2516 = vmatprep.subr.mxu0 0.0
  %2517 = vmatpush1.msra.mxu0 0.0
  %2518 = vmatprep.subr.mxu0 0.0
  %2519 = vmatpush1.msra.mxu0 0.0
  %2520 = vmatprep.subr.mxu0 0.0
  %2521 = vmatpush1.msra.mxu0 0.0
  %2522 = vmatprep.subr.mxu0 0.0
  %2523 = vmatpush1.msra.mxu0 0.0
  %2524 = vmatprep.subr.mxu0 0.0
  %2525 = vmatpush1.msra.mxu0 0.0
  %2526 = vmatprep.subr.mxu0 0.0
  %2527 = vmatpush1.msra.mxu0 0.0
  %2528 = vmatprep.subr.mxu0 0.0
  %2529 = vmatpush1.msra.mxu0 0.0
  %2530 = vmatprep.mubr.f32.mxu0 0.0
  %v2531 = vand.u32 %v1930, 4294901760
  %2532 = vmatmul.mubr.f32.gmra.mrb[0].mxu0 %v2531
  %v2533 = vpop.f32.mrb[0].mxu0
  %v2534 = vadd.f32 %v2441, %v2533
  %v2535 = vpop.f32.mrb[0].mxu0
  %2536 = vmatprep.mubr.f32.mxu0 0.0
  %v2537 = vand.u32 %v1933, 4294901760
  %2538 = vmatmul.mubr.f32.gmra.mrb[0].mxu0 %v2537
  %v2539 = vpop.f32.mrb[0].mxu0
  %v2540 = vadd.f32 %v2447, %v2539
  %v2541 = vpop.f32.mrb[0].mxu0
  %2542 = vmatprep.mubr.f32.mxu0 0.0
  %v2543 = vand.u32 %v1936, 4294901760
  %2544 = vmatmul.mubr.f32.gmra.mrb[0].mxu0 %v2543
  %v2545 = vpop.f32.mrb[0].mxu0
  %v2546 = vadd.f32 %v2453, %v2545
  %v2547 = vpop.f32.mrb[0].mxu0
  %2548 = vmatprep.mubr.f32.mxu0 0.0
  %v2549 = vand.u32 %v1939, 4294901760
  %2550 = vmatmul.mubr.f32.gmra.mrb[0].mxu0 %v2549
  %v2551 = vpop.f32.mrb[0].mxu0
  %v2552 = vadd.f32 %v2459, %v2551
  %v2553 = vpop.f32.mrb[0].mxu0
  %2554 = vdwg.mxu0
  %v2555 = vsub.f32 %v2534, %v1287
  %v2556 = vsub.f32 %v2540, %v1288
  %v2557 = vsub.f32 %v2546, %v1289
  %v2558 = vsub.f32 %v2552, %v1290
  %2559 = vst.msk [vmem:[#allocation2 + $0x80] sm:$0xff] %vm22, %v2555
  %2560 = vst.msk [vmem:[#allocation2 + $0x88] sm:$0xff] %vm22, %v2556
  %2561 = vst.msk [vmem:[#allocation2 + $0x90] sm:$0xff] %vm22, %v2557
  %2562 = vst.msk [vmem:[#allocation2 + $0x98] sm:$0xff] %vm22, %v2558
  %v2563 = vld [vmem:[#allocation2] ss:$8 sm:$0xf]
  %v2564 = vld [vmem:[#allocation2] ss:$8 sm:$0xf0]
  %v2565 = vor.u32 %v2563, %v2564
  %s2566 = scalar_lea.vmem [#allocation2], 64
  %v2567 = vld [vmem:[%s2566] ss:$8 sm:$0xf]
  %v2568 = vld [vmem:[%s2566] ss:$8 sm:$0xf0]
  %v2569 = vor.u32 %v2567, %v2568
  %s2570 = scalar_lea.vmem [#allocation2], 128
  %v2571 = vld [vmem:[%s2570] ss:$8 sm:$0xf]
  %2572 = vst.msk [vmem:[#allocation3] sm:$0xff] %vm22, %v2565
  %2573 = vst.msk [vmem:[#allocation3 + $0x10] sm:$0xff] %vm22, %v2569
  %vm2574 = vcmask 257024
  %2575 = vst.msk [vmem:[#allocation3 + $0x20] sm:$0xf] %vm2574, %v2571
  %s2576 = scalar_lea.vmem [#allocation2], 1
  %v2577 = vld [vmem:[%s2576] ss:$8 sm:$0xf]
  %v2578 = vld [vmem:[%s2576] ss:$8 sm:$0xf0]
  %v2579 = vor.u32 %v2577, %v2578
  %s2580 = scalar_lea.vmem [#allocation2], 65
  %v2581 = vld [vmem:[%s2580] ss:$8 sm:$0xf]
  %v2582 = vld [vmem:[%s2580] ss:$8 sm:$0xf0]
  %v2583 = vor.u32 %v2581, %v2582
  %s2584 = scalar_lea.vmem [#allocation2], 129
  %v2585 = vld [vmem:[%s2584] ss:$8 sm:$0xf]
  %2589 = vrot.lane.b32.xlu0 %v2579, 32
  %v2590 = vpop.permute.xlu0 %2589
  %2591 = vrot.lane.b32.xlu0 %v2583, 32
  %v2592 = vpop.permute.xlu0 %2591
  %2593 = vrot.lane.b32.xlu0 %v2585, 32
  %v2594 = vpop.permute.xlu0 %2593
  %vm2598 = vcmask 523520
  %2599 = vst.msk [vmem:[#allocation3] sm:$0xff] %vm2598, %v2590
  %2600 = vst.msk [vmem:[#allocation3 + $0x10] sm:$0xff] %vm2598, %v2592
  %vm2601 = vcmask 519424
  %2602 = vst.msk [vmem:[#allocation3 + $0x20] sm:$0xf] %vm2601, %v2594
  %s2603 = scalar_lea.vmem [#allocation2], 2
  %v2604 = vld [vmem:[%s2603] ss:$8 sm:$0xf]
  %v2605 = vld [vmem:[%s2603] ss:$8 sm:$0xf0]
  %v2606 = vor.u32 %v2604, %v2605
  %s2607 = scalar_lea.vmem [#allocation2], 66
  %v2608 = vld [vmem:[%s2607] ss:$8 sm:$0xf]
  %v2609 = vld [vmem:[%s2607] ss:$8 sm:$0xf0]
  %v2610 = vor.u32 %v2608, %v2609
  %s2611 = scalar_lea.vmem [#allocation2], 130
  %v2612 = vld [vmem:[%s2611] ss:$8 sm:$0xf]
  %2616 = vrot.lane.b32.xlu0 %v2606, 64
  %v2617 = vpop.permute.xlu0 %2616
  %2618 = vrot.lane.b32.xlu0 %v2610, 64
  %v2619 = vpop.permute.xlu0 %2618
  %2620 = vrot.lane.b32.xlu0 %v2612, 64
  %v2621 = vpop.permute.xlu0 %2620
  %vm2625 = vcmask 785920
  %2626 = vst.msk [vmem:[#allocation3] sm:$0xff] %vm2625, %v2617
  %2627 = vst.msk [vmem:[#allocation3 + $0x10] sm:$0xff] %vm2625, %v2619
  %vm2628 = vcmask 781824
  %2629 = vst.msk [vmem:[#allocation3 + $0x20] sm:$0xf] %vm2628, %v2621
  %s2630 = scalar_lea.vmem [#allocation2], 3
  %v2631 = vld [vmem:[%s2630] ss:$8 sm:$0xf]
  %v2632 = vld [vmem:[%s2630] ss:$8 sm:$0xf0]
  %v2633 = vor.u32 %v2631, %v2632
  %s2634 = scalar_lea.vmem [#allocation2], 67
  %v2635 = vld [vmem:[%s2634] ss:$8 sm:$0xf]
  %v2636 = vld [vmem:[%s2634] ss:$8 sm:$0xf0]
  %v2637 = vor.u32 %v2635, %v2636
  %s2638 = scalar_lea.vmem [#allocation2], 131
  %v2639 = vld [vmem:[%s2638] ss:$8 sm:$0xf]
  %2643 = vrot.lane.b32.xlu0 %v2633, 96
  %v2644 = vpop.permute.xlu0 %2643
  %2645 = vrot.lane.b32.xlu0 %v2637, 96
  %v2646 = vpop.permute.xlu0 %2645
  %2647 = vrot.lane.b32.xlu0 %v2639, 96
  %v2648 = vpop.permute.xlu0 %2647
  %vm2652 = vcmask 1048320
  %2653 = vst.msk [vmem:[#allocation3] sm:$0xff] %vm2652, %v2644
  %2654 = vst.msk [vmem:[#allocation3 + $0x10] sm:$0xff] %vm2652, %v2646
  %vm2655 = vcmask 1044224
  %2656 = vst.msk [vmem:[#allocation3 + $0x20] sm:$0xf] %vm2655, %v2648
  %s2657 = scalar_lea.vmem [#allocation2], 4
  %v2658 = vld [vmem:[%s2657] ss:$8 sm:$0xf]
  %v2659 = vld [vmem:[%s2657] ss:$8 sm:$0xf0]
  %v2660 = vor.u32 %v2658, %v2659
  %s2661 = scalar_lea.vmem [#allocation2], 68
  %v2662 = vld [vmem:[%s2661] ss:$8 sm:$0xf]
  %v2663 = vld [vmem:[%s2661] ss:$8 sm:$0xf0]
  %v2664 = vor.u32 %v2662, %v2663
  %s2665 = scalar_lea.vmem [#allocation2], 132
  %v2666 = vld [vmem:[%s2665] ss:$8 sm:$0xf]
  %2667 = vst.msk [vmem:[#allocation3 + $0x8] sm:$0xff] %vm22, %v2660
  %2668 = vst.msk [vmem:[#allocation3 + $0x18] sm:$0xff] %vm22, %v2664
  %2669 = vst.msk [vmem:[#allocation3 + $0x28] sm:$0xf] %vm2574, %v2666
  %s2670 = scalar_lea.vmem [#allocation2], 5
  %v2671 = vld [vmem:[%s2670] ss:$8 sm:$0xf]
  %v2672 = vld [vmem:[%s2670] ss:$8 sm:$0xf0]
  %v2673 = vor.u32 %v2671, %v2672
  %s2674 = scalar_lea.vmem [#allocation2], 69
  %v2675 = vld [vmem:[%s2674] ss:$8 sm:$0xf]
  %v2676 = vld [vmem:[%s2674] ss:$8 sm:$0xf0]
  %v2677 = vor.u32 %v2675, %v2676
  %s2678 = scalar_lea.vmem [#allocation2], 133
  %v2679 = vld [vmem:[%s2678] ss:$8 sm:$0xf]
  %2683 = vrot.lane.b32.xlu0 %v2673, 32
  %v2684 = vpop.permute.xlu0 %2683
  %2685 = vrot.lane.b32.xlu0 %v2677, 32
  %v2686 = vpop.permute.xlu0 %2685
  %2687 = vrot.lane.b32.xlu0 %v2679, 32
  %v2688 = vpop.permute.xlu0 %2687
  %2692 = vst.msk [vmem:[#allocation3 + $0x8] sm:$0xff] %vm2598, %v2684
  %2693 = vst.msk [vmem:[#allocation3 + $0x18] sm:$0xff] %vm2598, %v2686
  %2694 = vst.msk [vmem:[#allocation3 + $0x28] sm:$0xf] %vm2601, %v2688
  %s2695 = scalar_lea.vmem [#allocation2], 6
  %v2696 = vld [vmem:[%s2695] ss:$8 sm:$0xf]
  %v2697 = vld [vmem:[%s2695] ss:$8 sm:$0xf0]
  %v2698 = vor.u32 %v2696, %v2697
  %s2699 = scalar_lea.vmem [#allocation2], 70
  %v2700 = vld [vmem:[%s2699] ss:$8 sm:$0xf]
  %v2701 = vld [vmem:[%s2699] ss:$8 sm:$0xf0]
  %v2702 = vor.u32 %v2700, %v2701
  %s2703 = scalar_lea.vmem [#allocation2], 134
  %v2704 = vld [vmem:[%s2703] ss:$8 sm:$0xf]
  %2708 = vrot.lane.b32.xlu0 %v2698, 64
  %v2709 = vpop.permute.xlu0 %2708
  %2710 = vrot.lane.b32.xlu0 %v2702, 64
  %v2711 = vpop.permute.xlu0 %2710
  %2712 = vrot.lane.b32.xlu0 %v2704, 64
  %v2713 = vpop.permute.xlu0 %2712
  %2717 = vst.msk [vmem:[#allocation3 + $0x8] sm:$0xff] %vm2625, %v2709
  %2718 = vst.msk [vmem:[#allocation3 + $0x18] sm:$0xff] %vm2625, %v2711
  %2719 = vst.msk [vmem:[#allocation3 + $0x28] sm:$0xf] %vm2628, %v2713
  %s2720 = scalar_lea.vmem [#allocation2], 7
  %v2721 = vld [vmem:[%s2720] ss:$8 sm:$0xf]
  %v2722 = vld [vmem:[%s2720] ss:$8 sm:$0xf0]
  %v2723 = vor.u32 %v2721, %v2722
  %s2724 = scalar_lea.vmem [#allocation2], 71
  %v2725 = vld [vmem:[%s2724] ss:$8 sm:$0xf]
  %v2726 = vld [vmem:[%s2724] ss:$8 sm:$0xf0]
  %v2727 = vor.u32 %v2725, %v2726
  %s2728 = scalar_lea.vmem [#allocation2], 135
  %v2729 = vld [vmem:[%s2728] ss:$8 sm:$0xf]
  %2733 = vrot.lane.b32.xlu0 %v2723, 96
  %v2734 = vpop.permute.xlu0 %2733
  %2735 = vrot.lane.b32.xlu0 %v2727, 96
  %v2736 = vpop.permute.xlu0 %2735
  %2737 = vrot.lane.b32.xlu0 %v2729, 96
  %v2738 = vpop.permute.xlu0 %2737
  %2742 = vst.msk [vmem:[#allocation3 + $0x8] sm:$0xff] %vm2652, %v2734
  %2743 = vst.msk [vmem:[#allocation3 + $0x18] sm:$0xff] %vm2652, %v2736
  %2744 = vst.msk [vmem:[#allocation3 + $0x28] sm:$0xf] %vm2655, %v2738
  %v2745 = vld [vmem:[%s2] sm:$0xff]
  %v2746 = vld [vmem:[#allocation3] sm:$0xff]
  %v2747 = vld [vmem:[#allocation3 + $0x8] sm:$0xff]
  %v2748 = vld [vmem:[#allocation3 + $0x10] sm:$0xff]
  %v2749 = vld [vmem:[#allocation3 + $0x18] sm:$0xff]
  %v2750 = vld [vmem:[#allocation3 + $0x20] sm:$0xf]
  %v2751 = vld [vmem:[#allocation3 + $0x28] sm:$0xf]
  %vm2752 = vcmask 162816
  %v2754 = vsel %vm2752, %v2745, 0
  %vm2756 = vcmask 1043456
  %v2758 = vsel %vm2756, %v2750, 0
  %v2761 = vsel %vm2756, %v2751, 0
  %v2763 = vand.u32 %v2747, 4294901760
  %2764 = vmatprep.subr.mxu0 %v2763
  %v2765 = vand.u32 %v2746, 4294901760
  %2766 = vmatpush1.msra.mxu0 %v2765
  %v2767 = vand.u32 %v2749, 4294901760
  %2768 = vmatprep.subr.mxu0 %v2767
  %v2769 = vand.u32 %v2748, 4294901760
  %2770 = vmatpush1.msra.mxu0 %v2769
  %v2771 = vand.u32 %v2761, 4294901760
  %2772 = vmatprep.subr.mxu0 %v2771
  %v2773 = vand.u32 %v2758, 4294901760
  %2774 = vmatpush1.msra.mxu0 %v2773
  %2775 = vmatprep.subr.mxu0 0.0
  %2776 = vmatpush1.msra.mxu0 0.0
  %2777 = vmatprep.subr.mxu0 0.0
  %2778 = vmatpush1.msra.mxu0 0.0
  %2779 = vmatprep.subr.mxu0 0.0
  %2780 = vmatpush1.msra.mxu0 0.0
  %2781 = vmatprep.subr.mxu0 0.0
  %2782 = vmatpush1.msra.mxu0 0.0
  %2783 = vmatprep.subr.mxu0 0.0
  %2784 = vmatpush1.msra.mxu0 0.0
  %2785 = vmatprep.subr.mxu0 0.0
  %2786 = vmatpush1.msra.mxu0 0.0
  %2787 = vmatprep.subr.mxu0 0.0
  %2788 = vmatpush1.msra.mxu0 0.0
  %2789 = vmatprep.subr.mxu0 0.0
  %2790 = vmatpush1.msra.mxu0 0.0
  %2791 = vmatprep.subr.mxu0 0.0
  %2792 = vmatpush1.msra.mxu0 0.0
  %2793 = vmatprep.subr.mxu0 0.0
  %2794 = vmatpush1.msra.mxu0 0.0
  %2795 = vmatprep.subr.mxu0 0.0
  %2796 = vmatpush1.msra.mxu0 0.0
  %2797 = vmatprep.subr.mxu0 0.0
  %2798 = vmatpush1.msra.mxu0 0.0
  %2799 = vmatprep.subr.mxu0 0.0
  %2800 = vmatpush1.msra.mxu0 0.0
  %2801 = vmatprep.subr.mxu0 0.0
  %2802 = vmatpush1.msra.mxu0 0.0
  %2803 = vmatprep.subr.mxu0 0.0
  %2804 = vmatpush1.msra.mxu0 0.0
  %2805 = vmatprep.subr.mxu0 0.0
  %2806 = vmatpush1.msra.mxu0 0.0
  %2807 = vmatprep.subr.mxu0 0.0
  %2808 = vmatpush1.msra.mxu0 0.0
  %2809 = vmatprep.subr.mxu0 0.0
  %2810 = vmatpush1.msra.mxu0 0.0
  %2811 = vmatprep.subr.mxu0 0.0
  %2812 = vmatpush1.msra.mxu0 0.0
  %2813 = vmatprep.subr.mxu0 0.0
  %2814 = vmatpush1.msra.mxu0 0.0
  %2815 = vmatprep.subr.mxu0 0.0
  %2816 = vmatpush1.msra.mxu0 0.0
  %2817 = vmatprep.subr.mxu0 0.0
  %2818 = vmatpush1.msra.mxu0 0.0
  %2819 = vmatprep.subr.mxu0 0.0
  %2820 = vmatpush1.msra.mxu0 0.0
  %2821 = vmatprep.subr.mxu0 0.0
  %2822 = vmatpush1.msra.mxu0 0.0
  %2823 = vmatprep.subr.mxu0 0.0
  %2824 = vmatpush1.msra.mxu0 0.0
  %2825 = vmatprep.subr.mxu0 0.0
  %2826 = vmatpush1.msra.mxu0 0.0
  %2827 = vmatprep.subr.mxu0 0.0
  %2828 = vmatpush1.msra.mxu0 0.0
  %2829 = vmatprep.subr.mxu0 0.0
  %2830 = vmatpush1.msra.mxu0 0.0
  %2831 = vmatprep.subr.mxu0 0.0
  %2832 = vmatpush1.msra.mxu0 0.0
  %2833 = vmatprep.mubr.f32.mxu0 0.0
  %v2834 = vand.u32 %v2754, 4294901760
  %v2835 = vsub.f32 %v2754, %v2834
  %v2836 = vand.u32 %v2835, 4294901760
  %v2837 = vsub.f32 %v2835, %v2836
  %v2838 = vand.u32 %v2837, 4294901760
  %2839 = vmatmul.mubr.f32.gmra.mrb[0].mxu0 %v2838
  %v2840 = vpop.f32.mrb[0].mxu0
  %v2841 = vadd.f32 0.0, %v2840
  %v2842 = vpop.f32.mrb[0].mxu0
  %v2843 = vadd.f32 0.0, %v2842
  %2844 = vdwg.mxu0
  %v2845 = vand.u32 %v2747, 4294901760
  %v2846 = vsub.f32 %v2747, %v2845
  %v2847 = vand.u32 %v2846, 4294901760
  %v2848 = vsub.f32 %v2846, %v2847
  %v2849 = vand.u32 %v2848, 4294901760
  %2850 = vmatprep.subr.mxu0 %v2849
  %v2851 = vand.u32 %v2746, 4294901760
  %v2852 = vsub.f32 %v2746, %v2851
  %v2853 = vand.u32 %v2852, 4294901760
  %v2854 = vsub.f32 %v2852, %v2853
  %v2855 = vand.u32 %v2854, 4294901760
  %2856 = vmatpush1.msra.mxu0 %v2855
  %v2857 = vand.u32 %v2749, 4294901760
  %v2858 = vsub.f32 %v2749, %v2857
  %v2859 = vand.u32 %v2858, 4294901760
  %v2860 = vsub.f32 %v2858, %v2859
  %v2861 = vand.u32 %v2860, 4294901760
  %2862 = vmatprep.subr.mxu0 %v2861
  %v2863 = vand.u32 %v2748, 4294901760
  %v2864 = vsub.f32 %v2748, %v2863
  %v2865 = vand.u32 %v2864, 4294901760
  %v2866 = vsub.f32 %v2864, %v2865
  %v2867 = vand.u32 %v2866, 4294901760
  %2868 = vmatpush1.msra.mxu0 %v2867
  %v2869 = vand.u32 %v2761, 4294901760
  %v2870 = vsub.f32 %v2761, %v2869
  %v2871 = vand.u32 %v2870, 4294901760
  %v2872 = vsub.f32 %v2870, %v2871
  %v2873 = vand.u32 %v2872, 4294901760
  %2874 = vmatprep.subr.mxu0 %v2873
  %v2875 = vand.u32 %v2758, 4294901760
  %v2876 = vsub.f32 %v2758, %v2875
  %v2877 = vand.u32 %v2876, 4294901760
  %v2878 = vsub.f32 %v2876, %v2877
  %v2879 = vand.u32 %v2878, 4294901760
  %2880 = vmatpush1.msra.mxu0 %v2879
  %2881 = vmatprep.subr.mxu0 0.0
  %2882 = vmatpush1.msra.mxu0 0.0
  %2883 = vmatprep.subr.mxu0 0.0
  %2884 = vmatpush1.msra.mxu0 0.0
  %2885 = vmatprep.subr.mxu0 0.0
  %2886 = vmatpush1.msra.mxu0 0.0
  %2887 = vmatprep.subr.mxu0 0.0
  %2888 = vmatpush1.msra.mxu0 0.0
  %2889 = vmatprep.subr.mxu0 0.0
  %2890 = vmatpush1.msra.mxu0 0.0
  %2891 = vmatprep.subr.mxu0 0.0
  %2892 = vmatpush1.msra.mxu0 0.0
  %2893 = vmatprep.subr.mxu0 0.0
  %2894 = vmatpush1.msra.mxu0 0.0
  %2895 = vmatprep.subr.mxu0 0.0
  %2896 = vmatpush1.msra.mxu0 0.0
  %2897 = vmatprep.subr.mxu0 0.0
  %2898 = vmatpush1.msra.mxu0 0.0
  %2899 = vmatprep.subr.mxu0 0.0
  %2900 = vmatpush1.msra.mxu0 0.0
  %2901 = vmatprep.subr.mxu0 0.0
  %2902 = vmatpush1.msra.mxu0 0.0
  %2903 = vmatprep.subr.mxu0 0.0
  %2904 = vmatpush1.msra.mxu0 0.0
  %2905 = vmatprep.subr.mxu0 0.0
  %2906 = vmatpush1.msra.mxu0 0.0
  %2907 = vmatprep.subr.mxu0 0.0
  %2908 = vmatpush1.msra.mxu0 0.0
  %2909 = vmatprep.subr.mxu0 0.0
  %2910 = vmatpush1.msra.mxu0 0.0
  %2911 = vmatprep.subr.mxu0 0.0
  %2912 = vmatpush1.msra.mxu0 0.0
  %2913 = vmatprep.subr.mxu0 0.0
  %2914 = vmatpush1.msra.mxu0 0.0
  %2915 = vmatprep.subr.mxu0 0.0
  %2916 = vmatpush1.msra.mxu0 0.0
  %2917 = vmatprep.subr.mxu0 0.0
  %2918 = vmatpush1.msra.mxu0 0.0
  %2919 = vmatprep.subr.mxu0 0.0
  %2920 = vmatpush1.msra.mxu0 0.0
  %2921 = vmatprep.subr.mxu0 0.0
  %2922 = vmatpush1.msra.mxu0 0.0
  %2923 = vmatprep.subr.mxu0 0.0
  %2924 = vmatpush1.msra.mxu0 0.0
  %2925 = vmatprep.subr.mxu0 0.0
  %2926 = vmatpush1.msra.mxu0 0.0
  %2927 = vmatprep.subr.mxu0 0.0
  %2928 = vmatpush1.msra.mxu0 0.0
  %2929 = vmatprep.subr.mxu0 0.0
  %2930 = vmatpush1.msra.mxu0 0.0
  %2931 = vmatprep.subr.mxu0 0.0
  %2932 = vmatpush1.msra.mxu0 0.0
  %2933 = vmatprep.subr.mxu0 0.0
  %2934 = vmatpush1.msra.mxu0 0.0
  %2935 = vmatprep.subr.mxu0 0.0
  %2936 = vmatpush1.msra.mxu0 0.0
  %2937 = vmatprep.subr.mxu0 0.0
  %2938 = vmatpush1.msra.mxu0 0.0
  %2939 = vmatprep.mubr.f32.mxu0 0.0
  %v2940 = vand.u32 %v2754, 4294901760
  %2941 = vmatmul.mubr.f32.gmra.mrb[0].mxu0 %v2940
  %v2942 = vpop.f32.mrb[0].mxu0
  %v2943 = vadd.f32 %v2841, %v2942
  %v2944 = vpop.f32.mrb[0].mxu0
  %v2945 = vadd.f32 %v2843, %v2944
  %2946 = vdwg.mxu0
  %v2947 = vand.u32 %v2747, 4294901760
  %v2948 = vsub.f32 %v2747, %v2947
  %2949 = vmatprep.subr.mxu0 %v2948
  %v2950 = vand.u32 %v2746, 4294901760
  %v2951 = vsub.f32 %v2746, %v2950
  %2952 = vmatpush1.msra.mxu0 %v2951
  %v2953 = vand.u32 %v2749, 4294901760
  %v2954 = vsub.f32 %v2749, %v2953
  %2955 = vmatprep.subr.mxu0 %v2954
  %v2956 = vand.u32 %v2748, 4294901760
  %v2957 = vsub.f32 %v2748, %v2956
  %2958 = vmatpush1.msra.mxu0 %v2957
  %v2959 = vand.u32 %v2761, 4294901760
  %v2960 = vsub.f32 %v2761, %v2959
  %2961 = vmatprep.subr.mxu0 %v2960
  %v2962 = vand.u32 %v2758, 4294901760
  %v2963 = vsub.f32 %v2758, %v2962
  %2964 = vmatpush1.msra.mxu0 %v2963
  %2965 = vmatprep.subr.mxu0 0.0
  %2966 = vmatpush1.msra.mxu0 0.0
  %2967 = vmatprep.subr.mxu0 0.0
  %2968 = vmatpush1.msra.mxu0 0.0
  %2969 = vmatprep.subr.mxu0 0.0
  %2970 = vmatpush1.msra.mxu0 0.0
  %2971 = vmatprep.subr.mxu0 0.0
  %2972 = vmatpush1.msra.mxu0 0.0
  %2973 = vmatprep.subr.mxu0 0.0
  %2974 = vmatpush1.msra.mxu0 0.0
  %2975 = vmatprep.subr.mxu0 0.0
  %2976 = vmatpush1.msra.mxu0 0.0
  %2977 = vmatprep.subr.mxu0 0.0
  %2978 = vmatpush1.msra.mxu0 0.0
  %2979 = vmatprep.subr.mxu0 0.0
  %2980 = vmatpush1.msra.mxu0 0.0
  %2981 = vmatprep.subr.mxu0 0.0
  %2982 = vmatpush1.msra.mxu0 0.0
  %2983 = vmatprep.subr.mxu0 0.0
  %2984 = vmatpush1.msra.mxu0 0.0
  %2985 = vmatprep.subr.mxu0 0.0
  %2986 = vmatpush1.msra.mxu0 0.0
  %2987 = vmatprep.subr.mxu0 0.0
  %2988 = vmatpush1.msra.mxu0 0.0
  %2989 = vmatprep.subr.mxu0 0.0
  %2990 = vmatpush1.msra.mxu0 0.0
  %2991 = vmatprep.subr.mxu0 0.0
  %2992 = vmatpush1.msra.mxu0 0.0
  %2993 = vmatprep.subr.mxu0 0.0
  %2994 = vmatpush1.msra.mxu0 0.0
  %2995 = vmatprep.subr.mxu0 0.0
  %2996 = vmatpush1.msra.mxu0 0.0
  %2997 = vmatprep.subr.mxu0 0.0
  %2998 = vmatpush1.msra.mxu0 0.0
  %2999 = vmatprep.subr.mxu0 0.0
  %3000 = vmatpush1.msra.mxu0 0.0
  %3001 = vmatprep.subr.mxu0 0.0
  %3002 = vmatpush1.msra.mxu0 0.0
  %3003 = vmatprep.subr.mxu0 0.0
  %3004 = vmatpush1.msra.mxu0 0.0
  %3005 = vmatprep.subr.mxu0 0.0
  %3006 = vmatpush1.msra.mxu0 0.0
  %3007 = vmatprep.subr.mxu0 0.0
  %3008 = vmatpush1.msra.mxu0 0.0
  %3009 = vmatprep.subr.mxu0 0.0
  %3010 = vmatpush1.msra.mxu0 0.0
  %3011 = vmatprep.subr.mxu0 0.0
  %3012 = vmatpush1.msra.mxu0 0.0
  %3013 = vmatprep.subr.mxu0 0.0
  %3014 = vmatpush1.msra.mxu0 0.0
  %3015 = vmatprep.subr.mxu0 0.0
  %3016 = vmatpush1.msra.mxu0 0.0
  %3017 = vmatprep.subr.mxu0 0.0
  %3018 = vmatpush1.msra.mxu0 0.0
  %3019 = vmatprep.subr.mxu0 0.0
  %3020 = vmatpush1.msra.mxu0 0.0
  %3021 = vmatprep.subr.mxu0 0.0
  %3022 = vmatpush1.msra.mxu0 0.0
  %3023 = vmatprep.mubr.f32.mxu0 0.0
  %v3024 = vand.u32 %v2754, 4294901760
  %v3025 = vsub.f32 %v2754, %v3024
  %3026 = vmatmul.mubr.f32.gmra.mrb[0].mxu0 %v3025
  %v3027 = vpop.f32.mrb[0].mxu0
  %v3028 = vadd.f32 %v2943, %v3027
  %v3029 = vpop.f32.mrb[0].mxu0
  %v3030 = vadd.f32 %v2945, %v3029
  %3031 = vdwg.mxu0
  %v3032 = vand.u32 %v2747, 4294901760
  %3033 = vmatprep.subr.mxu0 %v3032
  %v3034 = vand.u32 %v2746, 4294901760
  %3035 = vmatpush1.msra.mxu0 %v3034
  %v3036 = vand.u32 %v2749, 4294901760
  %3037 = vmatprep.subr.mxu0 %v3036
  %v3038 = vand.u32 %v2748, 4294901760
  %3039 = vmatpush1.msra.mxu0 %v3038
  %v3040 = vand.u32 %v2761, 4294901760
  %3041 = vmatprep.subr.mxu0 %v3040
  %v3042 = vand.u32 %v2758, 4294901760
  %3043 = vmatpush1.msra.mxu0 %v3042
  %3044 = vmatprep.subr.mxu0 0.0
  %3045 = vmatpush1.msra.mxu0 0.0
  %3046 = vmatprep.subr.mxu0 0.0
  %3047 = vmatpush1.msra.mxu0 0.0
  %3048 = vmatprep.subr.mxu0 0.0
  %3049 = vmatpush1.msra.mxu0 0.0
  %3050 = vmatprep.subr.mxu0 0.0
  %3051 = vmatpush1.msra.mxu0 0.0
  %3052 = vmatprep.subr.mxu0 0.0
  %3053 = vmatpush1.msra.mxu0 0.0
  %3054 = vmatprep.subr.mxu0 0.0
  %3055 = vmatpush1.msra.mxu0 0.0
  %3056 = vmatprep.subr.mxu0 0.0
  %3057 = vmatpush1.msra.mxu0 0.0
  %3058 = vmatprep.subr.mxu0 0.0
  %3059 = vmatpush1.msra.mxu0 0.0
  %3060 = vmatprep.subr.mxu0 0.0
  %3061 = vmatpush1.msra.mxu0 0.0
  %3062 = vmatprep.subr.mxu0 0.0
  %3063 = vmatpush1.msra.mxu0 0.0
  %3064 = vmatprep.subr.mxu0 0.0
  %3065 = vmatpush1.msra.mxu0 0.0
  %3066 = vmatprep.subr.mxu0 0.0
  %3067 = vmatpush1.msra.mxu0 0.0
  %3068 = vmatprep.subr.mxu0 0.0
  %3069 = vmatpush1.msra.mxu0 0.0
  %3070 = vmatprep.subr.mxu0 0.0
  %3071 = vmatpush1.msra.mxu0 0.0
  %3072 = vmatprep.subr.mxu0 0.0
  %3073 = vmatpush1.msra.mxu0 0.0
  %3074 = vmatprep.subr.mxu0 0.0
  %3075 = vmatpush1.msra.mxu0 0.0
  %3076 = vmatprep.subr.mxu0 0.0
  %3077 = vmatpush1.msra.mxu0 0.0
  %3078 = vmatprep.subr.mxu0 0.0
  %3079 = vmatpush1.msra.mxu0 0.0
  %3080 = vmatprep.subr.mxu0 0.0
  %3081 = vmatpush1.msra.mxu0 0.0
  %3082 = vmatprep.subr.mxu0 0.0
  %3083 = vmatpush1.msra.mxu0 0.0
  %3084 = vmatprep.subr.mxu0 0.0
  %3085 = vmatpush1.msra.mxu0 0.0
  %3086 = vmatprep.subr.mxu0 0.0
  %3087 = vmatpush1.msra.mxu0 0.0
  %3088 = vmatprep.subr.mxu0 0.0
  %3089 = vmatpush1.msra.mxu0 0.0
  %3090 = vmatprep.subr.mxu0 0.0
  %3091 = vmatpush1.msra.mxu0 0.0
  %3092 = vmatprep.subr.mxu0 0.0
  %3093 = vmatpush1.msra.mxu0 0.0
  %3094 = vmatprep.subr.mxu0 0.0
  %3095 = vmatpush1.msra.mxu0 0.0
  %3096 = vmatprep.subr.mxu0 0.0
  %3097 = vmatpush1.msra.mxu0 0.0
  %3098 = vmatprep.subr.mxu0 0.0
  %3099 = vmatpush1.msra.mxu0 0.0
  %3100 = vmatprep.subr.mxu0 0.0
  %3101 = vmatpush1.msra.mxu0 0.0
  %3102 = vmatprep.mubr.f32.mxu0 0.0
  %v3103 = vand.u32 %v2754, 4294901760
  %v3104 = vsub.f32 %v2754, %v3103
  %v3105 = vand.u32 %v3104, 4294901760
  %3106 = vmatmul.mubr.f32.gmra.mrb[0].mxu0 %v3105
  %v3107 = vpop.f32.mrb[0].mxu0
  %v3108 = vadd.f32 %v3028, %v3107
  %v3109 = vpop.f32.mrb[0].mxu0
  %v3110 = vadd.f32 %v3030, %v3109
  %3111 = vdwg.mxu0
  %v3112 = vand.u32 %v2747, 4294901760
  %v3113 = vsub.f32 %v2747, %v3112
  %v3114 = vand.u32 %v3113, 4294901760
  %3115 = vmatprep.subr.mxu0 %v3114
  %v3116 = vand.u32 %v2746, 4294901760
  %v3117 = vsub.f32 %v2746, %v3116
  %v3118 = vand.u32 %v3117, 4294901760
  %3119 = vmatpush1.msra.mxu0 %v3118
  %v3120 = vand.u32 %v2749, 4294901760
  %v3121 = vsub.f32 %v2749, %v3120
  %v3122 = vand.u32 %v3121, 4294901760
  %3123 = vmatprep.subr.mxu0 %v3122
  %v3124 = vand.u32 %v2748, 4294901760
  %v3125 = vsub.f32 %v2748, %v3124
  %v3126 = vand.u32 %v3125, 4294901760
  %3127 = vmatpush1.msra.mxu0 %v3126
  %v3128 = vand.u32 %v2761, 4294901760
  %v3129 = vsub.f32 %v2761, %v3128
  %v3130 = vand.u32 %v3129, 4294901760
  %3131 = vmatprep.subr.mxu0 %v3130
  %v3132 = vand.u32 %v2758, 4294901760
  %v3133 = vsub.f32 %v2758, %v3132
  %v3134 = vand.u32 %v3133, 4294901760
  %3135 = vmatpush1.msra.mxu0 %v3134
  %3136 = vmatprep.subr.mxu0 0.0
  %3137 = vmatpush1.msra.mxu0 0.0
  %3138 = vmatprep.subr.mxu0 0.0
  %3139 = vmatpush1.msra.mxu0 0.0
  %3140 = vmatprep.subr.mxu0 0.0
  %3141 = vmatpush1.msra.mxu0 0.0
  %3142 = vmatprep.subr.mxu0 0.0
  %3143 = vmatpush1.msra.mxu0 0.0
  %3144 = vmatprep.subr.mxu0 0.0
  %3145 = vmatpush1.msra.mxu0 0.0
  %3146 = vmatprep.subr.mxu0 0.0
  %3147 = vmatpush1.msra.mxu0 0.0
  %3148 = vmatprep.subr.mxu0 0.0
  %3149 = vmatpush1.msra.mxu0 0.0
  %3150 = vmatprep.subr.mxu0 0.0
  %3151 = vmatpush1.msra.mxu0 0.0
  %3152 = vmatprep.subr.mxu0 0.0
  %3153 = vmatpush1.msra.mxu0 0.0
  %3154 = vmatprep.subr.mxu0 0.0
  %3155 = vmatpush1.msra.mxu0 0.0
  %3156 = vmatprep.subr.mxu0 0.0
  %3157 = vmatpush1.msra.mxu0 0.0
  %3158 = vmatprep.subr.mxu0 0.0
  %3159 = vmatpush1.msra.mxu0 0.0
  %3160 = vmatprep.subr.mxu0 0.0
  %3161 = vmatpush1.msra.mxu0 0.0
  %3162 = vmatprep.subr.mxu0 0.0
  %3163 = vmatpush1.msra.mxu0 0.0
  %3164 = vmatprep.subr.mxu0 0.0
  %3165 = vmatpush1.msra.mxu0 0.0
  %3166 = vmatprep.subr.mxu0 0.0
  %3167 = vmatpush1.msra.mxu0 0.0
  %3168 = vmatprep.subr.mxu0 0.0
  %3169 = vmatpush1.msra.mxu0 0.0
  %3170 = vmatprep.subr.mxu0 0.0
  %3171 = vmatpush1.msra.mxu0 0.0
  %3172 = vmatprep.subr.mxu0 0.0
  %3173 = vmatpush1.msra.mxu0 0.0
  %3174 = vmatprep.subr.mxu0 0.0
  %3175 = vmatpush1.msra.mxu0 0.0
  %3176 = vmatprep.subr.mxu0 0.0
  %3177 = vmatpush1.msra.mxu0 0.0
  %3178 = vmatprep.subr.mxu0 0.0
  %3179 = vmatpush1.msra.mxu0 0.0
  %3180 = vmatprep.subr.mxu0 0.0
  %3181 = vmatpush1.msra.mxu0 0.0
  %3182 = vmatprep.subr.mxu0 0.0
  %3183 = vmatpush1.msra.mxu0 0.0
  %3184 = vmatprep.subr.mxu0 0.0
  %3185 = vmatpush1.msra.mxu0 0.0
  %3186 = vmatprep.subr.mxu0 0.0
  %3187 = vmatpush1.msra.mxu0 0.0
  %3188 = vmatprep.subr.mxu0 0.0
  %3189 = vmatpush1.msra.mxu0 0.0
  %3190 = vmatprep.subr.mxu0 0.0
  %3191 = vmatpush1.msra.mxu0 0.0
  %3192 = vmatprep.subr.mxu0 0.0
  %3193 = vmatpush1.msra.mxu0 0.0
  %3194 = vmatprep.mubr.f32.mxu0 0.0
  %v3195 = vand.u32 %v2754, 4294901760
  %3196 = vmatmul.mubr.f32.gmra.mrb[0].mxu0 %v3195
  %v3197 = vpop.f32.mrb[0].mxu0
  %v3198 = vadd.f32 %v3108, %v3197
  %v3199 = vpop.f32.mrb[0].mxu0
  %v3200 = vadd.f32 %v3110, %v3199
  %3201 = vdwg.mxu0
  %v3202 = vand.u32 %v2747, 4294901760
  %3203 = vmatprep.subr.mxu0 %v3202
  %v3204 = vand.u32 %v2746, 4294901760
  %3205 = vmatpush1.msra.mxu0 %v3204
  %v3206 = vand.u32 %v2749, 4294901760
  %3207 = vmatprep.subr.mxu0 %v3206
  %v3208 = vand.u32 %v2748, 4294901760
  %3209 = vmatpush1.msra.mxu0 %v3208
  %v3210 = vand.u32 %v2761, 4294901760
  %3211 = vmatprep.subr.mxu0 %v3210
  %v3212 = vand.u32 %v2758, 4294901760
  %3213 = vmatpush1.msra.mxu0 %v3212
  %3214 = vmatprep.subr.mxu0 0.0
  %3215 = vmatpush1.msra.mxu0 0.0
  %3216 = vmatprep.subr.mxu0 0.0
  %3217 = vmatpush1.msra.mxu0 0.0
  %3218 = vmatprep.subr.mxu0 0.0
  %3219 = vmatpush1.msra.mxu0 0.0
  %3220 = vmatprep.subr.mxu0 0.0
  %3221 = vmatpush1.msra.mxu0 0.0
  %3222 = vmatprep.subr.mxu0 0.0
  %3223 = vmatpush1.msra.mxu0 0.0
  %3224 = vmatprep.subr.mxu0 0.0
  %3225 = vmatpush1.msra.mxu0 0.0
  %3226 = vmatprep.subr.mxu0 0.0
  %3227 = vmatpush1.msra.mxu0 0.0
  %3228 = vmatprep.subr.mxu0 0.0
  %3229 = vmatpush1.msra.mxu0 0.0
  %3230 = vmatprep.subr.mxu0 0.0
  %3231 = vmatpush1.msra.mxu0 0.0
  %3232 = vmatprep.subr.mxu0 0.0
  %3233 = vmatpush1.msra.mxu0 0.0
  %3234 = vmatprep.subr.mxu0 0.0
  %3235 = vmatpush1.msra.mxu0 0.0
  %3236 = vmatprep.subr.mxu0 0.0
  %3237 = vmatpush1.msra.mxu0 0.0
  %3238 = vmatprep.subr.mxu0 0.0
  %3239 = vmatpush1.msra.mxu0 0.0
  %3240 = vmatprep.subr.mxu0 0.0
  %3241 = vmatpush1.msra.mxu0 0.0
  %3242 = vmatprep.subr.mxu0 0.0
  %3243 = vmatpush1.msra.mxu0 0.0
  %3244 = vmatprep.subr.mxu0 0.0
  %3245 = vmatpush1.msra.mxu0 0.0
  %3246 = vmatprep.subr.mxu0 0.0
  %3247 = vmatpush1.msra.mxu0 0.0
  %3248 = vmatprep.subr.mxu0 0.0
  %3249 = vmatpush1.msra.mxu0 0.0
  %3250 = vmatprep.subr.mxu0 0.0
  %3251 = vmatpush1.msra.mxu0 0.0
  %3252 = vmatprep.subr.mxu0 0.0
  %3253 = vmatpush1.msra.mxu0 0.0
  %3254 = vmatprep.subr.mxu0 0.0
  %3255 = vmatpush1.msra.mxu0 0.0
  %3256 = vmatprep.subr.mxu0 0.0
  %3257 = vmatpush1.msra.mxu0 0.0
  %3258 = vmatprep.subr.mxu0 0.0
  %3259 = vmatpush1.msra.mxu0 0.0
  %3260 = vmatprep.subr.mxu0 0.0
  %3261 = vmatpush1.msra.mxu0 0.0
  %3262 = vmatprep.subr.mxu0 0.0
  %3263 = vmatpush1.msra.mxu0 0.0
  %3264 = vmatprep.subr.mxu0 0.0
  %3265 = vmatpush1.msra.mxu0 0.0
  %3266 = vmatprep.subr.mxu0 0.0
  %3267 = vmatpush1.msra.mxu0 0.0
  %3268 = vmatprep.subr.mxu0 0.0
  %3269 = vmatpush1.msra.mxu0 0.0
  %3270 = vmatprep.subr.mxu0 0.0
  %3271 = vmatpush1.msra.mxu0 0.0
  %3272 = vmatprep.mubr.f32.mxu0 0.0
  %v3273 = vand.u32 %v2754, 4294901760
  %3274 = vmatmul.mubr.f32.gmra.mrb[0].mxu0 %v3273
  %v3275 = vpop.f32.mrb[0].mxu0
  %v3276 = vadd.f32 %v3198, %v3275
  %v3277 = vpop.f32.mrb[0].mxu0
  %v3278 = vadd.f32 %v3200, %v3277
  %3279 = vdwg.mxu0
  %3280 = vst [vmem:[%s3] sm:$0xff] %v3276
  %3281 = vst [vmem:[%s3 + $0x8] sm:$0xff] %v3278
  // Predicated region
  $region14: #{spectral_conv_forward.1} parent=0 // pred_check
    _
  $region15: #{spectral_conv_forward.1} parent=0 // pred_check_branch
    %3283 = sbr.rel (0) target = $region17
  $region16: #{spectral_conv_forward.1} parent=0 // pred_region
    _
  $region17: #{spectral_conv_forward.1} parent=0 // pred_fallthru
    _
  // Predicated region
  $region18: #{spectral_conv_forward.1} parent=0 // pred_check
    _
  $region19: #{spectral_conv_forward.1} parent=0 // pred_check_branch
    %3285 = sbr.rel (0) target = $region21
  $region20: #{spectral_conv_forward.1} parent=0 // pred_region
    _
  $region21: #{spectral_conv_forward.1} parent=0 // pred_fallthru
    _

</llo_original>
